<compile_context>
chip_gen: v5e
topology: v5e:2x2
jax: 0.10.0
libtpu: 0.0.40
codegen_flags: <defaults>
</compile_context>

<pallas_src>
import math
from functools import partial

import numpy as np
import jax
import jax.numpy as jnp
from jax import lax
from jax.experimental import pallas as pl
from jax.experimental.pallas import tpu as pltpu

_VMEM_LIMIT = 32 * 1024 * 1024      # well under v7x's 64 MiB physical VMEM
_EPS = 1e-12                        # F.normalize eps
_VMEM = pl.BlockSpec(memory_space=pltpu.MemorySpace.VMEM)


def _rmsnorm(x, g):
    """x-transformers RMSNorm: F.normalize(x, dim=-1) * sqrt(dim) * g (f32 math)."""
    norm = jnp.maximum(jnp.sqrt(jnp.sum(x * x, axis=-1, keepdims=True)), _EPS)
    return (x / norm) * math.sqrt(x.shape[-1]) * g


# ------------------------------------------------------------------ kernels

def _transformer_kernel(
    # constant-across-layers inputs
    x_ref, pos_ref, pw_ref, pb_ref, bias_ref,
    # per-layer (leading depth axis streamed by the grid, squeezed here)
    attn_g_ref, wqkv_ref, wo_ref,
    ff_g_ref, w1_ref, b1_ref, w2_ref, b2_ref,
    # final norm gain
    fin_g_ref,
    # output: final-normed hidden states (B*S, D)
    o_ref,
    # scratch: hidden state carried across the depth grid axis
    h_sc,
    *, B, S, H, Dh,
):
    D = pw_ref.shape[1]
    HDh = H * Dh
    inner = w2_ref.shape[0]
    l = pl.program_id(0)

    # ---- step 0: project_in as Cin broadcast-FMAs (VPU) + scaled abs-pos-emb
    @pl.when(l == 0)
    def _():
        Cin = pw_ref.shape[0]
        base = pb_ref[...] + pos_ref[...] * (float(D) ** -0.5)        # (S, D)
        for b in range(B):                                            # static unroll
            xb = x_ref[b]                                             # (S, Cin)
            hb = base
            for c in range(Cin):
                hb = hb + xb[:, c:c + 1] * pw_ref[c:c + 1, :]
            h_sc[b * S:(b + 1) * S, :] = hb

    # ---- attention sub-block: RMSNorm -> fused QKV -> per-head attn -> out-proj -> residual
    h = h_sc[...]                                                     # (B*S, D) f32
    hn = _rmsnorm(h, attn_g_ref[...])
    qkv = jnp.dot(hn.astype(jnp.bfloat16), wqkv_ref[...],
                  preferred_element_type=jnp.float32)                 # (B*S, 3*H*Dh)
    qkvb = qkv.astype(jnp.bfloat16)                                   # single bf16 cast
    att_scale = float(Dh) ** -0.5

    for b in range(B):                                                # static unroll
        r0 = b * S
        acc = jnp.zeros((S, D), jnp.float32)                          # out-proj accumulator
        for hd in range(H):                                           # static unroll
            q = qkvb[r0:r0 + S, hd * Dh:(hd + 1) * Dh]
            k = qkvb[r0:r0 + S, HDh + hd * Dh:HDh + (hd + 1) * Dh]
            v = qkvb[r0:r0 + S, 2 * HDh + hd * Dh:2 * HDh + (hd + 1) * Dh]
            s = lax.dot_general(q, k, (((1,), (1,)), ((), ())),
                                preferred_element_type=jnp.float32) * att_scale
            s = s + bias_ref[hd]                                      # shared rel-pos bias
            m = jnp.max(s, axis=-1, keepdims=True)
            p = jnp.exp(s - m)
            p = p / jnp.sum(p, axis=-1, keepdims=True)                # exact softmax
            oh = jnp.dot(p.astype(jnp.bfloat16), v,
                         preferred_element_type=jnp.float32)          # (S, Dh)
            # accumulate per-head out-projection (no lane-concatenate of heads)
            acc = acc + jnp.dot(oh.astype(jnp.bfloat16),
                                wo_ref[hd * Dh:(hd + 1) * Dh, :],
                                preferred_element_type=jnp.float32)
        h_sc[r0:r0 + S, :] = h[r0:r0 + S, :] + acc                    # residual

    # ---- feed-forward sub-block: RMSNorm -> FF1 -> GLU(GELU) -> FF2 -> residual
    h = h_sc[...]
    hn = _rmsnorm(h, ff_g_ref[...])
    xg = jnp.dot(hn.astype(jnp.bfloat16), w1_ref[...],
                 preferred_element_type=jnp.float32) + b1_ref[...]    # (B*S, 2*inner)
    x_half = xg[:, :inner]
    gate = xg[:, inner:]
    # TODO(synk): torch nn.GELU default is the exact erf form; tanh approximation used here.
    act = x_half * jax.nn.gelu(gate, approximate=True)
    out = jnp.dot(act.astype(jnp.bfloat16), w2_ref[...],
                  preferred_element_type=jnp.float32) + b2_ref[...]
    h_sc[...] = h + out                                               # residual

    # ---- last step: final Encoder RMSNorm; head (flatten + Linear) is a separate tiny kernel
    @pl.when(l == pl.num_programs(0) - 1)
    def _():
        o_ref[...] = _rmsnorm(h_sc[...], fin_g_ref[...])


def _head_kernel(hn_ref, w_ref, b_ref, o_ref):
    # single (B, S*D) x (S*D, dim_out) contraction (replaces 16 tiny per-position dots)
    o_ref[...] = jnp.dot(hn_ref[...], w_ref[...],
                         preferred_element_type=jnp.float32) + b_ref[...]


# ------------------------------------------------------------------ host glue

def _rel_pos_bucket(n, num_buckets, max_distance):
    """T5 bidirectional relative-position bucketing (x-transformers RelativePositionBias)."""
    qpos = np.arange(n)[:, None]
    kpos = np.arange(n)[None, :]
    rel = kpos - qpos
    neg = -rel
    nb = num_buckets // 2
    ret = (neg < 0).astype(np.int64) * nb
    neg = np.abs(neg)
    max_exact = nb // 2
    is_small = neg < max_exact
    val_large = max_exact + (
        np.log(np.maximum(neg, 1).astype(np.float64) / max_exact)
        / math.log(max_distance / max_exact)
        * (nb - max_exact)
    ).astype(np.int64)
    val_large = np.minimum(val_large, nb - 1)
    ret = ret + np.where(is_small, neg, val_large)
    return jnp.asarray(ret, jnp.int32)


# ------------------------------------------------------------------ model

def init_params(key, cfg):
    D, H, Dh = cfg["dim"], cfg["heads"], cfg["dim_head"]
    Cin, S, depth = cfg["channel_in"], cfg["max_seq_len"], cfg["depth"]
    inner = D * cfg["ff_mult"]
    dim_out = cfg["dim_out"]
    ks = iter(jax.random.split(key, 16))

    def w(shape, s=0.02, dtype=jnp.float32):
        return (jax.random.normal(next(ks), shape, jnp.float32) * s).astype(dtype)

    return {
        "proj_in_w": w((Cin, D)),                                  # tiny, f32, done as FMAs
        "proj_in_b": jnp.zeros((1, D), jnp.float32),
        "pos_emb": w((S, D), 1.0),                                 # learned abs pos emb
        "rel_bias": w((cfg["num_buckets"], H)),
        "final_norm_g": jnp.ones((1, D), jnp.float32),
        "out_w": w((S * D, dim_out)),                              # flattened head weight
        "out_b": jnp.zeros((1, dim_out), jnp.float32),
        # per-layer parameters stacked on a leading depth axis (streamed by the grid)
        "attn_g": jnp.ones((depth, 1, D), jnp.float32),
        "wqkv": w((depth, D, 3 * H * Dh), dtype=jnp.bfloat16),     # fused q|k|v, no bias
        "wo": w((depth, H * Dh, D), dtype=jnp.bfloat16),
        "ff_g": jnp.ones((depth, 1, D), jnp.float32),
        "ff_w1": w((depth, D, 2 * inner), dtype=jnp.bfloat16),     # GLU projection
        "ff_b1": jnp.zeros((depth, 1, 2 * inner), jnp.float32),
        "ff_w2": w((depth, inner, D), dtype=jnp.bfloat16),
        "ff_b2": jnp.zeros((depth, 1, D), jnp.float32),
    }


def forward(params, x, cfg):
    x = jnp.squeeze(x, axis=1)                                     # (B, S, C_in)
    B, S, Cin = x.shape
    D, H, Dh = cfg["dim"], cfg["heads"], cfg["dim_head"]
    depth = cfg["depth"]
    inner = D * cfg["ff_mult"]
    dim_out = cfg["dim_out"]

    # relative position bias, shared across layers AND batch: (H, S, S)
    bucket = _rel_pos_bucket(S, cfg["num_buckets"], cfg["max_distance"])
    bias = jnp.transpose(params["rel_bias"][bucket], (2, 0, 1)) * (float(Dh) ** 0.5)

    kernel = partial(_transformer_kernel, B=B, S=S, H=H, Dh=Dh)

    # ---- one fused pallas_call for project_in + all transformer layers + final norm
    # TODO(synk): assumes runtime sequence length == max_seq_len (as in the torch module).
    hn = pl.pallas_call(
        kernel,
        out_shape=jax.ShapeDtypeStruct((B * S, D), jnp.float32),
        grid=(depth,),
        in_specs=[
            pl.BlockSpec((B, S, Cin), lambda l: (0, 0, 0)),
            pl.BlockSpec((S, D), lambda l: (0, 0)),
            pl.BlockSpec((Cin, D), lambda l: (0, 0)),
            pl.BlockSpec((1, D), lambda l: (0, 0)),
            pl.BlockSpec((H, S, S), lambda l: (0, 0, 0)),
            # per-layer stacked weights, depth axis streamed (double-buffered by default)
            pl.BlockSpec((None, 1, D), lambda l: (l, 0, 0)),
            pl.BlockSpec((None, D, 3 * H * Dh), lambda l: (l, 0, 0)),
            pl.BlockSpec((None, H * Dh, D), lambda l: (l, 0, 0)),
            pl.BlockSpec((None, 1, D), lambda l: (l, 0, 0)),
            pl.BlockSpec((None, D, 2 * inner), lambda l: (l, 0, 0)),
            pl.BlockSpec((None, 1, 2 * inner), lambda l: (l, 0, 0)),
            pl.BlockSpec((None, inner, D), lambda l: (l, 0, 0)),
            pl.BlockSpec((None, 1, D), lambda l: (l, 0, 0)),
            pl.BlockSpec((1, D), lambda l: (0, 0)),
        ],
        out_specs=pl.BlockSpec((B * S, D), lambda l: (0, 0)),
        scratch_shapes=[pltpu.VMEM((B * S, D), jnp.float32)],
        compiler_params=pltpu.CompilerParams(
            dimension_semantics=("arbitrary",), vmem_limit_bytes=_VMEM_LIMIT),
    )(
        x, params["pos_emb"], params["proj_in_w"], params["proj_in_b"], bias,
        params["attn_g"], params["wqkv"], params["wo"],
        params["ff_g"], params["ff_w1"], params["ff_b1"],
        params["ff_w2"], params["ff_b2"],
        params["final_norm_g"],
    )

    # ---- flatten (free row-major reshape in HBM) + output Linear as one tiny kernel
    out = pl.pallas_call(
        _head_kernel,
        out_shape=jax.ShapeDtypeStruct((B, dim_out), jnp.float32),
        in_specs=[_VMEM, _VMEM, _VMEM],
        out_specs=_VMEM,
        compiler_params=pltpu.CompilerParams(vmem_limit_bytes=_VMEM_LIMIT),
    )(hn.reshape(B, S * D), params["out_w"], params["out_b"])
    return out


if __name__ == "__main__":
    cfg = dict(
        max_seq_len=16, channel_in=4, dim_out=8,
        heads=6, depth=2, dim=128, dim_head=64, ff_mult=4,
        num_buckets=32, max_distance=128,
    )
    key = jax.random.PRNGKey(0)
    pkey, xkey = jax.random.split(key)
    params = init_params(pkey, cfg)

    # input: (B, 1, S, C_in); .squeeze(axis=1) -> (B, S, C_in)
    x = jax.random.normal(xkey, (2, 1, cfg["max_seq_len"], cfg["channel_in"]), jnp.float32)

    fwd = jax.jit(partial(forward, cfg=cfg))
    out = jax.block_until_ready(fwd(params, x))
    assert out.shape == (2, cfg["dim_out"])
    assert bool(jnp.all(jnp.isfinite(out)))
    print("KERNEL_OK")
</pallas_src>

<mosaic_0001>
module attributes {stable_mosaic.version = 11 : i64} {
  func.func @_head_kernel(%arg0: memref<2x2048xf32, #tpu.memory_space<vmem>>, %arg1: memref<2048x8xf32, #tpu.memory_space<vmem>>, %arg2: memref<1x8xf32, #tpu.memory_space<vmem>>, %arg3: memref<2x8xf32, #tpu.memory_space<vmem>>) attributes {dimension_semantics = [], scalar_prefetch = 0 : i64, scratch_operands = 0 : i64, tpu.core_type = #tpu.core_type<tc>} {
    %c0 = arith.constant 0 : index
    %c0_0 = arith.constant 0 : index
    %0 = vector.load %arg0[%c0, %c0_0] : memref<2x2048xf32, #tpu.memory_space<vmem>>, vector<2x2048xf32>
    %c0_1 = arith.constant 0 : index
    %c0_2 = arith.constant 0 : index
    %1 = vector.load %arg1[%c0_1, %c0_2] : memref<2048x8xf32, #tpu.memory_space<vmem>>, vector<2048x8xf32>
    %cst = arith.constant dense<0.000000e+00> : vector<2x8xf32>
    %2 = tpu.matmul %0, %1, %cst {dimension_numbers = #tpu.dot_dimension_numbers<[1], [0], [0], [1], [0, 0, 1, 1], [], []>} : vector<2x2048xf32>, vector<2048x8xf32>, vector<2x8xf32> -> vector<2x8xf32>
    %c0_3 = arith.constant 0 : index
    %c0_4 = arith.constant 0 : index
    %3 = vector.load %arg2[%c0_3, %c0_4] : memref<1x8xf32, #tpu.memory_space<vmem>>, vector<1x8xf32>
    %4 = vector.broadcast %3 : vector<1x8xf32> to vector<2x8xf32>
    %5 = arith.addf %2, %4 : vector<2x8xf32>
    %c0_5 = arith.constant 0 : index
    %c0_6 = arith.constant 0 : index
    %6 = vector.load %arg3[%c0_5, %c0_6] : memref<2x8xf32, #tpu.memory_space<vmem>>, vector<2x8xf32>
    tpu.vector_store %arg3[%c0_5, %c0_6], %5 {strides = array<i32>} : memref<2x8xf32, #tpu.memory_space<vmem>>, vector<2x8xf32>,
    return
  }
}

module attributes {stable_mosaic.version = 11 : i64} {
  func.func @_transformer_kernel(%arg0: i32, %arg1: memref<2x16x4xf32, #tpu.memory_space<vmem>>, %arg2: memref<16x128xf32, #tpu.memory_space<vmem>>, %arg3: memref<4x128xf32, #tpu.memory_space<vmem>>, %arg4: memref<1x128xf32, #tpu.memory_space<vmem>>, %arg5: memref<6x16x16xf32, #tpu.memory_space<vmem>>, %arg6: memref<1x1x128xf32, #tpu.memory_space<vmem>>, %arg7: memref<1x128x1152xbf16, #tpu.memory_space<vmem>>, %arg8: memref<1x384x128xbf16, #tpu.memory_space<vmem>>, %arg9: memref<1x1x128xf32, #tpu.memory_space<vmem>>, %arg10: memref<1x128x1024xbf16, #tpu.memory_space<vmem>>, %arg11: memref<1x1x1024xf32, #tpu.memory_space<vmem>>, %arg12: memref<1x512x128xbf16, #tpu.memory_space<vmem>>, %arg13: memref<1x1x128xf32, #tpu.memory_space<vmem>>, %arg14: memref<1x128xf32, #tpu.memory_space<vmem>>, %arg15: memref<32x128xf32, #tpu.memory_space<vmem>>, %arg16: memref<32x128xf32, #tpu.memory_space<vmem>>) attributes {dimension_semantics = [#tpu.dimension_semantics<arbitrary>], iteration_bounds = array<i64: 2>, scalar_prefetch = 0 : i64, scratch_operands = 1 : i64, tpu.core_type = #tpu.core_type<tc>, window_params = [{pipeline_mode = #tpu.pipeline_mode<synchronous>, transform_indices = @transform_0, window_bounds = array<i64: 2, 16, 4>}, {pipeline_mode = #tpu.pipeline_mode<synchronous>, transform_indices = @transform_1, window_bounds = array<i64: 16, 128>}, {pipeline_mode = #tpu.pipeline_mode<synchronous>, transform_indices = @transform_2, window_bounds = array<i64: 4, 128>}, {pipeline_mode = #tpu.pipeline_mode<synchronous>, transform_indices = @transform_3, window_bounds = array<i64: 1, 128>}, {pipeline_mode = #tpu.pipeline_mode<synchronous>, transform_indices = @transform_4, window_bounds = array<i64: 6, 16, 16>}, {transform_indices = @transform_5, window_bounds = array<i64: 1, 1, 128>}, {transform_indices = @transform_6, window_bounds = array<i64: 1, 128, 1152>}, {transform_indices = @transform_7, window_bounds = array<i64: 1, 384, 128>}, {transform_indices = @transform_8, window_bounds = array<i64: 1, 1, 128>}, {transform_indices = @transform_9, window_bounds = array<i64: 1, 128, 1024>}, {transform_indices = @transform_10, window_bounds = array<i64: 1, 1, 1024>}, {transform_indices = @transform_11, window_bounds = array<i64: 1, 512, 128>}, {transform_indices = @transform_12, window_bounds = array<i64: 1, 1, 128>}, {pipeline_mode = #tpu.pipeline_mode<synchronous>, transform_indices = @transform_13, window_bounds = array<i64: 1, 128>}, {pipeline_mode = #tpu.pipeline_mode<synchronous>, transform_indices = @transform_14, window_bounds = array<i64: 32, 128>}]} {
    %c0_i32 = arith.constant 0 : i32
    %0 = arith.cmpi eq, %arg0, %c0_i32 : i32
    %1 = arith.extui %0 : i1 to i32
    %c0_i32_0 = arith.constant 0 : i32
    %2 = arith.cmpi ne, %1, %c0_i32_0 : i32
    scf.if %2 {
      %c0_179 = arith.constant 0 : index
      %c0_180 = arith.constant 0 : index
      %383 = vector.load %arg4[%c0_179, %c0_180] : memref<1x128xf32, #tpu.memory_space<vmem>>, vector<1x128xf32>
      %c0_181 = arith.constant 0 : index
      %c0_182 = arith.constant 0 : index
      %384 = vector.load %arg2[%c0_181, %c0_182] : memref<16x128xf32, #tpu.memory_space<vmem>>, vector<16x128xf32>
      %cst_183 = arith.constant 0.0883883461 : f32
      %385 = vector.broadcast %cst_183 : f32 to vector<16x128xf32>
      %386 = arith.mulf %384, %385 : vector<16x128xf32>
      %387 = vector.broadcast %383 : vector<1x128xf32> to vector<16x128xf32>
      %388 = arith.addf %387, %386 : vector<16x128xf32>
      %c0_184 = arith.constant 0 : index
      %c0_185 = arith.constant 0 : index
      %c0_186 = arith.constant 0 : index
      %389 = vector.load %arg1[%c0_184, %c0_185, %c0_186] : memref<2x16x4xf32, #tpu.memory_space<vmem>>, vector<1x16x4xf32>
      %390 = vector.shape_cast %389 : vector<1x16x4xf32> to vector<16x4xf32>
      %391 = vector.extract_strided_slice %390 {offsets = [0, 0], sizes = [16, 1], strides = [1, 1]} : vector<16x4xf32> to vector<16x1xf32>
      %c0_187 = arith.constant 0 : index
      %c0_188 = arith.constant 0 : index
      %392 = vector.load %arg3[%c0_187, %c0_188] : memref<4x128xf32, #tpu.memory_space<vmem>>, vector<1x128xf32>
      %393 = vector.broadcast %391 : vector<16x1xf32> to vector<16x128xf32>
      %394 = vector.broadcast %392 : vector<1x128xf32> to vector<16x128xf32>
      %395 = arith.mulf %393, %394 : vector<16x128xf32>
      %396 = arith.addf %388, %395 : vector<16x128xf32>
      %397 = vector.extract_strided_slice %390 {offsets = [0, 1], sizes = [16, 1], strides = [1, 1]} : vector<16x4xf32> to vector<16x1xf32>
      %c1_189 = arith.constant 1 : index
      %c0_190 = arith.constant 0 : index
      %398 = vector.load %arg3[%c1_189, %c0_190] : memref<4x128xf32, #tpu.memory_space<vmem>>, vector<1x128xf32>
      %399 = vector.broadcast %397 : vector<16x1xf32> to vector<16x128xf32>
      %400 = vector.broadcast %398 : vector<1x128xf32> to vector<16x128xf32>
      %401 = arith.mulf %399, %400 : vector<16x128xf32>
      %402 = arith.addf %396, %401 : vector<16x128xf32>
      %403 = vector.extract_strided_slice %390 {offsets = [0, 2], sizes = [16, 1], strides = [1, 1]} : vector<16x4xf32> to vector<16x1xf32>
      %c2_191 = arith.constant 2 : index
      %c0_192 = arith.constant 0 : index
      %404 = vector.load %arg3[%c2_191, %c0_192] : memref<4x128xf32, #tpu.memory_space<vmem>>, vector<1x128xf32>
      %405 = vector.broadcast %403 : vector<16x1xf32> to vector<16x128xf32>
      %406 = vector.broadcast %404 : vector<1x128xf32> to vector<16x128xf32>
      %407 = arith.mulf %405, %406 : vector<16x128xf32>
      %408 = arith.addf %402, %407 : vector<16x128xf32>
      %409 = vector.extract_strided_slice %390 {offsets = [0, 3], sizes = [16, 1], strides = [1, 1]} : vector<16x4xf32> to vector<16x1xf32>
      %c3_193 = arith.constant 3 : index
      %c0_194 = arith.constant 0 : index
      %410 = vector.load %arg3[%c3_193, %c0_194] : memref<4x128xf32, #tpu.memory_space<vmem>>, vector<1x128xf32>
      %411 = vector.broadcast %409 : vector<16x1xf32> to vector<16x128xf32>
      %412 = vector.broadcast %410 : vector<1x128xf32> to vector<16x128xf32>
      %413 = arith.mulf %411, %412 : vector<16x128xf32>
      %414 = arith.addf %408, %413 : vector<16x128xf32>
      %c0_195 = arith.constant 0 : index
      %c0_196 = arith.constant 0 : index
      %415 = vector.load %arg16[%c0_195, %c0_196] : memref<32x128xf32, #tpu.memory_space<vmem>>, vector<16x128xf32>
      tpu.vector_store %arg16[%c0_195, %c0_196], %414 {strides = array<i32>} : memref<32x128xf32, #tpu.memory_space<vmem>>, vector<16x128xf32>,
      %c1_197 = arith.constant 1 : index
      %c0_198 = arith.constant 0 : index
      %c0_199 = arith.constant 0 : index
      %416 = vector.load %arg1[%c1_197, %c0_198, %c0_199] : memref<2x16x4xf32, #tpu.memory_space<vmem>>, vector<1x16x4xf32>
      %417 = vector.shape_cast %416 : vector<1x16x4xf32> to vector<16x4xf32>
      %418 = vector.extract_strided_slice %417 {offsets = [0, 0], sizes = [16, 1], strides = [1, 1]} : vector<16x4xf32> to vector<16x1xf32>
      %c0_200 = arith.constant 0 : index
      %c0_201 = arith.constant 0 : index
      %419 = vector.load %arg3[%c0_200, %c0_201] : memref<4x128xf32, #tpu.memory_space<vmem>>, vector<1x128xf32>
      %420 = vector.broadcast %418 : vector<16x1xf32> to vector<16x128xf32>
      %421 = vector.broadcast %419 : vector<1x128xf32> to vector<16x128xf32>
      %422 = arith.mulf %420, %421 : vector<16x128xf32>
      %423 = arith.addf %388, %422 : vector<16x128xf32>
      %424 = vector.extract_strided_slice %417 {offsets = [0, 1], sizes = [16, 1], strides = [1, 1]} : vector<16x4xf32> to vector<16x1xf32>
      %c1_202 = arith.constant 1 : index
      %c0_203 = arith.constant 0 : index
      %425 = vector.load %arg3[%c1_202, %c0_203] : memref<4x128xf32, #tpu.memory_space<vmem>>, vector<1x128xf32>
      %426 = vector.broadcast %424 : vector<16x1xf32> to vector<16x128xf32>
      %427 = vector.broadcast %425 : vector<1x128xf32> to vector<16x128xf32>
      %428 = arith.mulf %426, %427 : vector<16x128xf32>
      %429 = arith.addf %423, %428 : vector<16x128xf32>
      %430 = vector.extract_strided_slice %417 {offsets = [0, 2], sizes = [16, 1], strides = [1, 1]} : vector<16x4xf32> to vector<16x1xf32>
      %c2_204 = arith.constant 2 : index
      %c0_205 = arith.constant 0 : index
      %431 = vector.load %arg3[%c2_204, %c0_205] : memref<4x128xf32, #tpu.memory_space<vmem>>, vector<1x128xf32>
      %432 = vector.broadcast %430 : vector<16x1xf32> to vector<16x128xf32>
      %433 = vector.broadcast %431 : vector<1x128xf32> to vector<16x128xf32>
      %434 = arith.mulf %432, %433 : vector<16x128xf32>
      %435 = arith.addf %429, %434 : vector<16x128xf32>
      %436 = vector.extract_strided_slice %417 {offsets = [0, 3], sizes = [16, 1], strides = [1, 1]} : vector<16x4xf32> to vector<16x1xf32>
      %c3_206 = arith.constant 3 : index
      %c0_207 = arith.constant 0 : index
      %437 = vector.load %arg3[%c3_206, %c0_207] : memref<4x128xf32, #tpu.memory_space<vmem>>, vector<1x128xf32>
      %438 = vector.broadcast %436 : vector<16x1xf32> to vector<16x128xf32>
      %439 = vector.broadcast %437 : vector<1x128xf32> to vector<16x128xf32>
      %440 = arith.mulf %438, %439 : vector<16x128xf32>
      %441 = arith.addf %435, %440 : vector<16x128xf32>
      %c16_208 = arith.constant 16 : index
      %c0_209 = arith.constant 0 : index
      %442 = vector.load %arg16[%c16_208, %c0_209] : memref<32x128xf32, #tpu.memory_space<vmem>>, vector<16x128xf32>
      tpu.vector_store %arg16[%c16_208, %c0_209], %441 {strides = array<i32>} : memref<32x128xf32, #tpu.memory_space<vmem>>, vector<16x128xf32>,
    } else {
    }
    %c0 = arith.constant 0 : index
    %c0_1 = arith.constant 0 : index
    %3 = vector.load %arg16[%c0, %c0_1] : memref<32x128xf32, #tpu.memory_space<vmem>>, vector<32x128xf32>
    %c0_2 = arith.constant 0 : index
    %c0_3 = arith.constant 0 : index
    %c0_4 = arith.constant 0 : index
    %4 = vector.load %arg6[%c0_2, %c0_3, %c0_4] : memref<1x1x128xf32, #tpu.memory_space<vmem>>, vector<1x1x128xf32>
    %5 = vector.shape_cast %4 : vector<1x1x128xf32> to vector<1x128xf32>
    %6 = arith.mulf %3, %3 : vector<32x128xf32>
    %cst = arith.constant dense<0.000000e+00> : vector<32xf32>
    %7 = vector.multi_reduction <add>, %6, %cst [1] : vector<32x128xf32> to vector<32xf32>
    %8 = vector.shape_cast %7 : vector<32xf32> to vector<32x1xf32>
    %9 = math.sqrt %8 : vector<32x1xf32>
    %cst_5 = arith.constant 9.99999996E-13 : f32
    %10 = vector.broadcast %cst_5 : f32 to vector<32x1xf32>
    %11 = arith.maximumf %9, %10 : vector<32x1xf32>
    %12 = vector.broadcast %11 : vector<32x1xf32> to vector<32x128xf32>
    %13 = arith.divf %3, %12 : vector<32x128xf32>
    %cst_6 = arith.constant 11.3137083 : f32
    %14 = vector.broadcast %cst_6 : f32 to vector<32x128xf32>
    %15 = arith.mulf %13, %14 : vector<32x128xf32>
    %16 = vector.broadcast %5 : vector<1x128xf32> to vector<32x128xf32>
    %17 = arith.mulf %15, %16 : vector<32x128xf32>
    %18 = arith.truncf %17 : vector<32x128xf32> to vector<32x128xbf16>
    %c0_7 = arith.constant 0 : index
    %c0_8 = arith.constant 0 : index
    %c0_9 = arith.constant 0 : index
    %19 = vector.load %arg7[%c0_7, %c0_8, %c0_9] : memref<1x128x1152xbf16, #tpu.memory_space<vmem>>, vector<1x128x1152xbf16>
    %20 = vector.shape_cast %19 : vector<1x128x1152xbf16> to vector<128x1152xbf16>
    %cst_10 = arith.constant dense<0.000000e+00> : vector<32x1152xf32>
    %21 = tpu.matmul %18, %20, %cst_10 {dimension_numbers = #tpu.dot_dimension_numbers<[1], [0], [0], [1], [0, 0, 1, 1], [], []>} : vector<32x128xbf16>, vector<128x1152xbf16>, vector<32x1152xf32> -> vector<32x1152xf32>
    %22 = arith.truncf %21 : vector<32x1152xf32> to vector<32x1152xbf16>
    %cst_11 = arith.constant 0.000000e+00 : f32
    %23 = vector.broadcast %cst_11 : f32 to vector<16x128xf32>
    %24 = vector.extract_strided_slice %22 {offsets = [0, 0], sizes = [16, 64], strides = [1, 1]} : vector<32x1152xbf16> to vector<16x64xbf16>
    %25 = vector.extract_strided_slice %22 {offsets = [0, 384], sizes = [16, 64], strides = [1, 1]} : vector<32x1152xbf16> to vector<16x64xbf16>
    %26 = vector.extract_strided_slice %22 {offsets = [0, 768], sizes = [16, 64], strides = [1, 1]} : vector<32x1152xbf16> to vector<16x64xbf16>
    %cst_12 = arith.constant dense<0.000000e+00> : vector<16x16xf32>
    %27 = tpu.matmul %24, %25, %cst_12 {dimension_numbers = #tpu.dot_dimension_numbers<[1], [1], [0], [0], [0, 0, 1, 0], [], []>} : vector<16x64xbf16>, vector<16x64xbf16>, vector<16x16xf32> -> vector<16x16xf32>
    %cst_13 = arith.constant 1.250000e-01 : f32
    %28 = vector.broadcast %cst_13 : f32 to vector<16x16xf32>
    %29 = arith.mulf %27, %28 : vector<16x16xf32>
    %c0_14 = arith.constant 0 : index
    %c0_15 = arith.constant 0 : index
    %c0_16 = arith.constant 0 : index
    %30 = vector.load %arg5[%c0_14, %c0_15, %c0_16] : memref<6x16x16xf32, #tpu.memory_space<vmem>>, vector<1x16x16xf32>
    %31 = vector.shape_cast %30 : vector<1x16x16xf32> to vector<16x16xf32>
    %32 = arith.addf %29, %31 : vector<16x16xf32>
    %cst_17 = arith.constant dense<0xFF800000> : vector<16xf32>
    %33 = vector.multi_reduction <maximumf>, %32, %cst_17 [1] : vector<16x16xf32> to vector<16xf32>
    %34 = vector.shape_cast %33 : vector<16xf32> to vector<16x1xf32>
    %35 = vector.broadcast %34 : vector<16x1xf32> to vector<16x16xf32>
    %36 = arith.subf %32, %35 : vector<16x16xf32>
    %37 = math.exp %36 : vector<16x16xf32>
    %cst_18 = arith.constant dense<0.000000e+00> : vector<16xf32>
    %38 = vector.multi_reduction <add>, %37, %cst_18 [1] : vector<16x16xf32> to vector<16xf32>
    %39 = vector.shape_cast %38 : vector<16xf32> to vector<16x1xf32>
    %40 = vector.broadcast %39 : vector<16x1xf32> to vector<16x16xf32>
    %41 = arith.divf %37, %40 : vector<16x16xf32>
    %42 = arith.truncf %41 : vector<16x16xf32> to vector<16x16xbf16>
    %cst_19 = arith.constant dense<0.000000e+00> : vector<16x64xf32>
    %43 = tpu.matmul %42, %26, %cst_19 {dimension_numbers = #tpu.dot_dimension_numbers<[1], [0], [0], [1], [0, 0, 1, 1], [], []>} : vector<16x16xbf16>, vector<16x64xbf16>, vector<16x64xf32> -> vector<16x64xf32>
    %44 = arith.truncf %43 : vector<16x64xf32> to vector<16x64xbf16>
    %c0_20 = arith.constant 0 : index
    %c0_21 = arith.constant 0 : index
    %c0_22 = arith.constant 0 : index
    %45 = vector.load %arg8[%c0_20, %c0_21, %c0_22] : memref<1x384x128xbf16, #tpu.memory_space<vmem>>, vector<1x64x128xbf16>
    %46 = vector.shape_cast %45 : vector<1x64x128xbf16> to vector<64x128xbf16>
    %cst_23 = arith.constant dense<0.000000e+00> : vector<16x128xf32>
    %47 = tpu.matmul %44, %46, %cst_23 {dimension_numbers = #tpu.dot_dimension_numbers<[1], [0], [0], [1], [0, 0, 1, 1], [], []>} : vector<16x64xbf16>, vector<64x128xbf16>, vector<16x128xf32> -> vector<16x128xf32>
    %48 = arith.addf %23, %47 : vector<16x128xf32>
    %49 = vector.extract_strided_slice %22 {offsets = [0, 64], sizes = [16, 64], strides = [1, 1]} : vector<32x1152xbf16> to vector<16x64xbf16>
    %50 = vector.extract_strided_slice %22 {offsets = [0, 448], sizes = [16, 64], strides = [1, 1]} : vector<32x1152xbf16> to vector<16x64xbf16>
    %51 = vector.extract_strided_slice %22 {offsets = [0, 832], sizes = [16, 64], strides = [1, 1]} : vector<32x1152xbf16> to vector<16x64xbf16>
    %cst_24 = arith.constant dense<0.000000e+00> : vector<16x16xf32>
    %52 = tpu.matmul %49, %50, %cst_24 {dimension_numbers = #tpu.dot_dimension_numbers<[1], [1], [0], [0], [0, 0, 1, 0], [], []>} : vector<16x64xbf16>, vector<16x64xbf16>, vector<16x16xf32> -> vector<16x16xf32>
    %cst_25 = arith.constant 1.250000e-01 : f32
    %53 = vector.broadcast %cst_25 : f32 to vector<16x16xf32>
    %54 = arith.mulf %52, %53 : vector<16x16xf32>
    %c1 = arith.constant 1 : index
    %c0_26 = arith.constant 0 : index
    %c0_27 = arith.constant 0 : index
    %55 = vector.load %arg5[%c1, %c0_26, %c0_27] : memref<6x16x16xf32, #tpu.memory_space<vmem>>, vector<1x16x16xf32>
    %56 = vector.shape_cast %55 : vector<1x16x16xf32> to vector<16x16xf32>
    %57 = arith.addf %54, %56 : vector<16x16xf32>
    %cst_28 = arith.constant dense<0xFF800000> : vector<16xf32>
    %58 = vector.multi_reduction <maximumf>, %57, %cst_28 [1] : vector<16x16xf32> to vector<16xf32>
    %59 = vector.shape_cast %58 : vector<16xf32> to vector<16x1xf32>
    %60 = vector.broadcast %59 : vector<16x1xf32> to vector<16x16xf32>
    %61 = arith.subf %57, %60 : vector<16x16xf32>
    %62 = math.exp %61 : vector<16x16xf32>
    %cst_29 = arith.constant dense<0.000000e+00> : vector<16xf32>
    %63 = vector.multi_reduction <add>, %62, %cst_29 [1] : vector<16x16xf32> to vector<16xf32>
    %64 = vector.shape_cast %63 : vector<16xf32> to vector<16x1xf32>
    %65 = vector.broadcast %64 : vector<16x1xf32> to vector<16x16xf32>
    %66 = arith.divf %62, %65 : vector<16x16xf32>
    %67 = arith.truncf %66 : vector<16x16xf32> to vector<16x16xbf16>
    %cst_30 = arith.constant dense<0.000000e+00> : vector<16x64xf32>
    %68 = tpu.matmul %67, %51, %cst_30 {dimension_numbers = #tpu.dot_dimension_numbers<[1], [0], [0], [1], [0, 0, 1, 1], [], []>} : vector<16x16xbf16>, vector<16x64xbf16>, vector<16x64xf32> -> vector<16x64xf32>
    %69 = arith.truncf %68 : vector<16x64xf32> to vector<16x64xbf16>
    %c0_31 = arith.constant 0 : index
    %c64 = arith.constant 64 : index
    %c0_32 = arith.constant 0 : index
    %70 = vector.load %arg8[%c0_31, %c64, %c0_32] : memref<1x384x128xbf16, #tpu.memory_space<vmem>>, vector<1x64x128xbf16>
    %71 = vector.shape_cast %70 : vector<1x64x128xbf16> to vector<64x128xbf16>
    %cst_33 = arith.constant dense<0.000000e+00> : vector<16x128xf32>
    %72 = tpu.matmul %69, %71, %cst_33 {dimension_numbers = #tpu.dot_dimension_numbers<[1], [0], [0], [1], [0, 0, 1, 1], [], []>} : vector<16x64xbf16>, vector<64x128xbf16>, vector<16x128xf32> -> vector<16x128xf32>
    %73 = arith.addf %48, %72 : vector<16x128xf32>
    %74 = vector.extract_strided_slice %22 {offsets = [0, 128], sizes = [16, 64], strides = [1, 1]} : vector<32x1152xbf16> to vector<16x64xbf16>
    %75 = vector.extract_strided_slice %22 {offsets = [0, 512], sizes = [16, 64], strides = [1, 1]} : vector<32x1152xbf16> to vector<16x64xbf16>
    %76 = vector.extract_strided_slice %22 {offsets = [0, 896], sizes = [16, 64], strides = [1, 1]} : vector<32x1152xbf16> to vector<16x64xbf16>
    %cst_34 = arith.constant dense<0.000000e+00> : vector<16x16xf32>
    %77 = tpu.matmul %74, %75, %cst_34 {dimension_numbers = #tpu.dot_dimension_numbers<[1], [1], [0], [0], [0, 0, 1, 0], [], []>} : vector<16x64xbf16>, vector<16x64xbf16>, vector<16x16xf32> -> vector<16x16xf32>
    %cst_35 = arith.constant 1.250000e-01 : f32
    %78 = vector.broadcast %cst_35 : f32 to vector<16x16xf32>
    %79 = arith.mulf %77, %78 : vector<16x16xf32>
    %c2 = arith.constant 2 : index
    %c0_36 = arith.constant 0 : index
    %c0_37 = arith.constant 0 : index
    %80 = vector.load %arg5[%c2, %c0_36, %c0_37] : memref<6x16x16xf32, #tpu.memory_space<vmem>>, vector<1x16x16xf32>
    %81 = vector.shape_cast %80 : vector<1x16x16xf32> to vector<16x16xf32>
    %82 = arith.addf %79, %81 : vector<16x16xf32>
    %cst_38 = arith.constant dense<0xFF800000> : vector<16xf32>
    %83 = vector.multi_reduction <maximumf>, %82, %cst_38 [1] : vector<16x16xf32> to vector<16xf32>
    %84 = vector.shape_cast %83 : vector<16xf32> to vector<16x1xf32>
    %85 = vector.broadcast %84 : vector<16x1xf32> to vector<16x16xf32>
    %86 = arith.subf %82, %85 : vector<16x16xf32>
    %87 = math.exp %86 : vector<16x16xf32>
    %cst_39 = arith.constant dense<0.000000e+00> : vector<16xf32>
    %88 = vector.multi_reduction <add>, %87, %cst_39 [1] : vector<16x16xf32> to vector<16xf32>
    %89 = vector.shape_cast %88 : vector<16xf32> to vector<16x1xf32>
    %90 = vector.broadcast %89 : vector<16x1xf32> to vector<16x16xf32>
    %91 = arith.divf %87, %90 : vector<16x16xf32>
    %92 = arith.truncf %91 : vector<16x16xf32> to vector<16x16xbf16>
    %cst_40 = arith.constant dense<0.000000e+00> : vector<16x64xf32>
    %93 = tpu.matmul %92, %76, %cst_40 {dimension_numbers = #tpu.dot_dimension_numbers<[1], [0], [0], [1], [0, 0, 1, 1], [], []>} : vector<16x16xbf16>, vector<16x64xbf16>, vector<16x64xf32> -> vector<16x64xf32>
    %94 = arith.truncf %93 : vector<16x64xf32> to vector<16x64xbf16>
    %c0_41 = arith.constant 0 : index
    %c128 = arith.constant 128 : index
    %c0_42 = arith.constant 0 : index
    %95 = vector.load %arg8[%c0_41, %c128, %c0_42] : memref<1x384x128xbf16, #tpu.memory_space<vmem>>, vector<1x64x128xbf16>
    %96 = vector.shape_cast %95 : vector<1x64x128xbf16> to vector<64x128xbf16>
    %cst_43 = arith.constant dense<0.000000e+00> : vector<16x128xf32>
    %97 = tpu.matmul %94, %96, %cst_43 {dimension_numbers = #tpu.dot_dimension_numbers<[1], [0], [0], [1], [0, 0, 1, 1], [], []>} : vector<16x64xbf16>, vector<64x128xbf16>, vector<16x128xf32> -> vector<16x128xf32>
    %98 = arith.addf %73, %97 : vector<16x128xf32>
    %99 = vector.extract_strided_slice %22 {offsets = [0, 192], sizes = [16, 64], strides = [1, 1]} : vector<32x1152xbf16> to vector<16x64xbf16>
    %100 = vector.extract_strided_slice %22 {offsets = [0, 576], sizes = [16, 64], strides = [1, 1]} : vector<32x1152xbf16> to vector<16x64xbf16>
    %101 = vector.extract_strided_slice %22 {offsets = [0, 960], sizes = [16, 64], strides = [1, 1]} : vector<32x1152xbf16> to vector<16x64xbf16>
    %cst_44 = arith.constant dense<0.000000e+00> : vector<16x16xf32>
    %102 = tpu.matmul %99, %100, %cst_44 {dimension_numbers = #tpu.dot_dimension_numbers<[1], [1], [0], [0], [0, 0, 1, 0], [], []>} : vector<16x64xbf16>, vector<16x64xbf16>, vector<16x16xf32> -> vector<16x16xf32>
    %cst_45 = arith.constant 1.250000e-01 : f32
    %103 = vector.broadcast %cst_45 : f32 to vector<16x16xf32>
    %104 = arith.mulf %102, %103 : vector<16x16xf32>
    %c3 = arith.constant 3 : index
    %c0_46 = arith.constant 0 : index
    %c0_47 = arith.constant 0 : index
    %105 = vector.load %arg5[%c3, %c0_46, %c0_47] : memref<6x16x16xf32, #tpu.memory_space<vmem>>, vector<1x16x16xf32>
    %106 = vector.shape_cast %105 : vector<1x16x16xf32> to vector<16x16xf32>
    %107 = arith.addf %104, %106 : vector<16x16xf32>
    %cst_48 = arith.constant dense<0xFF800000> : vector<16xf32>
    %108 = vector.multi_reduction <maximumf>, %107, %cst_48 [1] : vector<16x16xf32> to vector<16xf32>
    %109 = vector.shape_cast %108 : vector<16xf32> to vector<16x1xf32>
    %110 = vector.broadcast %109 : vector<16x1xf32> to vector<16x16xf32>
    %111 = arith.subf %107, %110 : vector<16x16xf32>
    %112 = math.exp %111 : vector<16x16xf32>
    %cst_49 = arith.constant dense<0.000000e+00> : vector<16xf32>
    %113 = vector.multi_reduction <add>, %112, %cst_49 [1] : vector<16x16xf32> to vector<16xf32>
    %114 = vector.shape_cast %113 : vector<16xf32> to vector<16x1xf32>
    %115 = vector.broadcast %114 : vector<16x1xf32> to vector<16x16xf32>
    %116 = arith.divf %112, %115 : vector<16x16xf32>
    %117 = arith.truncf %116 : vector<16x16xf32> to vector<16x16xbf16>
    %cst_50 = arith.constant dense<0.000000e+00> : vector<16x64xf32>
    %118 = tpu.matmul %117, %101, %cst_50 {dimension_numbers = #tpu.dot_dimension_numbers<[1], [0], [0], [1], [0, 0, 1, 1], [], []>} : vector<16x16xbf16>, vector<16x64xbf16>, vector<16x64xf32> -> vector<16x64xf32>
    %119 = arith.truncf %118 : vector<16x64xf32> to vector<16x64xbf16>
    %c0_51 = arith.constant 0 : index
    %c192 = arith.constant 192 : index
    %c0_52 = arith.constant 0 : index
    %120 = vector.load %arg8[%c0_51, %c192, %c0_52] : memref<1x384x128xbf16, #tpu.memory_space<vmem>>, vector<1x64x128xbf16>
    %121 = vector.shape_cast %120 : vector<1x64x128xbf16> to vector<64x128xbf16>
    %cst_53 = arith.constant dense<0.000000e+00> : vector<16x128xf32>
    %122 = tpu.matmul %119, %121, %cst_53 {dimension_numbers = #tpu.dot_dimension_numbers<[1], [0], [0], [1], [0, 0, 1, 1], [], []>} : vector<16x64xbf16>, vector<64x128xbf16>, vector<16x128xf32> -> vector<16x128xf32>
    %123 = arith.addf %98, %122 : vector<16x128xf32>
    %124 = vector.extract_strided_slice %22 {offsets = [0, 256], sizes = [16, 64], strides = [1, 1]} : vector<32x1152xbf16> to vector<16x64xbf16>
    %125 = vector.extract_strided_slice %22 {offsets = [0, 640], sizes = [16, 64], strides = [1, 1]} : vector<32x1152xbf16> to vector<16x64xbf16>
    %126 = vector.extract_strided_slice %22 {offsets = [0, 1024], sizes = [16, 64], strides = [1, 1]} : vector<32x1152xbf16> to vector<16x64xbf16>
    %cst_54 = arith.constant dense<0.000000e+00> : vector<16x16xf32>
    %127 = tpu.matmul %124, %125, %cst_54 {dimension_numbers = #tpu.dot_dimension_numbers<[1], [1], [0], [0], [0, 0, 1, 0], [], []>} : vector<16x64xbf16>, vector<16x64xbf16>, vector<16x16xf32> -> vector<16x16xf32>
    %cst_55 = arith.constant 1.250000e-01 : f32
    %128 = vector.broadcast %cst_55 : f32 to vector<16x16xf32>
    %129 = arith.mulf %127, %128 : vector<16x16xf32>
    %c4 = arith.constant 4 : index
    %c0_56 = arith.constant 0 : index
    %c0_57 = arith.constant 0 : index
    %130 = vector.load %arg5[%c4, %c0_56, %c0_57] : memref<6x16x16xf32, #tpu.memory_space<vmem>>, vector<1x16x16xf32>
    %131 = vector.shape_cast %130 : vector<1x16x16xf32> to vector<16x16xf32>
    %132 = arith.addf %129, %131 : vector<16x16xf32>
    %cst_58 = arith.constant dense<0xFF800000> : vector<16xf32>
    %133 = vector.multi_reduction <maximumf>, %132, %cst_58 [1] : vector<16x16xf32> to vector<16xf32>
    %134 = vector.shape_cast %133 : vector<16xf32> to vector<16x1xf32>
    %135 = vector.broadcast %134 : vector<16x1xf32> to vector<16x16xf32>
    %136 = arith.subf %132, %135 : vector<16x16xf32>
    %137 = math.exp %136 : vector<16x16xf32>
    %cst_59 = arith.constant dense<0.000000e+00> : vector<16xf32>
    %138 = vector.multi_reduction <add>, %137, %cst_59 [1] : vector<16x16xf32> to vector<16xf32>
    %139 = vector.shape_cast %138 : vector<16xf32> to vector<16x1xf32>
    %140 = vector.broadcast %139 : vector<16x1xf32> to vector<16x16xf32>
    %141 = arith.divf %137, %140 : vector<16x16xf32>
    %142 = arith.truncf %141 : vector<16x16xf32> to vector<16x16xbf16>
    %cst_60 = arith.constant dense<0.000000e+00> : vector<16x64xf32>
    %143 = tpu.matmul %142, %126, %cst_60 {dimension_numbers = #tpu.dot_dimension_numbers<[1], [0], [0], [1], [0, 0, 1, 1], [], []>} : vector<16x16xbf16>, vector<16x64xbf16>, vector<16x64xf32> -> vector<16x64xf32>
    %144 = arith.truncf %143 : vector<16x64xf32> to vector<16x64xbf16>
    %c0_61 = arith.constant 0 : index
    %c256 = arith.constant 256 : index
    %c0_62 = arith.constant 0 : index
    %145 = vector.load %arg8[%c0_61, %c256, %c0_62] : memref<1x384x128xbf16, #tpu.memory_space<vmem>>, vector<1x64x128xbf16>
    %146 = vector.shape_cast %145 : vector<1x64x128xbf16> to vector<64x128xbf16>
    %cst_63 = arith.constant dense<0.000000e+00> : vector<16x128xf32>
    %147 = tpu.matmul %144, %146, %cst_63 {dimension_numbers = #tpu.dot_dimension_numbers<[1], [0], [0], [1], [0, 0, 1, 1], [], []>} : vector<16x64xbf16>, vector<64x128xbf16>, vector<16x128xf32> -> vector<16x128xf32>
    %148 = arith.addf %123, %147 : vector<16x128xf32>
    %149 = vector.extract_strided_slice %22 {offsets = [0, 320], sizes = [16, 64], strides = [1, 1]} : vector<32x1152xbf16> to vector<16x64xbf16>
    %150 = vector.extract_strided_slice %22 {offsets = [0, 704], sizes = [16, 64], strides = [1, 1]} : vector<32x1152xbf16> to vector<16x64xbf16>
    %151 = vector.extract_strided_slice %22 {offsets = [0, 1088], sizes = [16, 64], strides = [1, 1]} : vector<32x1152xbf16> to vector<16x64xbf16>
    %cst_64 = arith.constant dense<0.000000e+00> : vector<16x16xf32>
    %152 = tpu.matmul %149, %150, %cst_64 {dimension_numbers = #tpu.dot_dimension_numbers<[1], [1], [0], [0], [0, 0, 1, 0], [], []>} : vector<16x64xbf16>, vector<16x64xbf16>, vector<16x16xf32> -> vector<16x16xf32>
    %cst_65 = arith.constant 1.250000e-01 : f32
    %153 = vector.broadcast %cst_65 : f32 to vector<16x16xf32>
    %154 = arith.mulf %152, %153 : vector<16x16xf32>
    %c5 = arith.constant 5 : index
    %c0_66 = arith.constant 0 : index
    %c0_67 = arith.constant 0 : index
    %155 = vector.load %arg5[%c5, %c0_66, %c0_67] : memref<6x16x16xf32, #tpu.memory_space<vmem>>, vector<1x16x16xf32>
    %156 = vector.shape_cast %155 : vector<1x16x16xf32> to vector<16x16xf32>
    %157 = arith.addf %154, %156 : vector<16x16xf32>
    %cst_68 = arith.constant dense<0xFF800000> : vector<16xf32>
    %158 = vector.multi_reduction <maximumf>, %157, %cst_68 [1] : vector<16x16xf32> to vector<16xf32>
    %159 = vector.shape_cast %158 : vector<16xf32> to vector<16x1xf32>
    %160 = vector.broadcast %159 : vector<16x1xf32> to vector<16x16xf32>
    %161 = arith.subf %157, %160 : vector<16x16xf32>
    %162 = math.exp %161 : vector<16x16xf32>
    %cst_69 = arith.constant dense<0.000000e+00> : vector<16xf32>
    %163 = vector.multi_reduction <add>, %162, %cst_69 [1] : vector<16x16xf32> to vector<16xf32>
    %164 = vector.shape_cast %163 : vector<16xf32> to vector<16x1xf32>
    %165 = vector.broadcast %164 : vector<16x1xf32> to vector<16x16xf32>
    %166 = arith.divf %162, %165 : vector<16x16xf32>
    %167 = arith.truncf %166 : vector<16x16xf32> to vector<16x16xbf16>
    %cst_70 = arith.constant dense<0.000000e+00> : vector<16x64xf32>
    %168 = tpu.matmul %167, %151, %cst_70 {dimension_numbers = #tpu.dot_dimension_numbers<[1], [0], [0], [1], [0, 0, 1, 1], [], []>} : vector<16x16xbf16>, vector<16x64xbf16>, vector<16x64xf32> -> vector<16x64xf32>
    %169 = arith.truncf %168 : vector<16x64xf32> to vector<16x64xbf16>
    %c0_71 = arith.constant 0 : index
    %c320 = arith.constant 320 : index
    %c0_72 = arith.constant 0 : index
    %170 = vector.load %arg8[%c0_71, %c320, %c0_72] : memref<1x384x128xbf16, #tpu.memory_space<vmem>>, vector<1x64x128xbf16>
    %171 = vector.shape_cast %170 : vector<1x64x128xbf16> to vector<64x128xbf16>
    %cst_73 = arith.constant dense<0.000000e+00> : vector<16x128xf32>
    %172 = tpu.matmul %169, %171, %cst_73 {dimension_numbers = #tpu.dot_dimension_numbers<[1], [0], [0], [1], [0, 0, 1, 1], [], []>} : vector<16x64xbf16>, vector<64x128xbf16>, vector<16x128xf32> -> vector<16x128xf32>
    %173 = arith.addf %148, %172 : vector<16x128xf32>
    %174 = vector.extract_strided_slice %3 {offsets = [0, 0], sizes = [16, 128], strides = [1, 1]} : vector<32x128xf32> to vector<16x128xf32>
    %175 = arith.addf %174, %173 : vector<16x128xf32>
    %c0_74 = arith.constant 0 : index
    %c0_75 = arith.constant 0 : index
    %176 = vector.load %arg16[%c0_74, %c0_75] : memref<32x128xf32, #tpu.memory_space<vmem>>, vector<16x128xf32>
    tpu.vector_store %arg16[%c0_74, %c0_75], %175 {strides = array<i32>} : memref<32x128xf32, #tpu.memory_space<vmem>>, vector<16x128xf32>,
    %cst_76 = arith.constant 0.000000e+00 : f32
    %177 = vector.broadcast %cst_76 : f32 to vector<16x128xf32>
    %178 = vector.extract_strided_slice %22 {offsets = [16, 0], sizes = [16, 64], strides = [1, 1]} : vector<32x1152xbf16> to vector<16x64xbf16>
    %179 = vector.extract_strided_slice %22 {offsets = [16, 384], sizes = [16, 64], strides = [1, 1]} : vector<32x1152xbf16> to vector<16x64xbf16>
    %180 = vector.extract_strided_slice %22 {offsets = [16, 768], sizes = [16, 64], strides = [1, 1]} : vector<32x1152xbf16> to vector<16x64xbf16>
    %cst_77 = arith.constant dense<0.000000e+00> : vector<16x16xf32>
    %181 = tpu.matmul %178, %179, %cst_77 {dimension_numbers = #tpu.dot_dimension_numbers<[1], [1], [0], [0], [0, 0, 1, 0], [], []>} : vector<16x64xbf16>, vector<16x64xbf16>, vector<16x16xf32> -> vector<16x16xf32>
    %cst_78 = arith.constant 1.250000e-01 : f32
    %182 = vector.broadcast %cst_78 : f32 to vector<16x16xf32>
    %183 = arith.mulf %181, %182 : vector<16x16xf32>
    %c0_79 = arith.constant 0 : index
    %c0_80 = arith.constant 0 : index
    %c0_81 = arith.constant 0 : index
    %184 = vector.load %arg5[%c0_79, %c0_80, %c0_81] : memref<6x16x16xf32, #tpu.memory_space<vmem>>, vector<1x16x16xf32>
    %185 = vector.shape_cast %184 : vector<1x16x16xf32> to vector<16x16xf32>
    %186 = arith.addf %183, %185 : vector<16x16xf32>
    %cst_82 = arith.constant dense<0xFF800000> : vector<16xf32>
    %187 = vector.multi_reduction <maximumf>, %186, %cst_82 [1] : vector<16x16xf32> to vector<16xf32>
    %188 = vector.shape_cast %187 : vector<16xf32> to vector<16x1xf32>
    %189 = vector.broadcast %188 : vector<16x1xf32> to vector<16x16xf32>
    %190 = arith.subf %186, %189 : vector<16x16xf32>
    %191 = math.exp %190 : vector<16x16xf32>
    %cst_83 = arith.constant dense<0.000000e+00> : vector<16xf32>
    %192 = vector.multi_reduction <add>, %191, %cst_83 [1] : vector<16x16xf32> to vector<16xf32>
    %193 = vector.shape_cast %192 : vector<16xf32> to vector<16x1xf32>
    %194 = vector.broadcast %193 : vector<16x1xf32> to vector<16x16xf32>
    %195 = arith.divf %191, %194 : vector<16x16xf32>
    %196 = arith.truncf %195 : vector<16x16xf32> to vector<16x16xbf16>
    %cst_84 = arith.constant dense<0.000000e+00> : vector<16x64xf32>
    %197 = tpu.matmul %196, %180, %cst_84 {dimension_numbers = #tpu.dot_dimension_numbers<[1], [0], [0], [1], [0, 0, 1, 1], [], []>} : vector<16x16xbf16>, vector<16x64xbf16>, vector<16x64xf32> -> vector<16x64xf32>
    %198 = arith.truncf %197 : vector<16x64xf32> to vector<16x64xbf16>
    %c0_85 = arith.constant 0 : index
    %c0_86 = arith.constant 0 : index
    %c0_87 = arith.constant 0 : index
    %199 = vector.load %arg8[%c0_85, %c0_86, %c0_87] : memref<1x384x128xbf16, #tpu.memory_space<vmem>>, vector<1x64x128xbf16>
    %200 = vector.shape_cast %199 : vector<1x64x128xbf16> to vector<64x128xbf16>
    %cst_88 = arith.constant dense<0.000000e+00> : vector<16x128xf32>
    %201 = tpu.matmul %198, %200, %cst_88 {dimension_numbers = #tpu.dot_dimension_numbers<[1], [0], [0], [1], [0, 0, 1, 1], [], []>} : vector<16x64xbf16>, vector<64x128xbf16>, vector<16x128xf32> -> vector<16x128xf32>
    %202 = arith.addf %177, %201 : vector<16x128xf32>
    %203 = vector.extract_strided_slice %22 {offsets = [16, 64], sizes = [16, 64], strides = [1, 1]} : vector<32x1152xbf16> to vector<16x64xbf16>
    %204 = vector.extract_strided_slice %22 {offsets = [16, 448], sizes = [16, 64], strides = [1, 1]} : vector<32x1152xbf16> to vector<16x64xbf16>
    %205 = vector.extract_strided_slice %22 {offsets = [16, 832], sizes = [16, 64], strides = [1, 1]} : vector<32x1152xbf16> to vector<16x64xbf16>
    %cst_89 = arith.constant dense<0.000000e+00> : vector<16x16xf32>
    %206 = tpu.matmul %203, %204, %cst_89 {dimension_numbers = #tpu.dot_dimension_numbers<[1], [1], [0], [0], [0, 0, 1, 0], [], []>} : vector<16x64xbf16>, vector<16x64xbf16>, vector<16x16xf32> -> vector<16x16xf32>
    %cst_90 = arith.constant 1.250000e-01 : f32
    %207 = vector.broadcast %cst_90 : f32 to vector<16x16xf32>
    %208 = arith.mulf %206, %207 : vector<16x16xf32>
    %c1_91 = arith.constant 1 : index
    %c0_92 = arith.constant 0 : index
    %c0_93 = arith.constant 0 : index
    %209 = vector.load %arg5[%c1_91, %c0_92, %c0_93] : memref<6x16x16xf32, #tpu.memory_space<vmem>>, vector<1x16x16xf32>
    %210 = vector.shape_cast %209 : vector<1x16x16xf32> to vector<16x16xf32>
    %211 = arith.addf %208, %210 : vector<16x16xf32>
    %cst_94 = arith.constant dense<0xFF800000> : vector<16xf32>
    %212 = vector.multi_reduction <maximumf>, %211, %cst_94 [1] : vector<16x16xf32> to vector<16xf32>
    %213 = vector.shape_cast %212 : vector<16xf32> to vector<16x1xf32>
    %214 = vector.broadcast %213 : vector<16x1xf32> to vector<16x16xf32>
    %215 = arith.subf %211, %214 : vector<16x16xf32>
    %216 = math.exp %215 : vector<16x16xf32>
    %cst_95 = arith.constant dense<0.000000e+00> : vector<16xf32>
    %217 = vector.multi_reduction <add>, %216, %cst_95 [1] : vector<16x16xf32> to vector<16xf32>
    %218 = vector.shape_cast %217 : vector<16xf32> to vector<16x1xf32>
    %219 = vector.broadcast %218 : vector<16x1xf32> to vector<16x16xf32>
    %220 = arith.divf %216, %219 : vector<16x16xf32>
    %221 = arith.truncf %220 : vector<16x16xf32> to vector<16x16xbf16>
    %cst_96 = arith.constant dense<0.000000e+00> : vector<16x64xf32>
    %222 = tpu.matmul %221, %205, %cst_96 {dimension_numbers = #tpu.dot_dimension_numbers<[1], [0], [0], [1], [0, 0, 1, 1], [], []>} : vector<16x16xbf16>, vector<16x64xbf16>, vector<16x64xf32> -> vector<16x64xf32>
    %223 = arith.truncf %222 : vector<16x64xf32> to vector<16x64xbf16>
    %c0_97 = arith.constant 0 : index
    %c64_98 = arith.constant 64 : index
    %c0_99 = arith.constant 0 : index
    %224 = vector.load %arg8[%c0_97, %c64_98, %c0_99] : memref<1x384x128xbf16, #tpu.memory_space<vmem>>, vector<1x64x128xbf16>
    %225 = vector.shape_cast %224 : vector<1x64x128xbf16> to vector<64x128xbf16>
    %cst_100 = arith.constant dense<0.000000e+00> : vector<16x128xf32>
    %226 = tpu.matmul %223, %225, %cst_100 {dimension_numbers = #tpu.dot_dimension_numbers<[1], [0], [0], [1], [0, 0, 1, 1], [], []>} : vector<16x64xbf16>, vector<64x128xbf16>, vector<16x128xf32> -> vector<16x128xf32>
    %227 = arith.addf %202, %226 : vector<16x128xf32>
    %228 = vector.extract_strided_slice %22 {offsets = [16, 128], sizes = [16, 64], strides = [1, 1]} : vector<32x1152xbf16> to vector<16x64xbf16>
    %229 = vector.extract_strided_slice %22 {offsets = [16, 512], sizes = [16, 64], strides = [1, 1]} : vector<32x1152xbf16> to vector<16x64xbf16>
    %230 = vector.extract_strided_slice %22 {offsets = [16, 896], sizes = [16, 64], strides = [1, 1]} : vector<32x1152xbf16> to vector<16x64xbf16>
    %cst_101 = arith.constant dense<0.000000e+00> : vector<16x16xf32>
    %231 = tpu.matmul %228, %229, %cst_101 {dimension_numbers = #tpu.dot_dimension_numbers<[1], [1], [0], [0], [0, 0, 1, 0], [], []>} : vector<16x64xbf16>, vector<16x64xbf16>, vector<16x16xf32> -> vector<16x16xf32>
    %cst_102 = arith.constant 1.250000e-01 : f32
    %232 = vector.broadcast %cst_102 : f32 to vector<16x16xf32>
    %233 = arith.mulf %231, %232 : vector<16x16xf32>
    %c2_103 = arith.constant 2 : index
    %c0_104 = arith.constant 0 : index
    %c0_105 = arith.constant 0 : index
    %234 = vector.load %arg5[%c2_103, %c0_104, %c0_105] : memref<6x16x16xf32, #tpu.memory_space<vmem>>, vector<1x16x16xf32>
    %235 = vector.shape_cast %234 : vector<1x16x16xf32> to vector<16x16xf32>
    %236 = arith.addf %233, %235 : vector<16x16xf32>
    %cst_106 = arith.constant dense<0xFF800000> : vector<16xf32>
    %237 = vector.multi_reduction <maximumf>, %236, %cst_106 [1] : vector<16x16xf32> to vector<16xf32>
    %238 = vector.shape_cast %237 : vector<16xf32> to vector<16x1xf32>
    %239 = vector.broadcast %238 : vector<16x1xf32> to vector<16x16xf32>
    %240 = arith.subf %236, %239 : vector<16x16xf32>
    %241 = math.exp %240 : vector<16x16xf32>
    %cst_107 = arith.constant dense<0.000000e+00> : vector<16xf32>
    %242 = vector.multi_reduction <add>, %241, %cst_107 [1] : vector<16x16xf32> to vector<16xf32>
    %243 = vector.shape_cast %242 : vector<16xf32> to vector<16x1xf32>
    %244 = vector.broadcast %243 : vector<16x1xf32> to vector<16x16xf32>
    %245 = arith.divf %241, %244 : vector<16x16xf32>
    %246 = arith.truncf %245 : vector<16x16xf32> to vector<16x16xbf16>
    %cst_108 = arith.constant dense<0.000000e+00> : vector<16x64xf32>
    %247 = tpu.matmul %246, %230, %cst_108 {dimension_numbers = #tpu.dot_dimension_numbers<[1], [0], [0], [1], [0, 0, 1, 1], [], []>} : vector<16x16xbf16>, vector<16x64xbf16>, vector<16x64xf32> -> vector<16x64xf32>
    %248 = arith.truncf %247 : vector<16x64xf32> to vector<16x64xbf16>
    %c0_109 = arith.constant 0 : index
    %c128_110 = arith.constant 128 : index
    %c0_111 = arith.constant 0 : index
    %249 = vector.load %arg8[%c0_109, %c128_110, %c0_111] : memref<1x384x128xbf16, #tpu.memory_space<vmem>>, vector<1x64x128xbf16>
    %250 = vector.shape_cast %249 : vector<1x64x128xbf16> to vector<64x128xbf16>
    %cst_112 = arith.constant dense<0.000000e+00> : vector<16x128xf32>
    %251 = tpu.matmul %248, %250, %cst_112 {dimension_numbers = #tpu.dot_dimension_numbers<[1], [0], [0], [1], [0, 0, 1, 1], [], []>} : vector<16x64xbf16>, vector<64x128xbf16>, vector<16x128xf32> -> vector<16x128xf32>
    %252 = arith.addf %227, %251 : vector<16x128xf32>
    %253 = vector.extract_strided_slice %22 {offsets = [16, 192], sizes = [16, 64], strides = [1, 1]} : vector<32x1152xbf16> to vector<16x64xbf16>
    %254 = vector.extract_strided_slice %22 {offsets = [16, 576], sizes = [16, 64], strides = [1, 1]} : vector<32x1152xbf16> to vector<16x64xbf16>
    %255 = vector.extract_strided_slice %22 {offsets = [16, 960], sizes = [16, 64], strides = [1, 1]} : vector<32x1152xbf16> to vector<16x64xbf16>
    %cst_113 = arith.constant dense<0.000000e+00> : vector<16x16xf32>
    %256 = tpu.matmul %253, %254, %cst_113 {dimension_numbers = #tpu.dot_dimension_numbers<[1], [1], [0], [0], [0, 0, 1, 0], [], []>} : vector<16x64xbf16>, vector<16x64xbf16>, vector<16x16xf32> -> vector<16x16xf32>
    %cst_114 = arith.constant 1.250000e-01 : f32
    %257 = vector.broadcast %cst_114 : f32 to vector<16x16xf32>
    %258 = arith.mulf %256, %257 : vector<16x16xf32>
    %c3_115 = arith.constant 3 : index
    %c0_116 = arith.constant 0 : index
    %c0_117 = arith.constant 0 : index
    %259 = vector.load %arg5[%c3_115, %c0_116, %c0_117] : memref<6x16x16xf32, #tpu.memory_space<vmem>>, vector<1x16x16xf32>
    %260 = vector.shape_cast %259 : vector<1x16x16xf32> to vector<16x16xf32>
    %261 = arith.addf %258, %260 : vector<16x16xf32>
    %cst_118 = arith.constant dense<0xFF800000> : vector<16xf32>
    %262 = vector.multi_reduction <maximumf>, %261, %cst_118 [1] : vector<16x16xf32> to vector<16xf32>
    %263 = vector.shape_cast %262 : vector<16xf32> to vector<16x1xf32>
    %264 = vector.broadcast %263 : vector<16x1xf32> to vector<16x16xf32>
    %265 = arith.subf %261, %264 : vector<16x16xf32>
    %266 = math.exp %265 : vector<16x16xf32>
    %cst_119 = arith.constant dense<0.000000e+00> : vector<16xf32>
    %267 = vector.multi_reduction <add>, %266, %cst_119 [1] : vector<16x16xf32> to vector<16xf32>
    %268 = vector.shape_cast %267 : vector<16xf32> to vector<16x1xf32>
    %269 = vector.broadcast %268 : vector<16x1xf32> to vector<16x16xf32>
    %270 = arith.divf %266, %269 : vector<16x16xf32>
    %271 = arith.truncf %270 : vector<16x16xf32> to vector<16x16xbf16>
    %cst_120 = arith.constant dense<0.000000e+00> : vector<16x64xf32>
    %272 = tpu.matmul %271, %255, %cst_120 {dimension_numbers = #tpu.dot_dimension_numbers<[1], [0], [0], [1], [0, 0, 1, 1], [], []>} : vector<16x16xbf16>, vector<16x64xbf16>, vector<16x64xf32> -> vector<16x64xf32>
    %273 = arith.truncf %272 : vector<16x64xf32> to vector<16x64xbf16>
    %c0_121 = arith.constant 0 : index
    %c192_122 = arith.constant 192 : index
    %c0_123 = arith.constant 0 : index
    %274 = vector.load %arg8[%c0_121, %c192_122, %c0_123] : memref<1x384x128xbf16, #tpu.memory_space<vmem>>, vector<1x64x128xbf16>
    %275 = vector.shape_cast %274 : vector<1x64x128xbf16> to vector<64x128xbf16>
    %cst_124 = arith.constant dense<0.000000e+00> : vector<16x128xf32>
    %276 = tpu.matmul %273, %275, %cst_124 {dimension_numbers = #tpu.dot_dimension_numbers<[1], [0], [0], [1], [0, 0, 1, 1], [], []>} : vector<16x64xbf16>, vector<64x128xbf16>, vector<16x128xf32> -> vector<16x128xf32>
    %277 = arith.addf %252, %276 : vector<16x128xf32>
    %278 = vector.extract_strided_slice %22 {offsets = [16, 256], sizes = [16, 64], strides = [1, 1]} : vector<32x1152xbf16> to vector<16x64xbf16>
    %279 = vector.extract_strided_slice %22 {offsets = [16, 640], sizes = [16, 64], strides = [1, 1]} : vector<32x1152xbf16> to vector<16x64xbf16>
    %280 = vector.extract_strided_slice %22 {offsets = [16, 1024], sizes = [16, 64], strides = [1, 1]} : vector<32x1152xbf16> to vector<16x64xbf16>
    %cst_125 = arith.constant dense<0.000000e+00> : vector<16x16xf32>
    %281 = tpu.matmul %278, %279, %cst_125 {dimension_numbers = #tpu.dot_dimension_numbers<[1], [1], [0], [0], [0, 0, 1, 0], [], []>} : vector<16x64xbf16>, vector<16x64xbf16>, vector<16x16xf32> -> vector<16x16xf32>
    %cst_126 = arith.constant 1.250000e-01 : f32
    %282 = vector.broadcast %cst_126 : f32 to vector<16x16xf32>
    %283 = arith.mulf %281, %282 : vector<16x16xf32>
    %c4_127 = arith.constant 4 : index
    %c0_128 = arith.constant 0 : index
    %c0_129 = arith.constant 0 : index
    %284 = vector.load %arg5[%c4_127, %c0_128, %c0_129] : memref<6x16x16xf32, #tpu.memory_space<vmem>>, vector<1x16x16xf32>
    %285 = vector.shape_cast %284 : vector<1x16x16xf32> to vector<16x16xf32>
    %286 = arith.addf %283, %285 : vector<16x16xf32>
    %cst_130 = arith.constant dense<0xFF800000> : vector<16xf32>
    %287 = vector.multi_reduction <maximumf>, %286, %cst_130 [1] : vector<16x16xf32> to vector<16xf32>
    %288 = vector.shape_cast %287 : vector<16xf32> to vector<16x1xf32>
    %289 = vector.broadcast %288 : vector<16x1xf32> to vector<16x16xf32>
    %290 = arith.subf %286, %289 : vector<16x16xf32>
    %291 = math.exp %290 : vector<16x16xf32>
    %cst_131 = arith.constant dense<0.000000e+00> : vector<16xf32>
    %292 = vector.multi_reduction <add>, %291, %cst_131 [1] : vector<16x16xf32> to vector<16xf32>
    %293 = vector.shape_cast %292 : vector<16xf32> to vector<16x1xf32>
    %294 = vector.broadcast %293 : vector<16x1xf32> to vector<16x16xf32>
    %295 = arith.divf %291, %294 : vector<16x16xf32>
    %296 = arith.truncf %295 : vector<16x16xf32> to vector<16x16xbf16>
    %cst_132 = arith.constant dense<0.000000e+00> : vector<16x64xf32>
    %297 = tpu.matmul %296, %280, %cst_132 {dimension_numbers = #tpu.dot_dimension_numbers<[1], [0], [0], [1], [0, 0, 1, 1], [], []>} : vector<16x16xbf16>, vector<16x64xbf16>, vector<16x64xf32> -> vector<16x64xf32>
    %298 = arith.truncf %297 : vector<16x64xf32> to vector<16x64xbf16>
    %c0_133 = arith.constant 0 : index
    %c256_134 = arith.constant 256 : index
    %c0_135 = arith.constant 0 : index
    %299 = vector.load %arg8[%c0_133, %c256_134, %c0_135] : memref<1x384x128xbf16, #tpu.memory_space<vmem>>, vector<1x64x128xbf16>
    %300 = vector.shape_cast %299 : vector<1x64x128xbf16> to vector<64x128xbf16>
    %cst_136 = arith.constant dense<0.000000e+00> : vector<16x128xf32>
    %301 = tpu.matmul %298, %300, %cst_136 {dimension_numbers = #tpu.dot_dimension_numbers<[1], [0], [0], [1], [0, 0, 1, 1], [], []>} : vector<16x64xbf16>, vector<64x128xbf16>, vector<16x128xf32> -> vector<16x128xf32>
    %302 = arith.addf %277, %301 : vector<16x128xf32>
    %303 = vector.extract_strided_slice %22 {offsets = [16, 320], sizes = [16, 64], strides = [1, 1]} : vector<32x1152xbf16> to vector<16x64xbf16>
    %304 = vector.extract_strided_slice %22 {offsets = [16, 704], sizes = [16, 64], strides = [1, 1]} : vector<32x1152xbf16> to vector<16x64xbf16>
    %305 = vector.extract_strided_slice %22 {offsets = [16, 1088], sizes = [16, 64], strides = [1, 1]} : vector<32x1152xbf16> to vector<16x64xbf16>
    %cst_137 = arith.constant dense<0.000000e+00> : vector<16x16xf32>
    %306 = tpu.matmul %303, %304, %cst_137 {dimension_numbers = #tpu.dot_dimension_numbers<[1], [1], [0], [0], [0, 0, 1, 0], [], []>} : vector<16x64xbf16>, vector<16x64xbf16>, vector<16x16xf32> -> vector<16x16xf32>
    %cst_138 = arith.constant 1.250000e-01 : f32
    %307 = vector.broadcast %cst_138 : f32 to vector<16x16xf32>
    %308 = arith.mulf %306, %307 : vector<16x16xf32>
    %c5_139 = arith.constant 5 : index
    %c0_140 = arith.constant 0 : index
    %c0_141 = arith.constant 0 : index
    %309 = vector.load %arg5[%c5_139, %c0_140, %c0_141] : memref<6x16x16xf32, #tpu.memory_space<vmem>>, vector<1x16x16xf32>
    %310 = vector.shape_cast %309 : vector<1x16x16xf32> to vector<16x16xf32>
    %311 = arith.addf %308, %310 : vector<16x16xf32>
    %cst_142 = arith.constant dense<0xFF800000> : vector<16xf32>
    %312 = vector.multi_reduction <maximumf>, %311, %cst_142 [1] : vector<16x16xf32> to vector<16xf32>
    %313 = vector.shape_cast %312 : vector<16xf32> to vector<16x1xf32>
    %314 = vector.broadcast %313 : vector<16x1xf32> to vector<16x16xf32>
    %315 = arith.subf %311, %314 : vector<16x16xf32>
    %316 = math.exp %315 : vector<16x16xf32>
    %cst_143 = arith.constant dense<0.000000e+00> : vector<16xf32>
    %317 = vector.multi_reduction <add>, %316, %cst_143 [1] : vector<16x16xf32> to vector<16xf32>
    %318 = vector.shape_cast %317 : vector<16xf32> to vector<16x1xf32>
    %319 = vector.broadcast %318 : vector<16x1xf32> to vector<16x16xf32>
    %320 = arith.divf %316, %319 : vector<16x16xf32>
    %321 = arith.truncf %320 : vector<16x16xf32> to vector<16x16xbf16>
    %cst_144 = arith.constant dense<0.000000e+00> : vector<16x64xf32>
    %322 = tpu.matmul %321, %305, %cst_144 {dimension_numbers = #tpu.dot_dimension_numbers<[1], [0], [0], [1], [0, 0, 1, 1], [], []>} : vector<16x16xbf16>, vector<16x64xbf16>, vector<16x64xf32> -> vector<16x64xf32>
    %323 = arith.truncf %322 : vector<16x64xf32> to vector<16x64xbf16>
    %c0_145 = arith.constant 0 : index
    %c320_146 = arith.constant 320 : index
    %c0_147 = arith.constant 0 : index
    %324 = vector.load %arg8[%c0_145, %c320_146, %c0_147] : memref<1x384x128xbf16, #tpu.memory_space<vmem>>, vector<1x64x128xbf16>
    %325 = vector.shape_cast %324 : vector<1x64x128xbf16> to vector<64x128xbf16>
    %cst_148 = arith.constant dense<0.000000e+00> : vector<16x128xf32>
    %326 = tpu.matmul %323, %325, %cst_148 {dimension_numbers = #tpu.dot_dimension_numbers<[1], [0], [0], [1], [0, 0, 1, 1], [], []>} : vector<16x64xbf16>, vector<64x128xbf16>, vector<16x128xf32> -> vector<16x128xf32>
    %327 = arith.addf %302, %326 : vector<16x128xf32>
    %328 = vector.extract_strided_slice %3 {offsets = [16, 0], sizes = [16, 128], strides = [1, 1]} : vector<32x128xf32> to vector<16x128xf32>
    %329 = arith.addf %328, %327 : vector<16x128xf32>
    %c16 = arith.constant 16 : index
    %c0_149 = arith.constant 0 : index
    %330 = vector.load %arg16[%c16, %c0_149] : memref<32x128xf32, #tpu.memory_space<vmem>>, vector<16x128xf32>
    tpu.vector_store %arg16[%c16, %c0_149], %329 {strides = array<i32>} : memref<32x128xf32, #tpu.memory_space<vmem>>, vector<16x128xf32>,
    %c0_150 = arith.constant 0 : index
    %c0_151 = arith.constant 0 : index
    %331 = vector.load %arg16[%c0_150, %c0_151] : memref<32x128xf32, #tpu.memory_space<vmem>>, vector<32x128xf32>
    %c0_152 = arith.constant 0 : index
    %c0_153 = arith.constant 0 : index
    %c0_154 = arith.constant 0 : index
    %332 = vector.load %arg9[%c0_152, %c0_153, %c0_154] : memref<1x1x128xf32, #tpu.memory_space<vmem>>, vector<1x1x128xf32>
    %333 = vector.shape_cast %332 : vector<1x1x128xf32> to vector<1x128xf32>
    %334 = arith.mulf %331, %331 : vector<32x128xf32>
    %cst_155 = arith.constant dense<0.000000e+00> : vector<32xf32>
    %335 = vector.multi_reduction <add>, %334, %cst_155 [1] : vector<32x128xf32> to vector<32xf32>
    %336 = vector.shape_cast %335 : vector<32xf32> to vector<32x1xf32>
    %337 = math.sqrt %336 : vector<32x1xf32>
    %cst_156 = arith.constant 9.99999996E-13 : f32
    %338 = vector.broadcast %cst_156 : f32 to vector<32x1xf32>
    %339 = arith.maximumf %337, %338 : vector<32x1xf32>
    %340 = vector.broadcast %339 : vector<32x1xf32> to vector<32x128xf32>
    %341 = arith.divf %331, %340 : vector<32x128xf32>
    %cst_157 = arith.constant 11.3137083 : f32
    %342 = vector.broadcast %cst_157 : f32 to vector<32x128xf32>
    %343 = arith.mulf %341, %342 : vector<32x128xf32>
    %344 = vector.broadcast %333 : vector<1x128xf32> to vector<32x128xf32>
    %345 = arith.mulf %343, %344 : vector<32x128xf32>
    %346 = arith.truncf %345 : vector<32x128xf32> to vector<32x128xbf16>
    %c0_158 = arith.constant 0 : index
    %c0_159 = arith.constant 0 : index
    %c0_160 = arith.constant 0 : index
    %347 = vector.load %arg10[%c0_158, %c0_159, %c0_160] : memref<1x128x1024xbf16, #tpu.memory_space<vmem>>, vector<1x128x1024xbf16>
    %348 = vector.shape_cast %347 : vector<1x128x1024xbf16> to vector<128x1024xbf16>
    %cst_161 = arith.constant dense<0.000000e+00> : vector<32x1024xf32>
    %349 = tpu.matmul %346, %348, %cst_161 {dimension_numbers = #tpu.dot_dimension_numbers<[1], [0], [0], [1], [0, 0, 1, 1], [], []>} : vector<32x128xbf16>, vector<128x1024xbf16>, vector<32x1024xf32> -> vector<32x1024xf32>
    %c0_162 = arith.constant 0 : index
    %c0_163 = arith.constant 0 : index
    %c0_164 = arith.constant 0 : index
    %350 = vector.load %arg11[%c0_162, %c0_163, %c0_164] : memref<1x1x1024xf32, #tpu.memory_space<vmem>>, vector<1x1x1024xf32>
    %351 = vector.shape_cast %350 : vector<1x1x1024xf32> to vector<1x1024xf32>
    %352 = vector.broadcast %351 : vector<1x1024xf32> to vector<32x1024xf32>
    %353 = arith.addf %349, %352 : vector<32x1024xf32>
    %354 = vector.extract_strided_slice %353 {offsets = [0, 0], sizes = [32, 512], strides = [1, 1]} : vector<32x1024xf32> to vector<32x512xf32>
    %355 = vector.extract_strided_slice %353 {offsets = [0, 512], sizes = [32, 512], strides = [1, 1]} : vector<32x1024xf32> to vector<32x512xf32>
    %356 = arith.mulf %355, %355 : vector<32x512xf32>
    %357 = arith.mulf %355, %356 : vector<32x512xf32>
    %cst_165 = arith.constant 4.471500e-02 : f32
    %358 = vector.broadcast %cst_165 : f32 to vector<32x512xf32>
    %359 = arith.mulf %358, %357 : vector<32x512xf32>
    %360 = arith.addf %355, %359 : vector<32x512xf32>
    %cst_166 = arith.constant 0.797884583 : f32
    %361 = vector.broadcast %cst_166 : f32 to vector<32x512xf32>
    %362 = arith.mulf %361, %360 : vector<32x512xf32>
    %363 = math.tanh %362 : vector<32x512xf32>
    %cst_167 = arith.constant 1.000000e+00 : f32
    %364 = vector.broadcast %cst_167 : f32 to vector<32x512xf32>
    %365 = arith.addf %364, %363 : vector<32x512xf32>
    %cst_168 = arith.constant 5.000000e-01 : f32
    %366 = vector.broadcast %cst_168 : f32 to vector<32x512xf32>
    %367 = arith.mulf %366, %365 : vector<32x512xf32>
    %368 = arith.mulf %355, %367 : vector<32x512xf32>
    %369 = arith.mulf %354, %368 : vector<32x512xf32>
    %370 = arith.truncf %369 : vector<32x512xf32> to vector<32x512xbf16>
    %c0_169 = arith.constant 0 : index
    %c0_170 = arith.constant 0 : index
    %c0_171 = arith.constant 0 : index
    %371 = vector.load %arg12[%c0_169, %c0_170, %c0_171] : memref<1x512x128xbf16, #tpu.memory_space<vmem>>, vector<1x512x128xbf16>
    %372 = vector.shape_cast %371 : vector<1x512x128xbf16> to vector<512x128xbf16>
    %cst_172 = arith.constant dense<0.000000e+00> : vector<32x128xf32>
    %373 = tpu.matmul %370, %372, %cst_172 {dimension_numbers = #tpu.dot_dimension_numbers<[1], [0], [0], [1], [0, 0, 1, 1], [], []>} : vector<32x512xbf16>, vector<512x128xbf16>, vector<32x128xf32> -> vector<32x128xf32>
    %c0_173 = arith.constant 0 : index
    %c0_174 = arith.constant 0 : index
    %c0_175 = arith.constant 0 : index
    %374 = vector.load %arg13[%c0_173, %c0_174, %c0_175] : memref<1x1x128xf32, #tpu.memory_space<vmem>>, vector<1x1x128xf32>
    %375 = vector.shape_cast %374 : vector<1x1x128xf32> to vector<1x128xf32>
    %376 = vector.broadcast %375 : vector<1x128xf32> to vector<32x128xf32>
    %377 = arith.addf %373, %376 : vector<32x128xf32>
    %378 = arith.addf %331, %377 : vector<32x128xf32>
    %c0_176 = arith.constant 0 : index
    %c0_177 = arith.constant 0 : index
    %379 = vector.load %arg16[%c0_176, %c0_177] : memref<32x128xf32, #tpu.memory_space<vmem>>, vector<32x128xf32>
    tpu.vector_store %arg16[%c0_176, %c0_177], %378 {strides = array<i32>} : memref<32x128xf32, #tpu.memory_space<vmem>>, vector<32x128xf32>,
    %c1_i32 = arith.constant 1 : i32
    %380 = arith.cmpi eq, %arg0, %c1_i32 : i32
    %381 = arith.extui %380 : i1 to i32
    %c0_i32_178 = arith.constant 0 : i32
    %382 = arith.cmpi ne, %381, %c0_i32_178 : i32
    scf.if %382 {
      %c0_179 = arith.constant 0 : index
      %c0_180 = arith.constant 0 : index
      %383 = vector.load %arg16[%c0_179, %c0_180] : memref<32x128xf32, #tpu.memory_space<vmem>>, vector<32x128xf32>
      %c0_181 = arith.constant 0 : index
      %c0_182 = arith.constant 0 : index
      %384 = vector.load %arg14[%c0_181, %c0_182] : memref<1x128xf32, #tpu.memory_space<vmem>>, vector<1x128xf32>
      %385 = arith.mulf %383, %383 : vector<32x128xf32>
      %cst_183 = arith.constant dense<0.000000e+00> : vector<32xf32>
      %386 = vector.multi_reduction <add>, %385, %cst_183 [1] : vector<32x128xf32> to vector<32xf32>
      %387 = vector.shape_cast %386 : vector<32xf32> to vector<32x1xf32>
      %388 = math.sqrt %387 : vector<32x1xf32>
      %cst_184 = arith.constant 9.99999996E-13 : f32
      %389 = vector.broadcast %cst_184 : f32 to vector<32x1xf32>
      %390 = arith.maximumf %388, %389 : vector<32x1xf32>
      %391 = vector.broadcast %390 : vector<32x1xf32> to vector<32x128xf32>
      %392 = arith.divf %383, %391 : vector<32x128xf32>
      %cst_185 = arith.constant 11.3137083 : f32
      %393 = vector.broadcast %cst_185 : f32 to vector<32x128xf32>
      %394 = arith.mulf %392, %393 : vector<32x128xf32>
      %395 = vector.broadcast %384 : vector<1x128xf32> to vector<32x128xf32>
      %396 = arith.mulf %394, %395 : vector<32x128xf32>
      %c0_186 = arith.constant 0 : index
      %c0_187 = arith.constant 0 : index
      %397 = vector.load %arg15[%c0_186, %c0_187] : memref<32x128xf32, #tpu.memory_space<vmem>>, vector<32x128xf32>
      tpu.vector_store %arg15[%c0_186, %c0_187], %396 {strides = array<i32>} : memref<32x128xf32, #tpu.memory_space<vmem>>, vector<32x128xf32>,
    } else {
    }
    return
  }
  func.func @transform_0(%arg0: i32) -> (i32, i32, i32) {
    %c0_i32 = arith.constant 0 : i32
    %c0_i32_0 = arith.constant 0 : i32
    %c0_i32_1 = arith.constant 0 : i32
    %c0_i32_2 = arith.constant 0 : i32
    return %c0_i32, %c0_i32_0, %c0_i32_1 : i32, i32, i32
  }
  func.func @transform_1(%arg0: i32) -> (i32, i32) {
    %c0_i32 = arith.constant 0 : i32
    %c0_i32_0 = arith.constant 0 : i32
    %c0_i32_1 = arith.constant 0 : i32
    return %c0_i32, %c0_i32_0 : i32, i32
  }
  func.func @transform_2(%arg0: i32) -> (i32, i32) {
    %c0_i32 = arith.constant 0 : i32
    %c0_i32_0 = arith.constant 0 : i32
    %c0_i32_1 = arith.constant 0 : i32
    return %c0_i32, %c0_i32_0 : i32, i32
  }
  func.func @transform_3(%arg0: i32) -> (i32, i32) {
    %c0_i32 = arith.constant 0 : i32
    %c0_i32_0 = arith.constant 0 : i32
    %c0_i32_1 = arith.constant 0 : i32
    return %c0_i32, %c0_i32_0 : i32, i32
  }
  func.func @transform_4(%arg0: i32) -> (i32, i32, i32) {
    %c0_i32 = arith.constant 0 : i32
    %c0_i32_0 = arith.constant 0 : i32
    %c0_i32_1 = arith.constant 0 : i32
    %c0_i32_2 = arith.constant 0 : i32
    return %c0_i32, %c0_i32_0, %c0_i32_1 : i32, i32, i32
  }
  func.func @transform_5(%arg0: i32) -> (i32, i32, i32) {
    %c0_i32 = arith.constant 0 : i32
    %c0_i32_0 = arith.constant 0 : i32
    %c0_i32_1 = arith.constant 0 : i32
    return %arg0, %c0_i32, %c0_i32_0 : i32, i32, i32
  }
  func.func @transform_6(%arg0: i32) -> (i32, i32, i32) {
    %c0_i32 = arith.constant 0 : i32
    %c0_i32_0 = arith.constant 0 : i32
    %c0_i32_1 = arith.constant 0 : i32
    return %arg0, %c0_i32, %c0_i32_0 : i32, i32, i32
  }
  func.func @transform_7(%arg0: i32) -> (i32, i32, i32) {
    %c0_i32 = arith.constant 0 : i32
    %c0_i32_0 = arith.constant 0 : i32
    %c0_i32_1 = arith.constant 0 : i32
    return %arg0, %c0_i32, %c0_i32_0 : i32, i32, i32
  }
  func.func @transform_8(%arg0: i32) -> (i32, i32, i32) {
    %c0_i32 = arith.constant 0 : i32
    %c0_i32_0 = arith.constant 0 : i32
    %c0_i32_1 = arith.constant 0 : i32
    return %arg0, %c0_i32, %c0_i32_0 : i32, i32, i32
  }
  func.func @transform_9(%arg0: i32) -> (i32, i32, i32) {
    %c0_i32 = arith.constant 0 : i32
    %c0_i32_0 = arith.constant 0 : i32
    %c0_i32_1 = arith.constant 0 : i32
    return %arg0, %c0_i32, %c0_i32_0 : i32, i32, i32
  }
  func.func @transform_10(%arg0: i32) -> (i32, i32, i32) {
    %c0_i32 = arith.constant 0 : i32
    %c0_i32_0 = arith.constant 0 : i32
    %c0_i32_1 = arith.constant 0 : i32
    return %arg0, %c0_i32, %c0_i32_0 : i32, i32, i32
  }
  func.func @transform_11(%arg0: i32) -> (i32, i32, i32) {
    %c0_i32 = arith.constant 0 : i32
    %c0_i32_0 = arith.constant 0 : i32
    %c0_i32_1 = arith.constant 0 : i32
    return %arg0, %c0_i32, %c0_i32_0 : i32, i32, i32
  }
  func.func @transform_12(%arg0: i32) -> (i32, i32, i32) {
    %c0_i32 = arith.constant 0 : i32
    %c0_i32_0 = arith.constant 0 : i32
    %c0_i32_1 = arith.constant 0 : i32
    return %arg0, %c0_i32, %c0_i32_0 : i32, i32, i32
  }
  func.func @transform_13(%arg0: i32) -> (i32, i32) {
    %c0_i32 = arith.constant 0 : i32
    %c0_i32_0 = arith.constant 0 : i32
    %c0_i32_1 = arith.constant 0 : i32
    return %c0_i32, %c0_i32_0 : i32, i32
  }
  func.func @transform_14(%arg0: i32) -> (i32, i32) {
    %c0_i32 = arith.constant 0 : i32
    %c0_i32_0 = arith.constant 0 : i32
    %c0_i32_1 = arith.constant 0 : i32
    return %c0_i32, %c0_i32_0 : i32, i32
  }
}

</mosaic_0001>

<llo_original>
// kernel: forward.3
$region0: #{forward.3}
  #allocation0 [shape = 'u32[]', space=smem, size = 0x4, offset = 0x4, fixed_abs, tag = 'smem constant byte address 0x4 - core index']
  #allocation1 [shape = 'u32[72,128]{1,0:T(1,128)}', space=vmem, size = 0x9000, scoped, tag = 'internal scratch']
  %s0 = inlined_call_operand.vmem [shape: f32[2,2048], index: 0, kind: input, shape index: {}]
  %s1 = inlined_call_operand.vmem [shape: f32[2048,8], index: 1, kind: input, shape index: {}]
  %s2 = inlined_call_operand.vmem [shape: f32[1,8], index: 2, kind: input, shape index: {}]
  %s3 = inlined_call_operand.hbm [shape: f32[2,8], index: 3, kind: output, shape index: {}]
  %s4 = sld [smem:[#allocation0]]
  $region22: #{forward.3} parent=0
    _
  %s6 = ssub.s32 1, %s4
  %s7 = scalar_select 0, %s6, %s4
  $region1: #{forward.3} parent=0
    #allocation2 [shape = 'u8[1024]{0}', space=vmem, size = 0x400, scoped, tag = 'output window, operand 0, single buffered']
    #allocation3 [shape = 's32[1]{0}', space=sflag, size = 0x4, scoped, tag = 'scoped memory for forward.3']
    %8 = vsyncpa [#allocation3], 0
    // Predicated region
    $region2: #{forward.3} parent=1 // pred_check
      _
    $region3: #{forward.3} parent=1 // pred_check_branch
      %10 = sbr.rel (0) target = $region5
    $region4: #{forward.3} parent=1 // pred_region
      _
    $region5: #{forward.3} parent=1 // pred_fallthru
      _
    // Predicated region
    $region6: #{forward.3} parent=1 // pred_check
      _
    $region7: #{forward.3} parent=1 // pred_check_branch
      %12 = sbr.rel (0) target = $region9
    $region8: #{forward.3} parent=1 // pred_region
      _
    $region9: #{forward.3} parent=1 // pred_fallthru
      _
    // Predicated region
    $region10: #{forward.3} parent=1 // pred_check
      _
    $region11: #{forward.3} parent=1 // pred_check_branch
      %14 = sbr.rel (0) target = $region13
    $region12: #{forward.3} parent=1 // pred_region
      _
    $region13: #{forward.3} parent=1 // pred_fallthru
      _
    %v15 = vld [vmem:[%s0] sm:$0xff]
    %v16 = vld [vmem:[%s0 + $0x8] sm:$0xff]
    %v17 = vld [vmem:[%s0 + $0x10] sm:$0xff]
    %v18 = vld [vmem:[%s0 + $0x18] sm:$0xff]
    %v19 = vld [vmem:[%s1] sm:$0xff]
    %v20 = vld [vmem:[%s1 + $0x8] sm:$0xff]
    %v21 = vld [vmem:[%s1 + $0x10] sm:$0xff]
    %v22 = vld [vmem:[%s1 + $0x18] sm:$0xff]
    %v23 = vld [vmem:[%s1 + $0x20] sm:$0xff]
    %v24 = vld [vmem:[%s1 + $0x28] sm:$0xff]
    %v25 = vld [vmem:[%s1 + $0x30] sm:$0xff]
    %v26 = vld [vmem:[%s1 + $0x38] sm:$0xff]
    %v27 = vld [vmem:[%s1 + $0x40] sm:$0xff]
    %v28 = vld [vmem:[%s1 + $0x48] sm:$0xff]
    %v29 = vld [vmem:[%s1 + $0x50] sm:$0xff]
    %v30 = vld [vmem:[%s1 + $0x58] sm:$0xff]
    %v31 = vld [vmem:[%s1 + $0x60] sm:$0xff]
    %v32 = vld [vmem:[%s1 + $0x68] sm:$0xff]
    %v33 = vld [vmem:[%s1 + $0x70] sm:$0xff]
    %v34 = vld [vmem:[%s1 + $0x78] sm:$0xff]
    %v35 = vld [vmem:[%s1 + $0x80] sm:$0xff]
    %v36 = vld [vmem:[%s1 + $0x88] sm:$0xff]
    %v37 = vld [vmem:[%s1 + $0x90] sm:$0xff]
    %v38 = vld [vmem:[%s1 + $0x98] sm:$0xff]
    %v39 = vld [vmem:[%s1 + $0xa0] sm:$0xff]
    %v40 = vld [vmem:[%s1 + $0xa8] sm:$0xff]
    %v41 = vld [vmem:[%s1 + $0xb0] sm:$0xff]
    %v42 = vld [vmem:[%s1 + $0xb8] sm:$0xff]
    %v43 = vld [vmem:[%s1 + $0xc0] sm:$0xff]
    %v44 = vld [vmem:[%s1 + $0xc8] sm:$0xff]
    %v45 = vld [vmem:[%s1 + $0xd0] sm:$0xff]
    %v46 = vld [vmem:[%s1 + $0xd8] sm:$0xff]
    %v47 = vld [vmem:[%s1 + $0xe0] sm:$0xff]
    %v48 = vld [vmem:[%s1 + $0xe8] sm:$0xff]
    %v49 = vld [vmem:[%s1 + $0xf0] sm:$0xff]
    %v50 = vld [vmem:[%s1 + $0xf8] sm:$0xff]
    %v51 = vld [vmem:[%s1 + $0x100] sm:$0xff]
    %v52 = vld [vmem:[%s1 + $0x108] sm:$0xff]
    %v53 = vld [vmem:[%s1 + $0x110] sm:$0xff]
    %v54 = vld [vmem:[%s1 + $0x118] sm:$0xff]
    %v55 = vld [vmem:[%s1 + $0x120] sm:$0xff]
    %v56 = vld [vmem:[%s1 + $0x128] sm:$0xff]
    %v57 = vld [vmem:[%s1 + $0x130] sm:$0xff]
    %v58 = vld [vmem:[%s1 + $0x138] sm:$0xff]
    %v59 = vld [vmem:[%s1 + $0x140] sm:$0xff]
    %v60 = vld [vmem:[%s1 + $0x148] sm:$0xff]
    %v61 = vld [vmem:[%s1 + $0x150] sm:$0xff]
    %v62 = vld [vmem:[%s1 + $0x158] sm:$0xff]
    %v63 = vld [vmem:[%s1 + $0x160] sm:$0xff]
    %v64 = vld [vmem:[%s1 + $0x168] sm:$0xff]
    %v65 = vld [vmem:[%s1 + $0x170] sm:$0xff]
    %v66 = vld [vmem:[%s1 + $0x178] sm:$0xff]
    %v67 = vld [vmem:[%s1 + $0x180] sm:$0xff]
    %v68 = vld [vmem:[%s1 + $0x188] sm:$0xff]
    %v69 = vld [vmem:[%s1 + $0x190] sm:$0xff]
    %v70 = vld [vmem:[%s1 + $0x198] sm:$0xff]
    %v71 = vld [vmem:[%s1 + $0x1a0] sm:$0xff]
    %v72 = vld [vmem:[%s1 + $0x1a8] sm:$0xff]
    %v73 = vld [vmem:[%s1 + $0x1b0] sm:$0xff]
    %v74 = vld [vmem:[%s1 + $0x1b8] sm:$0xff]
    %v75 = vld [vmem:[%s1 + $0x1c0] sm:$0xff]
    %v76 = vld [vmem:[%s1 + $0x1c8] sm:$0xff]
    %v77 = vld [vmem:[%s1 + $0x1d0] sm:$0xff]
    %v78 = vld [vmem:[%s1 + $0x1d8] sm:$0xff]
    %v79 = vld [vmem:[%s1 + $0x1e0] sm:$0xff]
    %v80 = vld [vmem:[%s1 + $0x1e8] sm:$0xff]
    %v81 = vld [vmem:[%s1 + $0x1f0] sm:$0xff]
    %v82 = vld [vmem:[%s1 + $0x1f8] sm:$0xff]
    %v83 = vld [vmem:[%s1 + $0x200] sm:$0xff]
    %v84 = vld [vmem:[%s1 + $0x208] sm:$0xff]
    %v85 = vld [vmem:[%s1 + $0x210] sm:$0xff]
    %v86 = vld [vmem:[%s1 + $0x218] sm:$0xff]
    %v87 = vld [vmem:[%s1 + $0x220] sm:$0xff]
    %v88 = vld [vmem:[%s1 + $0x228] sm:$0xff]
    %v89 = vld [vmem:[%s1 + $0x230] sm:$0xff]
    %v90 = vld [vmem:[%s1 + $0x238] sm:$0xff]
    %v91 = vld [vmem:[%s1 + $0x240] sm:$0xff]
    %v92 = vld [vmem:[%s1 + $0x248] sm:$0xff]
    %v93 = vld [vmem:[%s1 + $0x250] sm:$0xff]
    %v94 = vld [vmem:[%s1 + $0x258] sm:$0xff]
    %v95 = vld [vmem:[%s1 + $0x260] sm:$0xff]
    %v96 = vld [vmem:[%s1 + $0x268] sm:$0xff]
    %v97 = vld [vmem:[%s1 + $0x270] sm:$0xff]
    %v98 = vld [vmem:[%s1 + $0x278] sm:$0xff]
    %v99 = vld [vmem:[%s1 + $0x280] sm:$0xff]
    %v100 = vld [vmem:[%s1 + $0x288] sm:$0xff]
    %v101 = vld [vmem:[%s1 + $0x290] sm:$0xff]
    %v102 = vld [vmem:[%s1 + $0x298] sm:$0xff]
    %v103 = vld [vmem:[%s1 + $0x2a0] sm:$0xff]
    %v104 = vld [vmem:[%s1 + $0x2a8] sm:$0xff]
    %v105 = vld [vmem:[%s1 + $0x2b0] sm:$0xff]
    %v106 = vld [vmem:[%s1 + $0x2b8] sm:$0xff]
    %v107 = vld [vmem:[%s1 + $0x2c0] sm:$0xff]
    %v108 = vld [vmem:[%s1 + $0x2c8] sm:$0xff]
    %v109 = vld [vmem:[%s1 + $0x2d0] sm:$0xff]
    %v110 = vld [vmem:[%s1 + $0x2d8] sm:$0xff]
    %v111 = vld [vmem:[%s1 + $0x2e0] sm:$0xff]
    %v112 = vld [vmem:[%s1 + $0x2e8] sm:$0xff]
    %v113 = vld [vmem:[%s1 + $0x2f0] sm:$0xff]
    %v114 = vld [vmem:[%s1 + $0x2f8] sm:$0xff]
    %v115 = vld [vmem:[%s1 + $0x300] sm:$0xff]
    %v116 = vld [vmem:[%s1 + $0x308] sm:$0xff]
    %v117 = vld [vmem:[%s1 + $0x310] sm:$0xff]
    %v118 = vld [vmem:[%s1 + $0x318] sm:$0xff]
    %v119 = vld [vmem:[%s1 + $0x320] sm:$0xff]
    %v120 = vld [vmem:[%s1 + $0x328] sm:$0xff]
    %v121 = vld [vmem:[%s1 + $0x330] sm:$0xff]
    %v122 = vld [vmem:[%s1 + $0x338] sm:$0xff]
    %v123 = vld [vmem:[%s1 + $0x340] sm:$0xff]
    %v124 = vld [vmem:[%s1 + $0x348] sm:$0xff]
    %v125 = vld [vmem:[%s1 + $0x350] sm:$0xff]
    %v126 = vld [vmem:[%s1 + $0x358] sm:$0xff]
    %v127 = vld [vmem:[%s1 + $0x360] sm:$0xff]
    %v128 = vld [vmem:[%s1 + $0x368] sm:$0xff]
    %v129 = vld [vmem:[%s1 + $0x370] sm:$0xff]
    %v130 = vld [vmem:[%s1 + $0x378] sm:$0xff]
    %v131 = vld [vmem:[%s1 + $0x380] sm:$0xff]
    %v132 = vld [vmem:[%s1 + $0x388] sm:$0xff]
    %v133 = vld [vmem:[%s1 + $0x390] sm:$0xff]
    %v134 = vld [vmem:[%s1 + $0x398] sm:$0xff]
    %v135 = vld [vmem:[%s1 + $0x3a0] sm:$0xff]
    %v136 = vld [vmem:[%s1 + $0x3a8] sm:$0xff]
    %v137 = vld [vmem:[%s1 + $0x3b0] sm:$0xff]
    %v138 = vld [vmem:[%s1 + $0x3b8] sm:$0xff]
    %v139 = vld [vmem:[%s1 + $0x3c0] sm:$0xff]
    %v140 = vld [vmem:[%s1 + $0x3c8] sm:$0xff]
    %v141 = vld [vmem:[%s1 + $0x3d0] sm:$0xff]
    %v142 = vld [vmem:[%s1 + $0x3d8] sm:$0xff]
    %v143 = vld [vmem:[%s1 + $0x3e0] sm:$0xff]
    %v144 = vld [vmem:[%s1 + $0x3e8] sm:$0xff]
    %v145 = vld [vmem:[%s1 + $0x3f0] sm:$0xff]
    %v146 = vld [vmem:[%s1 + $0x3f8] sm:$0xff]
    %v147 = vld [vmem:[%s1 + $0x400] sm:$0xff]
    %v148 = vld [vmem:[%s1 + $0x408] sm:$0xff]
    %v149 = vld [vmem:[%s1 + $0x410] sm:$0xff]
    %v150 = vld [vmem:[%s1 + $0x418] sm:$0xff]
    %v151 = vld [vmem:[%s1 + $0x420] sm:$0xff]
    %v152 = vld [vmem:[%s1 + $0x428] sm:$0xff]
    %v153 = vld [vmem:[%s1 + $0x430] sm:$0xff]
    %v154 = vld [vmem:[%s1 + $0x438] sm:$0xff]
    %v155 = vld [vmem:[%s1 + $0x440] sm:$0xff]
    %v156 = vld [vmem:[%s1 + $0x448] sm:$0xff]
    %v157 = vld [vmem:[%s1 + $0x450] sm:$0xff]
    %v158 = vld [vmem:[%s1 + $0x458] sm:$0xff]
    %v159 = vld [vmem:[%s1 + $0x460] sm:$0xff]
    %v160 = vld [vmem:[%s1 + $0x468] sm:$0xff]
    %v161 = vld [vmem:[%s1 + $0x470] sm:$0xff]
    %v162 = vld [vmem:[%s1 + $0x478] sm:$0xff]
    %v163 = vld [vmem:[%s1 + $0x480] sm:$0xff]
    %v164 = vld [vmem:[%s1 + $0x488] sm:$0xff]
    %v165 = vld [vmem:[%s1 + $0x490] sm:$0xff]
    %v166 = vld [vmem:[%s1 + $0x498] sm:$0xff]
    %v167 = vld [vmem:[%s1 + $0x4a0] sm:$0xff]
    %v168 = vld [vmem:[%s1 + $0x4a8] sm:$0xff]
    %v169 = vld [vmem:[%s1 + $0x4b0] sm:$0xff]
    %v170 = vld [vmem:[%s1 + $0x4b8] sm:$0xff]
    %v171 = vld [vmem:[%s1 + $0x4c0] sm:$0xff]
    %v172 = vld [vmem:[%s1 + $0x4c8] sm:$0xff]
    %v173 = vld [vmem:[%s1 + $0x4d0] sm:$0xff]
    %v174 = vld [vmem:[%s1 + $0x4d8] sm:$0xff]
    %v175 = vld [vmem:[%s1 + $0x4e0] sm:$0xff]
    %v176 = vld [vmem:[%s1 + $0x4e8] sm:$0xff]
    %v177 = vld [vmem:[%s1 + $0x4f0] sm:$0xff]
    %v178 = vld [vmem:[%s1 + $0x4f8] sm:$0xff]
    %v179 = vld [vmem:[%s1 + $0x500] sm:$0xff]
    %v180 = vld [vmem:[%s1 + $0x508] sm:$0xff]
    %v181 = vld [vmem:[%s1 + $0x510] sm:$0xff]
    %v182 = vld [vmem:[%s1 + $0x518] sm:$0xff]
    %v183 = vld [vmem:[%s1 + $0x520] sm:$0xff]
    %v184 = vld [vmem:[%s1 + $0x528] sm:$0xff]
    %v185 = vld [vmem:[%s1 + $0x530] sm:$0xff]
    %v186 = vld [vmem:[%s1 + $0x538] sm:$0xff]
    %v187 = vld [vmem:[%s1 + $0x540] sm:$0xff]
    %v188 = vld [vmem:[%s1 + $0x548] sm:$0xff]
    %v189 = vld [vmem:[%s1 + $0x550] sm:$0xff]
    %v190 = vld [vmem:[%s1 + $0x558] sm:$0xff]
    %v191 = vld [vmem:[%s1 + $0x560] sm:$0xff]
    %v192 = vld [vmem:[%s1 + $0x568] sm:$0xff]
    %v193 = vld [vmem:[%s1 + $0x570] sm:$0xff]
    %v194 = vld [vmem:[%s1 + $0x578] sm:$0xff]
    %v195 = vld [vmem:[%s1 + $0x580] sm:$0xff]
    %v196 = vld [vmem:[%s1 + $0x588] sm:$0xff]
    %v197 = vld [vmem:[%s1 + $0x590] sm:$0xff]
    %v198 = vld [vmem:[%s1 + $0x598] sm:$0xff]
    %v199 = vld [vmem:[%s1 + $0x5a0] sm:$0xff]
    %v200 = vld [vmem:[%s1 + $0x5a8] sm:$0xff]
    %v201 = vld [vmem:[%s1 + $0x5b0] sm:$0xff]
    %v202 = vld [vmem:[%s1 + $0x5b8] sm:$0xff]
    %v203 = vld [vmem:[%s1 + $0x5c0] sm:$0xff]
    %v204 = vld [vmem:[%s1 + $0x5c8] sm:$0xff]
    %v205 = vld [vmem:[%s1 + $0x5d0] sm:$0xff]
    %v206 = vld [vmem:[%s1 + $0x5d8] sm:$0xff]
    %v207 = vld [vmem:[%s1 + $0x5e0] sm:$0xff]
    %v208 = vld [vmem:[%s1 + $0x5e8] sm:$0xff]
    %v209 = vld [vmem:[%s1 + $0x5f0] sm:$0xff]
    %v210 = vld [vmem:[%s1 + $0x5f8] sm:$0xff]
    %v211 = vld [vmem:[%s1 + $0x600] sm:$0xff]
    %v212 = vld [vmem:[%s1 + $0x608] sm:$0xff]
    %v213 = vld [vmem:[%s1 + $0x610] sm:$0xff]
    %v214 = vld [vmem:[%s1 + $0x618] sm:$0xff]
    %v215 = vld [vmem:[%s1 + $0x620] sm:$0xff]
    %v216 = vld [vmem:[%s1 + $0x628] sm:$0xff]
    %v217 = vld [vmem:[%s1 + $0x630] sm:$0xff]
    %v218 = vld [vmem:[%s1 + $0x638] sm:$0xff]
    %v219 = vld [vmem:[%s1 + $0x640] sm:$0xff]
    %v220 = vld [vmem:[%s1 + $0x648] sm:$0xff]
    %v221 = vld [vmem:[%s1 + $0x650] sm:$0xff]
    %v222 = vld [vmem:[%s1 + $0x658] sm:$0xff]
    %v223 = vld [vmem:[%s1 + $0x660] sm:$0xff]
    %v224 = vld [vmem:[%s1 + $0x668] sm:$0xff]
    %v225 = vld [vmem:[%s1 + $0x670] sm:$0xff]
    %v226 = vld [vmem:[%s1 + $0x678] sm:$0xff]
    %v227 = vld [vmem:[%s1 + $0x680] sm:$0xff]
    %v228 = vld [vmem:[%s1 + $0x688] sm:$0xff]
    %v229 = vld [vmem:[%s1 + $0x690] sm:$0xff]
    %v230 = vld [vmem:[%s1 + $0x698] sm:$0xff]
    %v231 = vld [vmem:[%s1 + $0x6a0] sm:$0xff]
    %v232 = vld [vmem:[%s1 + $0x6a8] sm:$0xff]
    %v233 = vld [vmem:[%s1 + $0x6b0] sm:$0xff]
    %v234 = vld [vmem:[%s1 + $0x6b8] sm:$0xff]
    %v235 = vld [vmem:[%s1 + $0x6c0] sm:$0xff]
    %v236 = vld [vmem:[%s1 + $0x6c8] sm:$0xff]
    %v237 = vld [vmem:[%s1 + $0x6d0] sm:$0xff]
    %v238 = vld [vmem:[%s1 + $0x6d8] sm:$0xff]
    %v239 = vld [vmem:[%s1 + $0x6e0] sm:$0xff]
    %v240 = vld [vmem:[%s1 + $0x6e8] sm:$0xff]
    %v241 = vld [vmem:[%s1 + $0x6f0] sm:$0xff]
    %v242 = vld [vmem:[%s1 + $0x6f8] sm:$0xff]
    %v243 = vld [vmem:[%s1 + $0x700] sm:$0xff]
    %v244 = vld [vmem:[%s1 + $0x708] sm:$0xff]
    %v245 = vld [vmem:[%s1 + $0x710] sm:$0xff]
    %v246 = vld [vmem:[%s1 + $0x718] sm:$0xff]
    %v247 = vld [vmem:[%s1 + $0x720] sm:$0xff]
    %v248 = vld [vmem:[%s1 + $0x728] sm:$0xff]
    %v249 = vld [vmem:[%s1 + $0x730] sm:$0xff]
    %v250 = vld [vmem:[%s1 + $0x738] sm:$0xff]
    %v251 = vld [vmem:[%s1 + $0x740] sm:$0xff]
    %v252 = vld [vmem:[%s1 + $0x748] sm:$0xff]
    %v253 = vld [vmem:[%s1 + $0x750] sm:$0xff]
    %v254 = vld [vmem:[%s1 + $0x758] sm:$0xff]
    %v255 = vld [vmem:[%s1 + $0x760] sm:$0xff]
    %v256 = vld [vmem:[%s1 + $0x768] sm:$0xff]
    %v257 = vld [vmem:[%s1 + $0x770] sm:$0xff]
    %v258 = vld [vmem:[%s1 + $0x778] sm:$0xff]
    %v259 = vld [vmem:[%s1 + $0x780] sm:$0xff]
    %v260 = vld [vmem:[%s1 + $0x788] sm:$0xff]
    %v261 = vld [vmem:[%s1 + $0x790] sm:$0xff]
    %v262 = vld [vmem:[%s1 + $0x798] sm:$0xff]
    %v263 = vld [vmem:[%s1 + $0x7a0] sm:$0xff]
    %v264 = vld [vmem:[%s1 + $0x7a8] sm:$0xff]
    %v265 = vld [vmem:[%s1 + $0x7b0] sm:$0xff]
    %v266 = vld [vmem:[%s1 + $0x7b8] sm:$0xff]
    %v267 = vld [vmem:[%s1 + $0x7c0] sm:$0xff]
    %v268 = vld [vmem:[%s1 + $0x7c8] sm:$0xff]
    %v269 = vld [vmem:[%s1 + $0x7d0] sm:$0xff]
    %v270 = vld [vmem:[%s1 + $0x7d8] sm:$0xff]
    %v271 = vld [vmem:[%s1 + $0x7e0] sm:$0xff]
    %v272 = vld [vmem:[%s1 + $0x7e8] sm:$0xff]
    %v273 = vld [vmem:[%s1 + $0x7f0] sm:$0xff]
    %v274 = vld [vmem:[%s1 + $0x7f8] sm:$0xff]
    %v275 = vld [vmem:[%s2] sm:$0x1]
    %v277 = vperm.slane %v275, 0
    %283 = vst [vmem:[#allocation1] ss:$4 sm:$0xff] %v15
    %s284 = scalar_lea.vmem [#allocation1], 32
    %285 = vst [vmem:[%s284] ss:$4 sm:$0xff] %v16
    %v286 = vld.sshfl [vmem:[#allocation1] sm:$0xff pattern:$0x73625140]
    %v287 = vld.sshfl [vmem:[#allocation1 + $0x8] sm:$0xff pattern:$0x73625140]
    %v288 = vld.sshfl [vmem:[#allocation1 + $0x10] sm:$0xff pattern:$0x73625140]
    %v289 = vld.sshfl [vmem:[#allocation1 + $0x18] sm:$0xff pattern:$0x73625140]
    %v290 = vld.sshfl [vmem:[#allocation1 + $0x20] sm:$0xff pattern:$0x73625140]
    %v291 = vld.sshfl [vmem:[#allocation1 + $0x28] sm:$0xff pattern:$0x73625140]
    %v292 = vld.sshfl [vmem:[#allocation1 + $0x30] sm:$0xff pattern:$0x73625140]
    %v293 = vld.sshfl [vmem:[#allocation1 + $0x38] sm:$0xff pattern:$0x73625140]
    %294 = vst [vmem:[#allocation1] ss:$4 sm:$0xff] %v17
    %295 = vst [vmem:[%s284] ss:$4 sm:$0xff] %v18
    %v296 = vld.sshfl [vmem:[#allocation1] sm:$0xff pattern:$0x73625140]
    %v297 = vld.sshfl [vmem:[#allocation1 + $0x8] sm:$0xff pattern:$0x73625140]
    %v298 = vld.sshfl [vmem:[#allocation1 + $0x10] sm:$0xff pattern:$0x73625140]
    %v299 = vld.sshfl [vmem:[#allocation1 + $0x18] sm:$0xff pattern:$0x73625140]
    %v300 = vld.sshfl [vmem:[#allocation1 + $0x20] sm:$0xff pattern:$0x73625140]
    %v301 = vld.sshfl [vmem:[#allocation1 + $0x28] sm:$0xff pattern:$0x73625140]
    %v302 = vld.sshfl [vmem:[#allocation1 + $0x30] sm:$0xff pattern:$0x73625140]
    %v303 = vld.sshfl [vmem:[#allocation1 + $0x38] sm:$0xff pattern:$0x73625140]
    %320 = vmatpush.msra.mxu0 %v34
    %321 = vmatpush.msra.mxu0 %v33
    %322 = vmatpush.msra.mxu0 %v32
    %323 = vmatpush.msra.mxu0 %v31
    %324 = vmatpush.msra.mxu0 %v30
    %325 = vmatpush.msra.mxu0 %v29
    %326 = vmatpush.msra.mxu0 %v28
    %327 = vmatpush.msra.mxu0 %v27
    %328 = vmatpush.msra.mxu0 %v26
    %329 = vmatpush.msra.mxu0 %v25
    %330 = vmatpush.msra.mxu0 %v24
    %331 = vmatpush.msra.mxu0 %v23
    %332 = vmatpush.msra.mxu0 %v22
    %333 = vmatpush.msra.mxu0 %v21
    %334 = vmatpush.msra.mxu0 %v20
    %335 = vmatpush.msra.mxu0 %v19
    %336 = vmatmul.f32.gmra.mxu0 %v286
    %v337 = vpop.f32.mrf.mxu0
    %v338 = vadd.f32 %v277, %v337
    %339 = vdwg.mxu0
    %340 = vmatpush.msra.mxu0 %v50
    %341 = vmatpush.msra.mxu0 %v49
    %342 = vmatpush.msra.mxu0 %v48
    %343 = vmatpush.msra.mxu0 %v47
    %344 = vmatpush.msra.mxu0 %v46
    %345 = vmatpush.msra.mxu0 %v45
    %346 = vmatpush.msra.mxu0 %v44
    %347 = vmatpush.msra.mxu0 %v43
    %348 = vmatpush.msra.mxu0 %v42
    %349 = vmatpush.msra.mxu0 %v41
    %350 = vmatpush.msra.mxu0 %v40
    %351 = vmatpush.msra.mxu0 %v39
    %352 = vmatpush.msra.mxu0 %v38
    %353 = vmatpush.msra.mxu0 %v37
    %354 = vmatpush.msra.mxu0 %v36
    %355 = vmatpush.msra.mxu0 %v35
    %356 = vmatmul.f32.gmra.mxu0 %v287
    %v357 = vpop.f32.mrf.mxu0
    %v358 = vadd.f32 %v338, %v357
    %359 = vdwg.mxu0
    %360 = vmatpush.msra.mxu0 %v66
    %361 = vmatpush.msra.mxu0 %v65
    %362 = vmatpush.msra.mxu0 %v64
    %363 = vmatpush.msra.mxu0 %v63
    %364 = vmatpush.msra.mxu0 %v62
    %365 = vmatpush.msra.mxu0 %v61
    %366 = vmatpush.msra.mxu0 %v60
    %367 = vmatpush.msra.mxu0 %v59
    %368 = vmatpush.msra.mxu0 %v58
    %369 = vmatpush.msra.mxu0 %v57
    %370 = vmatpush.msra.mxu0 %v56
    %371 = vmatpush.msra.mxu0 %v55
    %372 = vmatpush.msra.mxu0 %v54
    %373 = vmatpush.msra.mxu0 %v53
    %374 = vmatpush.msra.mxu0 %v52
    %375 = vmatpush.msra.mxu0 %v51
    %376 = vmatmul.f32.gmra.mxu0 %v288
    %v377 = vpop.f32.mrf.mxu0
    %v378 = vadd.f32 %v358, %v377
    %379 = vdwg.mxu0
    %380 = vmatpush.msra.mxu0 %v82
    %381 = vmatpush.msra.mxu0 %v81
    %382 = vmatpush.msra.mxu0 %v80
    %383 = vmatpush.msra.mxu0 %v79
    %384 = vmatpush.msra.mxu0 %v78
    %385 = vmatpush.msra.mxu0 %v77
    %386 = vmatpush.msra.mxu0 %v76
    %387 = vmatpush.msra.mxu0 %v75
    %388 = vmatpush.msra.mxu0 %v74
    %389 = vmatpush.msra.mxu0 %v73
    %390 = vmatpush.msra.mxu0 %v72
    %391 = vmatpush.msra.mxu0 %v71
    %392 = vmatpush.msra.mxu0 %v70
    %393 = vmatpush.msra.mxu0 %v69
    %394 = vmatpush.msra.mxu0 %v68
    %395 = vmatpush.msra.mxu0 %v67
    %396 = vmatmul.f32.gmra.mxu0 %v289
    %v397 = vpop.f32.mrf.mxu0
    %v398 = vadd.f32 %v378, %v397
    %399 = vdwg.mxu0
    %400 = vmatpush.msra.mxu0 %v98
    %401 = vmatpush.msra.mxu0 %v97
    %402 = vmatpush.msra.mxu0 %v96
    %403 = vmatpush.msra.mxu0 %v95
    %404 = vmatpush.msra.mxu0 %v94
    %405 = vmatpush.msra.mxu0 %v93
    %406 = vmatpush.msra.mxu0 %v92
    %407 = vmatpush.msra.mxu0 %v91
    %408 = vmatpush.msra.mxu0 %v90
    %409 = vmatpush.msra.mxu0 %v89
    %410 = vmatpush.msra.mxu0 %v88
    %411 = vmatpush.msra.mxu0 %v87
    %412 = vmatpush.msra.mxu0 %v86
    %413 = vmatpush.msra.mxu0 %v85
    %414 = vmatpush.msra.mxu0 %v84
    %415 = vmatpush.msra.mxu0 %v83
    %416 = vmatmul.f32.gmra.mxu0 %v290
    %v417 = vpop.f32.mrf.mxu0
    %v418 = vadd.f32 %v398, %v417
    %419 = vdwg.mxu0
    %420 = vmatpush.msra.mxu0 %v114
    %421 = vmatpush.msra.mxu0 %v113
    %422 = vmatpush.msra.mxu0 %v112
    %423 = vmatpush.msra.mxu0 %v111
    %424 = vmatpush.msra.mxu0 %v110
    %425 = vmatpush.msra.mxu0 %v109
    %426 = vmatpush.msra.mxu0 %v108
    %427 = vmatpush.msra.mxu0 %v107
    %428 = vmatpush.msra.mxu0 %v106
    %429 = vmatpush.msra.mxu0 %v105
    %430 = vmatpush.msra.mxu0 %v104
    %431 = vmatpush.msra.mxu0 %v103
    %432 = vmatpush.msra.mxu0 %v102
    %433 = vmatpush.msra.mxu0 %v101
    %434 = vmatpush.msra.mxu0 %v100
    %435 = vmatpush.msra.mxu0 %v99
    %436 = vmatmul.f32.gmra.mxu0 %v291
    %v437 = vpop.f32.mrf.mxu0
    %v438 = vadd.f32 %v418, %v437
    %439 = vdwg.mxu0
    %440 = vmatpush.msra.mxu0 %v130
    %441 = vmatpush.msra.mxu0 %v129
    %442 = vmatpush.msra.mxu0 %v128
    %443 = vmatpush.msra.mxu0 %v127
    %444 = vmatpush.msra.mxu0 %v126
    %445 = vmatpush.msra.mxu0 %v125
    %446 = vmatpush.msra.mxu0 %v124
    %447 = vmatpush.msra.mxu0 %v123
    %448 = vmatpush.msra.mxu0 %v122
    %449 = vmatpush.msra.mxu0 %v121
    %450 = vmatpush.msra.mxu0 %v120
    %451 = vmatpush.msra.mxu0 %v119
    %452 = vmatpush.msra.mxu0 %v118
    %453 = vmatpush.msra.mxu0 %v117
    %454 = vmatpush.msra.mxu0 %v116
    %455 = vmatpush.msra.mxu0 %v115
    %456 = vmatmul.f32.gmra.mxu0 %v292
    %v457 = vpop.f32.mrf.mxu0
    %v458 = vadd.f32 %v438, %v457
    %459 = vdwg.mxu0
    %460 = vmatpush.msra.mxu0 %v146
    %461 = vmatpush.msra.mxu0 %v145
    %462 = vmatpush.msra.mxu0 %v144
    %463 = vmatpush.msra.mxu0 %v143
    %464 = vmatpush.msra.mxu0 %v142
    %465 = vmatpush.msra.mxu0 %v141
    %466 = vmatpush.msra.mxu0 %v140
    %467 = vmatpush.msra.mxu0 %v139
    %468 = vmatpush.msra.mxu0 %v138
    %469 = vmatpush.msra.mxu0 %v137
    %470 = vmatpush.msra.mxu0 %v136
    %471 = vmatpush.msra.mxu0 %v135
    %472 = vmatpush.msra.mxu0 %v134
    %473 = vmatpush.msra.mxu0 %v133
    %474 = vmatpush.msra.mxu0 %v132
    %475 = vmatpush.msra.mxu0 %v131
    %476 = vmatmul.f32.gmra.mxu0 %v293
    %v477 = vpop.f32.mrf.mxu0
    %v478 = vadd.f32 %v458, %v477
    %479 = vdwg.mxu0
    %480 = vmatpush.msra.mxu0 %v162
    %481 = vmatpush.msra.mxu0 %v161
    %482 = vmatpush.msra.mxu0 %v160
    %483 = vmatpush.msra.mxu0 %v159
    %484 = vmatpush.msra.mxu0 %v158
    %485 = vmatpush.msra.mxu0 %v157
    %486 = vmatpush.msra.mxu0 %v156
    %487 = vmatpush.msra.mxu0 %v155
    %488 = vmatpush.msra.mxu0 %v154
    %489 = vmatpush.msra.mxu0 %v153
    %490 = vmatpush.msra.mxu0 %v152
    %491 = vmatpush.msra.mxu0 %v151
    %492 = vmatpush.msra.mxu0 %v150
    %493 = vmatpush.msra.mxu0 %v149
    %494 = vmatpush.msra.mxu0 %v148
    %495 = vmatpush.msra.mxu0 %v147
    %496 = vmatmul.f32.gmra.mxu0 %v296
    %v497 = vpop.f32.mrf.mxu0
    %v498 = vadd.f32 %v478, %v497
    %499 = vdwg.mxu0
    %500 = vmatpush.msra.mxu0 %v178
    %501 = vmatpush.msra.mxu0 %v177
    %502 = vmatpush.msra.mxu0 %v176
    %503 = vmatpush.msra.mxu0 %v175
    %504 = vmatpush.msra.mxu0 %v174
    %505 = vmatpush.msra.mxu0 %v173
    %506 = vmatpush.msra.mxu0 %v172
    %507 = vmatpush.msra.mxu0 %v171
    %508 = vmatpush.msra.mxu0 %v170
    %509 = vmatpush.msra.mxu0 %v169
    %510 = vmatpush.msra.mxu0 %v168
    %511 = vmatpush.msra.mxu0 %v167
    %512 = vmatpush.msra.mxu0 %v166
    %513 = vmatpush.msra.mxu0 %v165
    %514 = vmatpush.msra.mxu0 %v164
    %515 = vmatpush.msra.mxu0 %v163
    %516 = vmatmul.f32.gmra.mxu0 %v297
    %v517 = vpop.f32.mrf.mxu0
    %v518 = vadd.f32 %v498, %v517
    %519 = vdwg.mxu0
    %520 = vmatpush.msra.mxu0 %v194
    %521 = vmatpush.msra.mxu0 %v193
    %522 = vmatpush.msra.mxu0 %v192
    %523 = vmatpush.msra.mxu0 %v191
    %524 = vmatpush.msra.mxu0 %v190
    %525 = vmatpush.msra.mxu0 %v189
    %526 = vmatpush.msra.mxu0 %v188
    %527 = vmatpush.msra.mxu0 %v187
    %528 = vmatpush.msra.mxu0 %v186
    %529 = vmatpush.msra.mxu0 %v185
    %530 = vmatpush.msra.mxu0 %v184
    %531 = vmatpush.msra.mxu0 %v183
    %532 = vmatpush.msra.mxu0 %v182
    %533 = vmatpush.msra.mxu0 %v181
    %534 = vmatpush.msra.mxu0 %v180
    %535 = vmatpush.msra.mxu0 %v179
    %536 = vmatmul.f32.gmra.mxu0 %v298
    %v537 = vpop.f32.mrf.mxu0
    %v538 = vadd.f32 %v518, %v537
    %539 = vdwg.mxu0
    %540 = vmatpush.msra.mxu0 %v210
    %541 = vmatpush.msra.mxu0 %v209
    %542 = vmatpush.msra.mxu0 %v208
    %543 = vmatpush.msra.mxu0 %v207
    %544 = vmatpush.msra.mxu0 %v206
    %545 = vmatpush.msra.mxu0 %v205
    %546 = vmatpush.msra.mxu0 %v204
    %547 = vmatpush.msra.mxu0 %v203
    %548 = vmatpush.msra.mxu0 %v202
    %549 = vmatpush.msra.mxu0 %v201
    %550 = vmatpush.msra.mxu0 %v200
    %551 = vmatpush.msra.mxu0 %v199
    %552 = vmatpush.msra.mxu0 %v198
    %553 = vmatpush.msra.mxu0 %v197
    %554 = vmatpush.msra.mxu0 %v196
    %555 = vmatpush.msra.mxu0 %v195
    %556 = vmatmul.f32.gmra.mxu0 %v299
    %v557 = vpop.f32.mrf.mxu0
    %v558 = vadd.f32 %v538, %v557
    %559 = vdwg.mxu0
    %560 = vmatpush.msra.mxu0 %v226
    %561 = vmatpush.msra.mxu0 %v225
    %562 = vmatpush.msra.mxu0 %v224
    %563 = vmatpush.msra.mxu0 %v223
    %564 = vmatpush.msra.mxu0 %v222
    %565 = vmatpush.msra.mxu0 %v221
    %566 = vmatpush.msra.mxu0 %v220
    %567 = vmatpush.msra.mxu0 %v219
    %568 = vmatpush.msra.mxu0 %v218
    %569 = vmatpush.msra.mxu0 %v217
    %570 = vmatpush.msra.mxu0 %v216
    %571 = vmatpush.msra.mxu0 %v215
    %572 = vmatpush.msra.mxu0 %v214
    %573 = vmatpush.msra.mxu0 %v213
    %574 = vmatpush.msra.mxu0 %v212
    %575 = vmatpush.msra.mxu0 %v211
    %576 = vmatmul.f32.gmra.mxu0 %v300
    %v577 = vpop.f32.mrf.mxu0
    %v578 = vadd.f32 %v558, %v577
    %579 = vdwg.mxu0
    %580 = vmatpush.msra.mxu0 %v242
    %581 = vmatpush.msra.mxu0 %v241
    %582 = vmatpush.msra.mxu0 %v240
    %583 = vmatpush.msra.mxu0 %v239
    %584 = vmatpush.msra.mxu0 %v238
    %585 = vmatpush.msra.mxu0 %v237
    %586 = vmatpush.msra.mxu0 %v236
    %587 = vmatpush.msra.mxu0 %v235
    %588 = vmatpush.msra.mxu0 %v234
    %589 = vmatpush.msra.mxu0 %v233
    %590 = vmatpush.msra.mxu0 %v232
    %591 = vmatpush.msra.mxu0 %v231
    %592 = vmatpush.msra.mxu0 %v230
    %593 = vmatpush.msra.mxu0 %v229
    %594 = vmatpush.msra.mxu0 %v228
    %595 = vmatpush.msra.mxu0 %v227
    %596 = vmatmul.f32.gmra.mxu0 %v301
    %v597 = vpop.f32.mrf.mxu0
    %v598 = vadd.f32 %v578, %v597
    %599 = vdwg.mxu0
    %600 = vmatpush.msra.mxu0 %v258
    %601 = vmatpush.msra.mxu0 %v257
    %602 = vmatpush.msra.mxu0 %v256
    %603 = vmatpush.msra.mxu0 %v255
    %604 = vmatpush.msra.mxu0 %v254
    %605 = vmatpush.msra.mxu0 %v253
    %606 = vmatpush.msra.mxu0 %v252
    %607 = vmatpush.msra.mxu0 %v251
    %608 = vmatpush.msra.mxu0 %v250
    %609 = vmatpush.msra.mxu0 %v249
    %610 = vmatpush.msra.mxu0 %v248
    %611 = vmatpush.msra.mxu0 %v247
    %612 = vmatpush.msra.mxu0 %v246
    %613 = vmatpush.msra.mxu0 %v245
    %614 = vmatpush.msra.mxu0 %v244
    %615 = vmatpush.msra.mxu0 %v243
    %616 = vmatmul.f32.gmra.mxu0 %v302
    %v617 = vpop.f32.mrf.mxu0
    %v618 = vadd.f32 %v598, %v617
    %619 = vdwg.mxu0
    %620 = vmatpush.msra.mxu0 %v274
    %621 = vmatpush.msra.mxu0 %v273
    %622 = vmatpush.msra.mxu0 %v272
    %623 = vmatpush.msra.mxu0 %v271
    %624 = vmatpush.msra.mxu0 %v270
    %625 = vmatpush.msra.mxu0 %v269
    %626 = vmatpush.msra.mxu0 %v268
    %627 = vmatpush.msra.mxu0 %v267
    %628 = vmatpush.msra.mxu0 %v266
    %629 = vmatpush.msra.mxu0 %v265
    %630 = vmatpush.msra.mxu0 %v264
    %631 = vmatpush.msra.mxu0 %v263
    %632 = vmatpush.msra.mxu0 %v262
    %633 = vmatpush.msra.mxu0 %v261
    %634 = vmatpush.msra.mxu0 %v260
    %635 = vmatpush.msra.mxu0 %v259
    %636 = vmatmul.f32.gmra.mxu0 %v303
    %v637 = vpop.f32.mrf.mxu0
    %v638 = vadd.f32 %v618, %v637
    %639 = vdwg.mxu0
    %vm640 = vcmask 58368
    %641 = vst.msk [vmem:[#allocation2] sm:$0x3] %vm640, %v638
    // Predicated region
    $region14: #{forward.3} parent=1 // pred_check
      _
    $region15: #{forward.3} parent=1 // pred_check_branch
      %643 = sbr.rel (0) target = $region17
    $region16: #{forward.3} parent=1 // pred_region
      %645 = vsyncadd [#allocation3], 0
      %s647 = sshll.u32 [#allocation2], 4
      %s648 = int_to_ptr.vmem [resolvable:$true] %s647
      %s649 = sshll.u32 %s3, 4
      %s650 = int_to_ptr.hbm [resolvable:$true] %s649
      %652 = dma.vmem_to_hbm [thread:$0]  %s648, 32, %s650, [#allocation3]
    $region17: #{forward.3} parent=1 // pred_fallthru
      _
    // Predicated region
    $region18: #{forward.3} parent=1 // pred_check
      _
    $region19: #{forward.3} parent=1 // pred_check_branch
      %654 = sbr.rel (0) target = $region21
    $region20: #{forward.3} parent=1 // pred_region
      %656 = dma.done [#allocation3], 32
    $region21: #{forward.3} parent=1 // pred_fallthru
      _
    %657 = vsyncpa [#allocation3], 1

// kernel: forward.2
$region0: #{forward.2}
  #allocation0 [shape = 'u32[]', space=smem, size = 0x4, offset = 0x4, fixed_abs, tag = 'smem constant byte address 0x4 - core index']
  #allocation1 [shape = 'u32[72,128]{1,0:T(1,128)}', space=vmem, size = 0x9000, scoped, tag = 'internal scratch']
  #allocation2 [shape = 'f32[32,128]{1,0:T(8,128)}', space=vmem, size = 0x4000, scoped, tag = 'scratch operand']
  %s0 = inlined_call_operand.vmem [shape: f32[2,16,4], index: 0, kind: input, shape index: {}]
  %s1 = inlined_call_operand.vmem [shape: f32[16,128], index: 1, kind: input, shape index: {}]
  %s2 = inlined_call_operand.vmem [shape: f32[4,128], index: 2, kind: input, shape index: {}]
  %s3 = inlined_call_operand.vmem [shape: f32[1,128], index: 3, kind: input, shape index: {}]
  %s4 = inlined_call_operand.vmem [shape: f32[6,16,16], index: 4, kind: input, shape index: {}]
  %s5 = inlined_call_operand.vmem [shape: f32[2,1,128], index: 5, kind: input, shape index: {}]
  %s6 = inlined_call_operand.vmem [shape: bf16[2,128,1152], index: 6, kind: input, shape index: {}]
  %s7 = inlined_call_operand.hbm [shape: bf16[2,384,128], index: 7, kind: input, shape index: {}]
  %s8 = inlined_call_operand.vmem [shape: f32[2,1,128], index: 8, kind: input, shape index: {}]
  %s9 = inlined_call_operand.vmem [shape: bf16[2,128,1024], index: 9, kind: input, shape index: {}]
  %s10 = inlined_call_operand.vmem [shape: f32[2,1,1024], index: 10, kind: input, shape index: {}]
  %s11 = inlined_call_operand.vmem [shape: bf16[2,512,128], index: 11, kind: input, shape index: {}]
  %s12 = inlined_call_operand.vmem [shape: f32[2,1,128], index: 12, kind: input, shape index: {}]
  %s13 = inlined_call_operand.vmem [shape: f32[1,128], index: 13, kind: input, shape index: {}]
  %s14 = inlined_call_operand.vmem [shape: f32[32,128], index: 14, kind: output, shape index: {}]
  %s15 = sld [smem:[#allocation0]]
  $region101: #{forward.2} parent=0
    _
  %s17 = ssub.s32 1, %s15
  %s18 = scalar_select 0, %s17, %s15
  $region1: #{forward.2} parent=0
    #allocation3 [shape = 'u8[196608]{0}', space=vmem, size = 0x30000, scoped, tag = 'input window, operand 7']
    #allocation4 [shape = 's32[2]{0}', space=sflag, size = 0x8, scoped, tag = 'scoped memory for forward.2']
    %19 = vsyncpa [#allocation4], 0
    %s20 = scalar_lea.sflag [#allocation4], 1
    %21 = vsyncpa %s20, 0
    loop: start=0, step=1, limit=4
    $region2: #{forward.2} parent=1 // loop_pre_header
      _
    $region3: #{forward.2} parent=1 // loop_header
      %s23 = sphi 0, %s27
      %p24 = scmp.ge.s32.totalorder %s23, 4
      %s31 = sphi 0, %s31
      %s33 = sphi 0, %s31
      %s34 = sphi 0, %s33
      %s48 = sphi 0, %s34
      %s52 = sphi 0, %s52
      %s54 = sphi 0, %s52
      %s55 = sphi 0, %s54
      %s69 = sphi 0, %s55
      %s73 = sphi 0, %s73
      %s75 = sphi 0, %s73
      %s76 = sphi 0, %s75
      %s90 = sphi 0, %s76
      %s94 = sphi 0, %s94
      %s96 = sphi 0, %s94
      %s97 = sphi 0, %s96
      %s111 = sphi 0, %s97
      %s115 = sphi 0, %s115
      %s117 = sphi 0, %s115
      %s118 = sphi 0, %s117
      %s132 = sphi 0, %s118
      %s138 = sphi 0, %s140
      %s141 = sphi 0, %s138
      %s142 = sphi 0, %s141
      %s158 = sphi 0, %s142
      %s164 = sphi 0, %s166
      %s167 = sphi 0, %s164
      %s168 = sphi 0, %s167
      %s184 = sphi 0, %s168
      %s190 = sphi 0, %s192
      %s193 = sphi 0, %s190
      %s194 = sphi 0, %s193
      %s210 = sphi 0, %s194
      %s216 = sphi 0, %s218
      %s219 = sphi 0, %s216
      %s220 = sphi 0, %s219
      %s236 = sphi 0, %s220
      %s242 = sphi 0, %s244
      %s245 = sphi 0, %s242
      %s246 = sphi 0, %s245
      %s262 = sphi 0, %s246
      %s268 = sphi 0, %s270
      %s271 = sphi 0, %s268
      %s272 = sphi 0, %s271
      %s288 = sphi 0, %s272
      %s294 = sphi 0, %s296
      %s297 = sphi 0, %s294
      %s298 = sphi 0, %s297
      %s314 = sphi 0, %s298
      %s320 = sphi 0, %s322
      %s323 = sphi 0, %s320
      %s324 = sphi 0, %s323
      %s340 = sphi 0, %s324
      %s344 = sphi 0, %s344
      %s346 = sphi 0, %s344
      %s347 = sphi 0, %s346
      %s361 = sphi 0, %s347
      %s365 = sphi 0, %s365
      %s367 = sphi 0, %s365
      %s368 = sphi 0, %s367
      %s382 = sphi 0, %s368
    $region4: #{forward.2} parent=1 // loop_header_branch
      %26 = sbr.rel (%p24) target = $region8
    $region5: #{forward.2} parent=1 // loop_body
      %s28 = ssub.s32 %s23, 1
      %s29 = ssub.s32 %s23, 2
      %s30 = sadd.s32 %s23, 1
      %s32 = sadd.s32 %s31, 1
      %p35 = scmp.eq.s32.totalorder %s23, 1
      %p36 = scmp.ne.s32.totalorder %s31, %s33
      %p37 = scmp.eq.s32.totalorder %s23, 0
      %p38 = por %p36, %p37
      %p39 = scmp.ne.s32.totalorder %s31, %s33
      %p40 = scmp.eq.s32.totalorder %s28, 1
      %p41 = por %p39, %p40
      %p42 = scmp.ne.s32.totalorder %s33, %s34
      %p43 = scmp.eq.s32.totalorder %s28, 0
      %p44 = por %p42, %p43
      %p45 = scmp.ne.s32.totalorder %s33, %s34
      %p46 = scmp.eq.s32.totalorder %s29, 1
      %p47 = por %p45, %p46
      %p49 = scmp.ne.s32.totalorder %s34, %s48
      %p50 = scmp.eq.s32.totalorder %s29, 0
      %p51 = por %p49, %p50
      %s53 = sadd.s32 %s52, 1
      %p56 = scmp.eq.s32.totalorder %s23, 1
      %p57 = scmp.ne.s32.totalorder %s52, %s54
      %p58 = scmp.eq.s32.totalorder %s23, 0
      %p59 = por %p57, %p58
      %p60 = scmp.ne.s32.totalorder %s52, %s54
      %p61 = scmp.eq.s32.totalorder %s28, 1
      %p62 = por %p60, %p61
      %p63 = scmp.ne.s32.totalorder %s54, %s55
      %p64 = scmp.eq.s32.totalorder %s28, 0
      %p65 = por %p63, %p64
      %p66 = scmp.ne.s32.totalorder %s54, %s55
      %p67 = scmp.eq.s32.totalorder %s29, 1
      %p68 = por %p66, %p67
      %p70 = scmp.ne.s32.totalorder %s55, %s69
      %p71 = scmp.eq.s32.totalorder %s29, 0
      %p72 = por %p70, %p71
      %s74 = sadd.s32 %s73, 1
      %p77 = scmp.eq.s32.totalorder %s23, 1
      %p78 = scmp.ne.s32.totalorder %s73, %s75
      %p79 = scmp.eq.s32.totalorder %s23, 0
      %p80 = por %p78, %p79
      %p81 = scmp.ne.s32.totalorder %s73, %s75
      %p82 = scmp.eq.s32.totalorder %s28, 1
      %p83 = por %p81, %p82
      %p84 = scmp.ne.s32.totalorder %s75, %s76
      %p85 = scmp.eq.s32.totalorder %s28, 0
      %p86 = por %p84, %p85
      %p87 = scmp.ne.s32.totalorder %s75, %s76
      %p88 = scmp.eq.s32.totalorder %s29, 1
      %p89 = por %p87, %p88
      %p91 = scmp.ne.s32.totalorder %s76, %s90
      %p92 = scmp.eq.s32.totalorder %s29, 0
      %p93 = por %p91, %p92
      %s95 = sadd.s32 %s94, 1
      %p98 = scmp.eq.s32.totalorder %s23, 1
      %p99 = scmp.ne.s32.totalorder %s94, %s96
      %p100 = scmp.eq.s32.totalorder %s23, 0
      %p101 = por %p99, %p100
      %p102 = scmp.ne.s32.totalorder %s94, %s96
      %p103 = scmp.eq.s32.totalorder %s28, 1
      %p104 = por %p102, %p103
      %p105 = scmp.ne.s32.totalorder %s96, %s97
      %p106 = scmp.eq.s32.totalorder %s28, 0
      %p107 = por %p105, %p106
      %p108 = scmp.ne.s32.totalorder %s96, %s97
      %p109 = scmp.eq.s32.totalorder %s29, 1
      %p110 = por %p108, %p109
      %p112 = scmp.ne.s32.totalorder %s97, %s111
      %p113 = scmp.eq.s32.totalorder %s29, 0
      %p114 = por %p112, %p113
      %s116 = sadd.s32 %s115, 1
      %p119 = scmp.eq.s32.totalorder %s23, 1
      %p120 = scmp.ne.s32.totalorder %s115, %s117
      %p121 = scmp.eq.s32.totalorder %s23, 0
      %p122 = por %p120, %p121
      %p123 = scmp.ne.s32.totalorder %s115, %s117
      %p124 = scmp.eq.s32.totalorder %s28, 1
      %p125 = por %p123, %p124
      %p126 = scmp.ne.s32.totalorder %s117, %s118
      %p127 = scmp.eq.s32.totalorder %s28, 0
      %p128 = por %p126, %p127
      %p129 = scmp.ne.s32.totalorder %s117, %s118
      %p130 = scmp.eq.s32.totalorder %s29, 1
      %p131 = por %p129, %p130
      %p133 = scmp.ne.s32.totalorder %s118, %s132
      %p134 = scmp.eq.s32.totalorder %s29, 0
      %p135 = por %p133, %p134
      %s136 = ssub.s32 %s23, %s30
      %p137 = scmp.eq.s32.totalorder %s136, 0
      %s139 = sadd.s32 %s138, 1
      %s140 = scalar_select %p137, %s138, %s139
      %p143 = pneg %p137
      %p144 = scmp.eq.s32.totalorder %s23, 1
      %p145 = por %p143, %p144
      %p146 = scmp.ne.s32.totalorder %s138, %s141
      %p147 = scmp.eq.s32.totalorder %s23, 0
      %p148 = por %p146, %p147
      %p149 = scmp.ne.s32.totalorder %s138, %s141
      %p150 = scmp.eq.s32.totalorder %s28, 1
      %p151 = por %p149, %p150
      %p152 = scmp.ne.s32.totalorder %s141, %s142
      %p153 = scmp.eq.s32.totalorder %s28, 0
      %p154 = por %p152, %p153
      %p155 = scmp.ne.s32.totalorder %s141, %s142
      %p156 = scmp.eq.s32.totalorder %s29, 1
      %p157 = por %p155, %p156
      %p159 = scmp.ne.s32.totalorder %s142, %s158
      %p160 = scmp.eq.s32.totalorder %s29, 0
      %p161 = por %p159, %p160
      %s162 = ssub.s32 %s23, %s30
      %p163 = scmp.eq.s32.totalorder %s162, 0
      %s165 = sadd.s32 %s164, 1
      %s166 = scalar_select %p163, %s164, %s165
      %p169 = pneg %p163
      %p170 = scmp.eq.s32.totalorder %s23, 1
      %p171 = por %p169, %p170
      %p172 = scmp.ne.s32.totalorder %s164, %s167
      %p173 = scmp.eq.s32.totalorder %s23, 0
      %p174 = por %p172, %p173
      %p175 = scmp.ne.s32.totalorder %s164, %s167
      %p176 = scmp.eq.s32.totalorder %s28, 1
      %p177 = por %p175, %p176
      %p178 = scmp.ne.s32.totalorder %s167, %s168
      %p179 = scmp.eq.s32.totalorder %s28, 0
      %p180 = por %p178, %p179
      %p181 = scmp.ne.s32.totalorder %s167, %s168
      %p182 = scmp.eq.s32.totalorder %s29, 1
      %p183 = por %p181, %p182
      %p185 = scmp.ne.s32.totalorder %s168, %s184
      %p186 = scmp.eq.s32.totalorder %s29, 0
      %p187 = por %p185, %p186
      %s188 = ssub.s32 %s23, %s30
      %p189 = scmp.eq.s32.totalorder %s188, 0
      %s191 = sadd.s32 %s190, 1
      %s192 = scalar_select %p189, %s190, %s191
      %p195 = pneg %p189
      %p196 = scmp.eq.s32.totalorder %s23, 1
      %p197 = por %p195, %p196
      %p198 = scmp.ne.s32.totalorder %s190, %s193
      %p199 = scmp.eq.s32.totalorder %s23, 0
      %p200 = por %p198, %p199
      %p201 = scmp.ne.s32.totalorder %s190, %s193
      %p202 = scmp.eq.s32.totalorder %s28, 1
      %p203 = por %p201, %p202
      %p204 = scmp.ne.s32.totalorder %s193, %s194
      %p205 = scmp.eq.s32.totalorder %s28, 0
      %p206 = por %p204, %p205
      %p207 = scmp.ne.s32.totalorder %s193, %s194
      %p208 = scmp.eq.s32.totalorder %s29, 1
      %p209 = por %p207, %p208
      %p211 = scmp.ne.s32.totalorder %s194, %s210
      %p212 = scmp.eq.s32.totalorder %s29, 0
      %p213 = por %p211, %p212
      %s214 = ssub.s32 %s23, %s30
      %p215 = scmp.eq.s32.totalorder %s214, 0
      %s217 = sadd.s32 %s216, 1
      %s218 = scalar_select %p215, %s216, %s217
      %p221 = pneg %p215
      %p222 = scmp.eq.s32.totalorder %s23, 1
      %p223 = por %p221, %p222
      %p224 = scmp.ne.s32.totalorder %s216, %s219
      %p225 = scmp.eq.s32.totalorder %s23, 0
      %p226 = por %p224, %p225
      %p227 = scmp.ne.s32.totalorder %s216, %s219
      %p228 = scmp.eq.s32.totalorder %s28, 1
      %p229 = por %p227, %p228
      %p230 = scmp.ne.s32.totalorder %s219, %s220
      %p231 = scmp.eq.s32.totalorder %s28, 0
      %p232 = por %p230, %p231
      %p233 = scmp.ne.s32.totalorder %s219, %s220
      %p234 = scmp.eq.s32.totalorder %s29, 1
      %p235 = por %p233, %p234
      %p237 = scmp.ne.s32.totalorder %s220, %s236
      %p238 = scmp.eq.s32.totalorder %s29, 0
      %p239 = por %p237, %p238
      %s240 = ssub.s32 %s23, %s30
      %p241 = scmp.eq.s32.totalorder %s240, 0
      %s243 = sadd.s32 %s242, 1
      %s244 = scalar_select %p241, %s242, %s243
      %p247 = pneg %p241
      %p248 = scmp.eq.s32.totalorder %s23, 1
      %p249 = por %p247, %p248
      %p250 = scmp.ne.s32.totalorder %s242, %s245
      %p251 = scmp.eq.s32.totalorder %s23, 0
      %p252 = por %p250, %p251
      %p253 = scmp.ne.s32.totalorder %s242, %s245
      %p254 = scmp.eq.s32.totalorder %s28, 1
      %p255 = por %p253, %p254
      %p256 = scmp.ne.s32.totalorder %s245, %s246
      %p257 = scmp.eq.s32.totalorder %s28, 0
      %p258 = por %p256, %p257
      %p259 = scmp.ne.s32.totalorder %s245, %s246
      %p260 = scmp.eq.s32.totalorder %s29, 1
      %p261 = por %p259, %p260
      %p263 = scmp.ne.s32.totalorder %s246, %s262
      %p264 = scmp.eq.s32.totalorder %s29, 0
      %p265 = por %p263, %p264
      %s266 = ssub.s32 %s23, %s30
      %p267 = scmp.eq.s32.totalorder %s266, 0
      %s269 = sadd.s32 %s268, 1
      %s270 = scalar_select %p267, %s268, %s269
      %p273 = pneg %p267
      %p274 = scmp.eq.s32.totalorder %s23, 1
      %p275 = por %p273, %p274
      %p276 = scmp.ne.s32.totalorder %s268, %s271
      %p277 = scmp.eq.s32.totalorder %s23, 0
      %p278 = por %p276, %p277
      %p279 = scmp.ne.s32.totalorder %s268, %s271
      %p280 = scmp.eq.s32.totalorder %s28, 1
      %p281 = por %p279, %p280
      %p282 = scmp.ne.s32.totalorder %s271, %s272
      %p283 = scmp.eq.s32.totalorder %s28, 0
      %p284 = por %p282, %p283
      %p285 = scmp.ne.s32.totalorder %s271, %s272
      %p286 = scmp.eq.s32.totalorder %s29, 1
      %p287 = por %p285, %p286
      %p289 = scmp.ne.s32.totalorder %s272, %s288
      %p290 = scmp.eq.s32.totalorder %s29, 0
      %p291 = por %p289, %p290
      %s292 = ssub.s32 %s23, %s30
      %p293 = scmp.eq.s32.totalorder %s292, 0
      %s295 = sadd.s32 %s294, 1
      %s296 = scalar_select %p293, %s294, %s295
      %p299 = pneg %p293
      %p300 = scmp.eq.s32.totalorder %s23, 1
      %p301 = por %p299, %p300
      %p302 = scmp.ne.s32.totalorder %s294, %s297
      %p303 = scmp.eq.s32.totalorder %s23, 0
      %p304 = por %p302, %p303
      %p305 = scmp.ne.s32.totalorder %s294, %s297
      %p306 = scmp.eq.s32.totalorder %s28, 1
      %p307 = por %p305, %p306
      %p308 = scmp.ne.s32.totalorder %s297, %s298
      %p309 = scmp.eq.s32.totalorder %s28, 0
      %p310 = por %p308, %p309
      %p311 = scmp.ne.s32.totalorder %s297, %s298
      %p312 = scmp.eq.s32.totalorder %s29, 1
      %p313 = por %p311, %p312
      %p315 = scmp.ne.s32.totalorder %s298, %s314
      %p316 = scmp.eq.s32.totalorder %s29, 0
      %p317 = por %p315, %p316
      %s318 = ssub.s32 %s23, %s30
      %p319 = scmp.eq.s32.totalorder %s318, 0
      %s321 = sadd.s32 %s320, 1
      %s322 = scalar_select %p319, %s320, %s321
      %p325 = pneg %p319
      %p326 = scmp.eq.s32.totalorder %s23, 1
      %p327 = por %p325, %p326
      %p328 = scmp.ne.s32.totalorder %s320, %s323
      %p329 = scmp.eq.s32.totalorder %s23, 0
      %p330 = por %p328, %p329
      %p331 = scmp.ne.s32.totalorder %s320, %s323
      %p332 = scmp.eq.s32.totalorder %s28, 1
      %p333 = por %p331, %p332
      %p334 = scmp.ne.s32.totalorder %s323, %s324
      %p335 = scmp.eq.s32.totalorder %s28, 0
      %p336 = por %p334, %p335
      %p337 = scmp.ne.s32.totalorder %s323, %s324
      %p338 = scmp.eq.s32.totalorder %s29, 1
      %p339 = por %p337, %p338
      %p341 = scmp.ne.s32.totalorder %s324, %s340
      %p342 = scmp.eq.s32.totalorder %s29, 0
      %p343 = por %p341, %p342
      %s345 = sadd.s32 %s344, 1
      %p348 = scmp.eq.s32.totalorder %s23, 1
      %p349 = scmp.ne.s32.totalorder %s344, %s346
      %p350 = scmp.eq.s32.totalorder %s23, 0
      %p351 = por %p349, %p350
      %p352 = scmp.ne.s32.totalorder %s344, %s346
      %p353 = scmp.eq.s32.totalorder %s28, 1
      %p354 = por %p352, %p353
      %p355 = scmp.ne.s32.totalorder %s346, %s347
      %p356 = scmp.eq.s32.totalorder %s28, 0
      %p357 = por %p355, %p356
      %p358 = scmp.ne.s32.totalorder %s346, %s347
      %p359 = scmp.eq.s32.totalorder %s29, 1
      %p360 = por %p358, %p359
      %p362 = scmp.ne.s32.totalorder %s347, %s361
      %p363 = scmp.eq.s32.totalorder %s29, 0
      %p364 = por %p362, %p363
      %s366 = sadd.s32 %s365, 1
      %p369 = scmp.eq.s32.totalorder %s23, 1
      %p370 = scmp.ne.s32.totalorder %s365, %s367
      %p371 = scmp.eq.s32.totalorder %s23, 0
      %p372 = por %p370, %p371
      %p373 = scmp.ne.s32.totalorder %s365, %s367
      %p374 = scmp.eq.s32.totalorder %s28, 1
      %p375 = por %p373, %p374
      %p376 = scmp.ne.s32.totalorder %s367, %s368
      %p377 = scmp.eq.s32.totalorder %s28, 0
      %p378 = por %p376, %p377
      %p379 = scmp.ne.s32.totalorder %s367, %s368
      %p380 = scmp.eq.s32.totalorder %s29, 1
      %p381 = por %p379, %p380
      %p383 = scmp.ne.s32.totalorder %s368, %s382
      %p384 = scmp.eq.s32.totalorder %s29, 0
      %p385 = por %p383, %p384
      %p386 = scmp.le.s32.totalorder 1, %s23
      %p387 = scmp.lt.s32.totalorder %s23, 3
      %p388 = pnand %p386, %p387
      %p389 = pneg %p388
      // Predicated region
      $region9: #{forward.2} parent=5 // pred_check
        _
      $region10: #{forward.2} parent=5 // pred_check_branch
        %391 = sbr.rel (%p388) target = $region12
      $region11: #{forward.2} parent=5 // pred_region
        %s392 = ssub.s32 %s23, 1
        // Predicated region
        $region13: #{forward.2} parent=11 // pred_check
          %p393 = pneg %p44
        $region14: #{forward.2} parent=11 // pred_check_branch
          %395 = sbr.rel (%p393) target = $region16
        $region15: #{forward.2} parent=11 // pred_region
          _
        $region16: #{forward.2} parent=11 // pred_fallthru
          _
        // Predicated region
        $region17: #{forward.2} parent=11 // pred_check
          %p396 = pneg %p65
        $region18: #{forward.2} parent=11 // pred_check_branch
          %398 = sbr.rel (%p396) target = $region20
        $region19: #{forward.2} parent=11 // pred_region
          _
        $region20: #{forward.2} parent=11 // pred_fallthru
          _
        // Predicated region
        $region21: #{forward.2} parent=11 // pred_check
          %p399 = pneg %p86
        $region22: #{forward.2} parent=11 // pred_check_branch
          %401 = sbr.rel (%p399) target = $region24
        $region23: #{forward.2} parent=11 // pred_region
          _
        $region24: #{forward.2} parent=11 // pred_fallthru
          _
        // Predicated region
        $region25: #{forward.2} parent=11 // pred_check
          %p402 = pneg %p107
        $region26: #{forward.2} parent=11 // pred_check_branch
          %404 = sbr.rel (%p402) target = $region28
        $region27: #{forward.2} parent=11 // pred_region
          _
        $region28: #{forward.2} parent=11 // pred_fallthru
          _
        // Predicated region
        $region29: #{forward.2} parent=11 // pred_check
          %p405 = pneg %p128
        $region30: #{forward.2} parent=11 // pred_check_branch
          %407 = sbr.rel (%p405) target = $region32
        $region31: #{forward.2} parent=11 // pred_region
          _
        $region32: #{forward.2} parent=11 // pred_fallthru
          _
        // Predicated region
        $region33: #{forward.2} parent=11 // pred_check
          %p408 = pneg %p357
        $region34: #{forward.2} parent=11 // pred_check_branch
          %410 = sbr.rel (%p408) target = $region36
        $region35: #{forward.2} parent=11 // pred_region
          _
        $region36: #{forward.2} parent=11 // pred_fallthru
          _
      $region12: #{forward.2} parent=5 // pred_fallthru
        _
      %p411 = scmp.lt.s32.totalorder %s23, 2
      // Predicated region
      $region37: #{forward.2} parent=5 // pred_check
        %p412 = pneg %p411
      $region38: #{forward.2} parent=5 // pred_check_branch
        %414 = sbr.rel (%p412) target = $region40
      $region39: #{forward.2} parent=5 // pred_region
        // Predicated region
        $region41: #{forward.2} parent=39 // pred_check
          %p415 = pneg %p148
        $region42: #{forward.2} parent=39 // pred_check_branch
          %417 = sbr.rel (%p415) target = $region44
        $region43: #{forward.2} parent=39 // pred_region
          %p418 = scmp.lt.s32.totalorder %s23, 1
          %s419 = scalar_select %p418, %s23, 1
          %s420 = scalar_lea.vmem %s5, %s419
        $region44: #{forward.2} parent=39 // pred_fallthru
          _
        // Predicated region
        $region45: #{forward.2} parent=39 // pred_check
          %p421 = pneg %p174
        $region46: #{forward.2} parent=39 // pred_check_branch
          %423 = sbr.rel (%p421) target = $region48
        $region47: #{forward.2} parent=39 // pred_region
          %p424 = scmp.lt.s32.totalorder %s23, 1
          %s425 = scalar_select %p424, %s23, 1
          %s426 = smul.addr %s425, 144
          %s427 = smul.addr %s426, 4
          %s428 = scalar_lea.vmem %s6, %s427
        $region48: #{forward.2} parent=39 // pred_fallthru
          _
        // Predicated region
        $region49: #{forward.2} parent=39 // pred_check
          %p429 = pneg %p200
        $region50: #{forward.2} parent=39 // pred_check_branch
          %431 = sbr.rel (%p429) target = $region52
        $region51: #{forward.2} parent=39 // pred_region
          %s432 = sand.u32 %s190, 1
          %s433 = scalar_lea.sflag [#allocation4], %s432
          %s434 = sand.u32 %s190, 1
          %s435 = smul.addr %s434, 192
          %s436 = scalar_lea.vmem [#allocation3], %s435
          %438 = vsyncadd %s433, 0
          %s439 = smul.addr %s23, 48
          %s440 = smul.addr %s439, 4
          %s441 = scalar_lea.hbm %s7, %s440
          %s442 = sshll.u32 %s441, 4
          %s443 = int_to_ptr.hbm [resolvable:$true] %s442
          %s444 = sshll.u32 %s436, 4
          %s445 = int_to_ptr.vmem [resolvable:$true] %s444
          %450 = dma.hbm_to_vmem [thread:$0]  %s443, 3072, %s445, %s433, 64, 64, 4
        $region52: #{forward.2} parent=39 // pred_fallthru
          _
        // Predicated region
        $region53: #{forward.2} parent=39 // pred_check
          %p451 = pneg %p226
        $region54: #{forward.2} parent=39 // pred_check_branch
          %453 = sbr.rel (%p451) target = $region56
        $region55: #{forward.2} parent=39 // pred_region
          %p454 = scmp.lt.s32.totalorder %s23, 1
          %s455 = scalar_select %p454, %s23, 1
          %s456 = scalar_lea.vmem %s8, %s455
        $region56: #{forward.2} parent=39 // pred_fallthru
          _
        // Predicated region
        $region57: #{forward.2} parent=39 // pred_check
          %p457 = pneg %p252
        $region58: #{forward.2} parent=39 // pred_check_branch
          %459 = sbr.rel (%p457) target = $region60
        $region59: #{forward.2} parent=39 // pred_region
          %p460 = scmp.lt.s32.totalorder %s23, 1
          %s461 = scalar_select %p460, %s23, 1
          %s462 = smul.addr %s461, 128
          %s463 = smul.addr %s462, 4
          %s464 = scalar_lea.vmem %s9, %s463
        $region60: #{forward.2} parent=39 // pred_fallthru
          _
        // Predicated region
        $region61: #{forward.2} parent=39 // pred_check
          %p465 = pneg %p278
        $region62: #{forward.2} parent=39 // pred_check_branch
          %467 = sbr.rel (%p465) target = $region64
        $region63: #{forward.2} parent=39 // pred_region
          %p468 = scmp.lt.s32.totalorder %s23, 1
          %s469 = scalar_select %p468, %s23, 1
          %s470 = smul.addr %s469, 8
          %s471 = scalar_lea.vmem %s10, %s470
        $region64: #{forward.2} parent=39 // pred_fallthru
          _
        // Predicated region
        $region65: #{forward.2} parent=39 // pred_check
          %p472 = pneg %p304
        $region66: #{forward.2} parent=39 // pred_check_branch
          %474 = sbr.rel (%p472) target = $region68
        $region67: #{forward.2} parent=39 // pred_region
          %p475 = scmp.lt.s32.totalorder %s23, 1
          %s476 = scalar_select %p475, %s23, 1
          %s477 = smul.addr %s476, 64
          %s478 = smul.addr %s477, 4
          %s479 = scalar_lea.vmem %s11, %s478
        $region68: #{forward.2} parent=39 // pred_fallthru
          _
        // Predicated region
        $region69: #{forward.2} parent=39 // pred_check
          %p480 = pneg %p330
        $region70: #{forward.2} parent=39 // pred_check_branch
          %482 = sbr.rel (%p480) target = $region72
        $region71: #{forward.2} parent=39 // pred_region
          %p483 = scmp.lt.s32.totalorder %s23, 1
          %s484 = scalar_select %p483, %s23, 1
          %s485 = scalar_lea.vmem %s12, %s484
        $region72: #{forward.2} parent=39 // pred_fallthru
          _
      $region40: #{forward.2} parent=5 // pred_fallthru
        _
      %p486 = scmp.le.s32.totalorder 1, %s23
      %p487 = scmp.lt.s32.totalorder %s23, 3
      %p488 = pnand %p486, %p487
      %p489 = pneg %p488
      // Predicated region
      $region73: #{forward.2} parent=5 // pred_check
        _
      $region74: #{forward.2} parent=5 // pred_check_branch
        %491 = sbr.rel (%p488) target = $region76
      $region75: #{forward.2} parent=5 // pred_region
        %s492 = ssub.s32 %s23, 1
        %s493 = sand.u32 %s193, 1
        %s494 = scalar_lea.sflag [#allocation4], %s493
        %s495 = sand.u32 %s193, 1
        %s496 = smul.addr %s495, 192
        %s497 = scalar_lea.vmem [#allocation3], %s496
        // Predicated region
        $region77: #{forward.2} parent=75 // pred_check
          %p498 = pneg %p206
        $region78: #{forward.2} parent=75 // pred_check_branch
          %500 = sbr.rel (%p498) target = $region80
        $region79: #{forward.2} parent=75 // pred_region
          %502 = dma.done %s494, 3072
        $region80: #{forward.2} parent=75 // pred_fallthru
          _
        %p503 = pneg %p44
        %p504 = pneg %p41
        %p505 = pneg %p65
        %p506 = pneg %p62
        %p507 = pneg %p86
        %p508 = pneg %p83
        %p509 = pneg %p107
        %p510 = pneg %p104
        %p511 = pneg %p128
        %p512 = pneg %p125
        %p513 = scmp.lt.s32.totalorder %s28, 1
        %s514 = scalar_select %p513, %s28, 1
        %s515 = scalar_lea.vmem %s5, %s514
        %p516 = pneg %p154
        %p517 = pneg %p151
        %p518 = scmp.lt.s32.totalorder %s28, 1
        %s519 = scalar_select %p518, %s28, 1
        %s520 = smul.addr %s519, 144
        %s521 = smul.addr %s520, 4
        %s522 = scalar_lea.vmem %s6, %s521
        %p523 = pneg %p180
        %p524 = pneg %p177
        %s525 = sand.u32 %s193, 1
        %s526 = scalar_lea.sflag [#allocation4], %s525
        %s527 = sand.u32 %s193, 1
        %s528 = smul.addr %s527, 192
        %s529 = scalar_lea.vmem [#allocation3], %s528
        %p530 = pneg %p206
        %p531 = pneg %p203
        %p532 = scmp.lt.s32.totalorder %s28, 1
        %s533 = scalar_select %p532, %s28, 1
        %s534 = scalar_lea.vmem %s8, %s533
        %p535 = pneg %p232
        %p536 = pneg %p229
        %p537 = scmp.lt.s32.totalorder %s28, 1
        %s538 = scalar_select %p537, %s28, 1
        %s539 = smul.addr %s538, 128
        %s540 = smul.addr %s539, 4
        %s541 = scalar_lea.vmem %s9, %s540
        %p542 = pneg %p258
        %p543 = pneg %p255
        %p544 = scmp.lt.s32.totalorder %s28, 1
        %s545 = scalar_select %p544, %s28, 1
        %s546 = smul.addr %s545, 8
        %s547 = scalar_lea.vmem %s10, %s546
        %p548 = pneg %p284
        %p549 = pneg %p281
        %p550 = scmp.lt.s32.totalorder %s28, 1
        %s551 = scalar_select %p550, %s28, 1
        %s552 = smul.addr %s551, 64
        %s553 = smul.addr %s552, 4
        %s554 = scalar_lea.vmem %s11, %s553
        %p555 = pneg %p310
        %p556 = pneg %p307
        %p557 = scmp.lt.s32.totalorder %s28, 1
        %s558 = scalar_select %p557, %s28, 1
        %s559 = scalar_lea.vmem %s12, %s558
        %p560 = pneg %p336
        %p561 = pneg %p333
        %p562 = pneg %p357
        %p563 = pneg %p354
        %p564 = pneg %p378
        %p565 = pneg %p375
        %p566 = scmp.lt.s32.totalorder %s28, 1
        %s567 = scalar_select %p566, %s28, 1
        %s568 = scalar_lea.vmem %s5, %s567
        %p569 = scmp.lt.s32.totalorder %s28, 1
        %s570 = scalar_select %p569, %s28, 1
        %s571 = smul.addr %s570, 144
        %s572 = smul.addr %s571, 4
        %s573 = scalar_lea.vmem %s6, %s572
        %p574 = scmp.lt.s32.totalorder %s28, 1
        %s575 = scalar_select %p574, %s28, 1
        %s576 = scalar_lea.vmem %s8, %s575
        %p577 = scmp.lt.s32.totalorder %s28, 1
        %s578 = scalar_select %p577, %s28, 1
        %s579 = smul.addr %s578, 128
        %s580 = smul.addr %s579, 4
        %s581 = scalar_lea.vmem %s9, %s580
        %p582 = scmp.lt.s32.totalorder %s28, 1
        %s583 = scalar_select %p582, %s28, 1
        %s584 = smul.addr %s583, 8
        %s585 = scalar_lea.vmem %s10, %s584
        %p586 = scmp.lt.s32.totalorder %s28, 1
        %s587 = scalar_select %p586, %s28, 1
        %s588 = smul.addr %s587, 64
        %s589 = smul.addr %s588, 4
        %s590 = scalar_lea.vmem %s11, %s589
        %p591 = scmp.lt.s32.totalorder %s28, 1
        %s592 = scalar_select %p591, %s28, 1
        %s593 = scalar_lea.vmem %s12, %s592
        %p595 = scmp.eq.s32.totalorder %s28, 0
        // Predicated region
        $region81: #{forward.2} parent=75 // pred_check
          %p596 = pneg %p595
        $region82: #{forward.2} parent=75 // pred_check_branch
          %598 = sbr.rel (%p596) target = $region84
        $region83: #{forward.2} parent=75 // pred_region
          %v599 = vld [vmem:[%s3] sm:$0x1]
          %v600 = vld [vmem:[%s1] sm:$0xff]
          %v601 = vld [vmem:[%s1 + $0x8] sm:$0xff]
          %v602 = vmul.f32 %v600, 0.088388346
          %v603 = vmul.f32 %v601, 0.088388346
          %v605 = vperm.slane %v599, 0
          %v607 = vadd.f32 %v605, %v602
          %v608 = vadd.f32 %v605, %v603
          %v609 = vld [vmem:[%s0] sm:$0xff]
          %v610 = vld [vmem:[%s0 + $0x8] sm:$0xff]
          %v611 = vld [vmem:[%s2] sm:$0x1]
          %613 = vset.pattern.permute.xlu0 0
          %614 = vperm.xlu0 %613, %v609
          %v615 = vpop.permute.xlu0 %614
          %618 = vset.pattern.permute.xlu0 0
          %619 = vperm.xlu0 %618, %v610
          %v620 = vpop.permute.xlu0 %619
          %v622 = vperm.slane %v611, 0
          %v623 = vmul.f32 %v615, %v622
          %v624 = vmul.f32 %v620, %v622
          %v625 = vadd.f32 %v607, %v623
          %v626 = vadd.f32 %v608, %v624
          %v627 = vld [vmem:[%s2 + $0x1] sm:$0x1]
          %628 = vset.pattern.permute.xlu0 1
          %629 = vperm.xlu0 %628, %v609
          %v630 = vpop.permute.xlu0 %629
          %632 = vset.pattern.permute.xlu0 1
          %633 = vperm.xlu0 %632, %v610
          %v634 = vpop.permute.xlu0 %633
          %v636 = vperm.slane %v627, 0
          %v637 = vmul.f32 %v630, %v636
          %v638 = vmul.f32 %v634, %v636
          %v639 = vadd.f32 %v625, %v637
          %v640 = vadd.f32 %v626, %v638
          %v641 = vld [vmem:[%s2 + $0x2] sm:$0x1]
          %642 = vset.pattern.permute.xlu0 2
          %643 = vperm.xlu0 %642, %v609
          %v644 = vpop.permute.xlu0 %643
          %646 = vset.pattern.permute.xlu0 2
          %647 = vperm.xlu0 %646, %v610
          %v648 = vpop.permute.xlu0 %647
          %v650 = vperm.slane %v641, 0
          %v651 = vmul.f32 %v644, %v650
          %v652 = vmul.f32 %v648, %v650
          %v653 = vadd.f32 %v639, %v651
          %v654 = vadd.f32 %v640, %v652
          %v655 = vld [vmem:[%s2 + $0x3] sm:$0x1]
          %656 = vset.pattern.permute.xlu0 3
          %657 = vperm.xlu0 %656, %v609
          %v658 = vpop.permute.xlu0 %657
          %660 = vset.pattern.permute.xlu0 3
          %661 = vperm.xlu0 %660, %v610
          %v662 = vpop.permute.xlu0 %661
          %v664 = vperm.slane %v655, 0
          %v665 = vmul.f32 %v658, %v664
          %v666 = vmul.f32 %v662, %v664
          %v667 = vadd.f32 %v653, %v665
          %v668 = vadd.f32 %v654, %v666
          %669 = vst [vmem:[#allocation2] sm:$0xff] %v667
          %670 = vst [vmem:[#allocation2 + $0x8] sm:$0xff] %v668
          %s671 = scalar_lea.vmem %s0, 16
          %v672 = vld [vmem:[%s671] sm:$0xff]
          %v673 = vld [vmem:[%s671 + $0x8] sm:$0xff]
          %v674 = vld [vmem:[%s2] sm:$0x1]
          %676 = vset.pattern.permute.xlu0 0
          %677 = vperm.xlu0 %676, %v672
          %v678 = vpop.permute.xlu0 %677
          %681 = vset.pattern.permute.xlu0 0
          %682 = vperm.xlu0 %681, %v673
          %v683 = vpop.permute.xlu0 %682
          %v685 = vperm.slane %v674, 0
          %v686 = vmul.f32 %v678, %v685
          %v687 = vmul.f32 %v683, %v685
          %v688 = vadd.f32 %v607, %v686
          %v689 = vadd.f32 %v608, %v687
          %v690 = vld [vmem:[%s2 + $0x1] sm:$0x1]
          %691 = vset.pattern.permute.xlu0 1
          %692 = vperm.xlu0 %691, %v672
          %v693 = vpop.permute.xlu0 %692
          %695 = vset.pattern.permute.xlu0 1
          %696 = vperm.xlu0 %695, %v673
          %v697 = vpop.permute.xlu0 %696
          %v699 = vperm.slane %v690, 0
          %v700 = vmul.f32 %v693, %v699
          %v701 = vmul.f32 %v697, %v699
          %v702 = vadd.f32 %v688, %v700
          %v703 = vadd.f32 %v689, %v701
          %v704 = vld [vmem:[%s2 + $0x2] sm:$0x1]
          %705 = vset.pattern.permute.xlu0 2
          %706 = vperm.xlu0 %705, %v672
          %v707 = vpop.permute.xlu0 %706
          %709 = vset.pattern.permute.xlu0 2
          %710 = vperm.xlu0 %709, %v673
          %v711 = vpop.permute.xlu0 %710
          %v713 = vperm.slane %v704, 0
          %v714 = vmul.f32 %v707, %v713
          %v715 = vmul.f32 %v711, %v713
          %v716 = vadd.f32 %v702, %v714
          %v717 = vadd.f32 %v703, %v715
          %v718 = vld [vmem:[%s2 + $0x3] sm:$0x1]
          %719 = vset.pattern.permute.xlu0 3
          %720 = vperm.xlu0 %719, %v672
          %v721 = vpop.permute.xlu0 %720
          %723 = vset.pattern.permute.xlu0 3
          %724 = vperm.xlu0 %723, %v673
          %v725 = vpop.permute.xlu0 %724
          %v727 = vperm.slane %v718, 0
          %v728 = vmul.f32 %v721, %v727
          %v729 = vmul.f32 %v725, %v727
          %v730 = vadd.f32 %v716, %v728
          %v731 = vadd.f32 %v717, %v729
          %732 = vst [vmem:[#allocation2 + $0x10] sm:$0xff] %v730
          %733 = vst [vmem:[#allocation2 + $0x18] sm:$0xff] %v731
        $region84: #{forward.2} parent=75 // pred_fallthru
          _
        %v734 = vld [vmem:[#allocation2] sm:$0xff]
        %v735 = vld [vmem:[#allocation2 + $0x8] sm:$0xff]
        %v736 = vld [vmem:[#allocation2 + $0x10] sm:$0xff]
        %v737 = vld [vmem:[#allocation2 + $0x18] sm:$0xff]
        %v738 = vld [vmem:[%s568] sm:$0x1]
        %v739 = vmul.f32 %v734, %v734
        %v740 = vmul.f32 %v735, %v735
        %v741 = vmul.f32 %v736, %v736
        %v742 = vmul.f32 %v737, %v737
        %743 = vadd.xlane.f32.xlu0 %v739
        %v744 = vpop.xlane.xlu0 %743
        %745 = vadd.xlane.f32.xlu0 %v740
        %v746 = vpop.xlane.xlu0 %745
        %747 = vadd.xlane.f32.xlu0 %v741
        %v748 = vpop.xlane.xlu0 %747
        %749 = vadd.xlane.f32.xlu0 %v742
        %v750 = vpop.xlane.xlu0 %749
        %v751 = vrsqrt.pop %v744
        %v752 = vmul.f32 %v751, %v744
        %v753 = vmul.f32 %v752, %v751
        %v754 = vmul.f32 0.5, %v753
        %v755 = vsub.f32 1.5, %v754
        %v756 = vmul.f32 %v751, %v755
        %v757 = vmul.f32 %v744, %v756
        %vm758 = vcmp.eq.f32.partialorder %v744, inf
        %v759 = vsel %vm758, %v744, %v757
        %vm760 = vcmp.eq.f32.partialorder %v744, 0.0
        %v761 = vand.u32 %v744, 2147483648
        %v762 = vsel %vm760, %v761, %v759
        %v763 = vrsqrt.pop %v746
        %v764 = vmul.f32 %v763, %v746
        %v765 = vmul.f32 %v764, %v763
        %v766 = vmul.f32 0.5, %v765
        %v767 = vsub.f32 1.5, %v766
        %v768 = vmul.f32 %v763, %v767
        %v769 = vmul.f32 %v746, %v768
        %vm770 = vcmp.eq.f32.partialorder %v746, inf
        %v771 = vsel %vm770, %v746, %v769
        %vm772 = vcmp.eq.f32.partialorder %v746, 0.0
        %v773 = vand.u32 %v746, 2147483648
        %v774 = vsel %vm772, %v773, %v771
        %v775 = vrsqrt.pop %v748
        %v776 = vmul.f32 %v775, %v748
        %v777 = vmul.f32 %v776, %v775
        %v778 = vmul.f32 0.5, %v777
        %v779 = vsub.f32 1.5, %v778
        %v780 = vmul.f32 %v775, %v779
        %v781 = vmul.f32 %v748, %v780
        %vm782 = vcmp.eq.f32.partialorder %v748, inf
        %v783 = vsel %vm782, %v748, %v781
        %vm784 = vcmp.eq.f32.partialorder %v748, 0.0
        %v785 = vand.u32 %v748, 2147483648
        %v786 = vsel %vm784, %v785, %v783
        %v787 = vrsqrt.pop %v750
        %v788 = vmul.f32 %v787, %v750
        %v789 = vmul.f32 %v788, %v787
        %v790 = vmul.f32 0.5, %v789
        %v791 = vsub.f32 1.5, %v790
        %v792 = vmul.f32 %v787, %v791
        %v793 = vmul.f32 %v750, %v792
        %vm794 = vcmp.eq.f32.partialorder %v750, inf
        %v795 = vsel %vm794, %v750, %v793
        %vm796 = vcmp.eq.f32.partialorder %v750, 0.0
        %v797 = vand.u32 %v750, 2147483648
        %v798 = vsel %vm796, %v797, %v795
        %v799 = vmax.f32 %v762, 1e-12
        %v800 = vmax.f32 %v774, 1e-12
        %v801 = vmax.f32 %v786, 1e-12
        %v802 = vmax.f32 %v798, 1e-12
        %v803 = vrcp.pop %v799
        %v804 = vmul.f32 %v799, %v803
        %v805 = vsub.f32 1.0, %v804
        %v806 = vmul.f32 %v803, %v805
        %v807 = vadd.f32 %v803, %v806
        %vm808 = vweird.f32 %v799
        %vm809 = vweird.f32 %v803
        %vm810 = vmor %vm808, %vm809
        %v811 = vsel %vm810, %v803, %v807
        %v812 = vand.u32 2147483647, %v799
        %vm813 = vcmp.eq.f32.partialorder %v812, 8.507059e+37
        %v814 = vand.u32 %v799, 2147483648
        %v815 = vor.u32 1.1754944e-38, %v814
        %v816 = vsel %vm813, %v815, %v811
        %v817 = vmul.f32 %v734, %v816
        %v818 = vrcp.pop %v800
        %v819 = vmul.f32 %v800, %v818
        %v820 = vsub.f32 1.0, %v819
        %v821 = vmul.f32 %v818, %v820
        %v822 = vadd.f32 %v818, %v821
        %vm823 = vweird.f32 %v800
        %vm824 = vweird.f32 %v818
        %vm825 = vmor %vm823, %vm824
        %v826 = vsel %vm825, %v818, %v822
        %v827 = vand.u32 2147483647, %v800
        %vm828 = vcmp.eq.f32.partialorder %v827, 8.507059e+37
        %v829 = vand.u32 %v800, 2147483648
        %v830 = vor.u32 1.1754944e-38, %v829
        %v831 = vsel %vm828, %v830, %v826
        %v832 = vmul.f32 %v735, %v831
        %v833 = vrcp.pop %v801
        %v834 = vmul.f32 %v801, %v833
        %v835 = vsub.f32 1.0, %v834
        %v836 = vmul.f32 %v833, %v835
        %v837 = vadd.f32 %v833, %v836
        %vm838 = vweird.f32 %v801
        %vm839 = vweird.f32 %v833
        %vm840 = vmor %vm838, %vm839
        %v841 = vsel %vm840, %v833, %v837
        %v842 = vand.u32 2147483647, %v801
        %vm843 = vcmp.eq.f32.partialorder %v842, 8.507059e+37
        %v844 = vand.u32 %v801, 2147483648
        %v845 = vor.u32 1.1754944e-38, %v844
        %v846 = vsel %vm843, %v845, %v841
        %v847 = vmul.f32 %v736, %v846
        %v848 = vrcp.pop %v802
        %v849 = vmul.f32 %v802, %v848
        %v850 = vsub.f32 1.0, %v849
        %v851 = vmul.f32 %v848, %v850
        %v852 = vadd.f32 %v848, %v851
        %vm853 = vweird.f32 %v802
        %vm854 = vweird.f32 %v848
        %vm855 = vmor %vm853, %vm854
        %v856 = vsel %vm855, %v848, %v852
        %v857 = vand.u32 2147483647, %v802
        %vm858 = vcmp.eq.f32.partialorder %v857, 8.507059e+37
        %v859 = vand.u32 %v802, 2147483648
        %v860 = vor.u32 1.1754944e-38, %v859
        %v861 = vsel %vm858, %v860, %v856
        %v862 = vmul.f32 %v737, %v861
        %v863 = vmul.f32 %v817, 11.313708
        %v864 = vmul.f32 %v832, 11.313708
        %v865 = vmul.f32 %v847, 11.313708
        %v866 = vmul.f32 %v862, 11.313708
        %v868 = vperm.slane %v738, 0
        %v870 = vmul.f32 %v863, %v868
        %v871 = vmul.f32 %v864, %v868
        %v872 = vmul.f32 %v865, %v868
        %v873 = vmul.f32 %v866, %v868
        %v874 = vpack.c.bf16 %v871, %v870
        %v875 = vpack.c.bf16 %v873, %v872
        %v876 = vld [vmem:[%s573] sm:$0xff]
        %v877 = vld [vmem:[%s573 + $0x8] sm:$0xff]
        %v878 = vld [vmem:[%s573 + $0x10] sm:$0xff]
        %v879 = vld [vmem:[%s573 + $0x18] sm:$0xff]
        %v880 = vld [vmem:[%s573 + $0x20] sm:$0xf]
        %v881 = vld [vmem:[%s573 + $0x24] sm:$0xff]
        %v882 = vld [vmem:[%s573 + $0x2c] sm:$0xff]
        %v883 = vld [vmem:[%s573 + $0x34] sm:$0xff]
        %v884 = vld [vmem:[%s573 + $0x3c] sm:$0xff]
        %v885 = vld [vmem:[%s573 + $0x44] sm:$0xf]
        %v886 = vld [vmem:[%s573 + $0x48] sm:$0xff]
        %v887 = vld [vmem:[%s573 + $0x50] sm:$0xff]
        %v888 = vld [vmem:[%s573 + $0x58] sm:$0xff]
        %v889 = vld [vmem:[%s573 + $0x60] sm:$0xff]
        %v890 = vld [vmem:[%s573 + $0x68] sm:$0xf]
        %v891 = vld [vmem:[%s573 + $0x6c] sm:$0xff]
        %v892 = vld [vmem:[%s573 + $0x74] sm:$0xff]
        %v893 = vld [vmem:[%s573 + $0x7c] sm:$0xff]
        %v894 = vld [vmem:[%s573 + $0x84] sm:$0xff]
        %v895 = vld [vmem:[%s573 + $0x8c] sm:$0xf]
        %v896 = vld [vmem:[%s573 + $0x90] sm:$0xff]
        %v897 = vld [vmem:[%s573 + $0x98] sm:$0xff]
        %v898 = vld [vmem:[%s573 + $0xa0] sm:$0xff]
        %v899 = vld [vmem:[%s573 + $0xa8] sm:$0xff]
        %v900 = vld [vmem:[%s573 + $0xb0] sm:$0xf]
        %v901 = vld [vmem:[%s573 + $0xb4] sm:$0xff]
        %v902 = vld [vmem:[%s573 + $0xbc] sm:$0xff]
        %v903 = vld [vmem:[%s573 + $0xc4] sm:$0xff]
        %v904 = vld [vmem:[%s573 + $0xcc] sm:$0xff]
        %v905 = vld [vmem:[%s573 + $0xd4] sm:$0xf]
        %v906 = vld [vmem:[%s573 + $0xd8] sm:$0xff]
        %v907 = vld [vmem:[%s573 + $0xe0] sm:$0xff]
        %v908 = vld [vmem:[%s573 + $0xe8] sm:$0xff]
        %v909 = vld [vmem:[%s573 + $0xf0] sm:$0xff]
        %v910 = vld [vmem:[%s573 + $0xf8] sm:$0xf]
        %v911 = vld [vmem:[%s573 + $0xfc] sm:$0xff]
        %v912 = vld [vmem:[%s573 + $0x104] sm:$0xff]
        %v913 = vld [vmem:[%s573 + $0x10c] sm:$0xff]
        %v914 = vld [vmem:[%s573 + $0x114] sm:$0xff]
        %v915 = vld [vmem:[%s573 + $0x11c] sm:$0xf]
        %v916 = vld [vmem:[%s573 + $0x120] sm:$0xff]
        %v917 = vld [vmem:[%s573 + $0x128] sm:$0xff]
        %v918 = vld [vmem:[%s573 + $0x130] sm:$0xff]
        %v919 = vld [vmem:[%s573 + $0x138] sm:$0xff]
        %v920 = vld [vmem:[%s573 + $0x140] sm:$0xf]
        %v921 = vld [vmem:[%s573 + $0x144] sm:$0xff]
        %v922 = vld [vmem:[%s573 + $0x14c] sm:$0xff]
        %v923 = vld [vmem:[%s573 + $0x154] sm:$0xff]
        %v924 = vld [vmem:[%s573 + $0x15c] sm:$0xff]
        %v925 = vld [vmem:[%s573 + $0x164] sm:$0xf]
        %v926 = vld [vmem:[%s573 + $0x168] sm:$0xff]
        %v927 = vld [vmem:[%s573 + $0x170] sm:$0xff]
        %v928 = vld [vmem:[%s573 + $0x178] sm:$0xff]
        %v929 = vld [vmem:[%s573 + $0x180] sm:$0xff]
        %v930 = vld [vmem:[%s573 + $0x188] sm:$0xf]
        %v931 = vld [vmem:[%s573 + $0x18c] sm:$0xff]
        %v932 = vld [vmem:[%s573 + $0x194] sm:$0xff]
        %v933 = vld [vmem:[%s573 + $0x19c] sm:$0xff]
        %v934 = vld [vmem:[%s573 + $0x1a4] sm:$0xff]
        %v935 = vld [vmem:[%s573 + $0x1ac] sm:$0xf]
        %v936 = vld [vmem:[%s573 + $0x1b0] sm:$0xff]
        %v937 = vld [vmem:[%s573 + $0x1b8] sm:$0xff]
        %v938 = vld [vmem:[%s573 + $0x1c0] sm:$0xff]
        %v939 = vld [vmem:[%s573 + $0x1c8] sm:$0xff]
        %v940 = vld [vmem:[%s573 + $0x1d0] sm:$0xf]
        %v941 = vld [vmem:[%s573 + $0x1d4] sm:$0xff]
        %v942 = vld [vmem:[%s573 + $0x1dc] sm:$0xff]
        %v943 = vld [vmem:[%s573 + $0x1e4] sm:$0xff]
        %v944 = vld [vmem:[%s573 + $0x1ec] sm:$0xff]
        %v945 = vld [vmem:[%s573 + $0x1f4] sm:$0xf]
        %v946 = vld [vmem:[%s573 + $0x1f8] sm:$0xff]
        %v947 = vld [vmem:[%s573 + $0x200] sm:$0xff]
        %v948 = vld [vmem:[%s573 + $0x208] sm:$0xff]
        %v949 = vld [vmem:[%s573 + $0x210] sm:$0xff]
        %v950 = vld [vmem:[%s573 + $0x218] sm:$0xf]
        %v951 = vld [vmem:[%s573 + $0x21c] sm:$0xff]
        %v952 = vld [vmem:[%s573 + $0x224] sm:$0xff]
        %v953 = vld [vmem:[%s573 + $0x22c] sm:$0xff]
        %v954 = vld [vmem:[%s573 + $0x234] sm:$0xff]
        %v955 = vld [vmem:[%s573 + $0x23c] sm:$0xf]
        %v1036 = vunpack.c.l.b16 %v876
        %v1037 = vunpack.c.h.b16 %v876
        %v1038 = vunpack.c.l.b16 %v877
        %v1039 = vunpack.c.h.b16 %v877
        %v1040 = vunpack.c.l.b16 %v878
        %v1041 = vunpack.c.h.b16 %v878
        %v1042 = vunpack.c.l.b16 %v879
        %v1043 = vunpack.c.h.b16 %v879
        %v1044 = vunpack.c.l.b16 %v880
        %v1045 = vunpack.c.l.b16 %v881
        %v1046 = vunpack.c.h.b16 %v881
        %v1047 = vunpack.c.l.b16 %v882
        %v1048 = vunpack.c.h.b16 %v882
        %v1049 = vunpack.c.l.b16 %v883
        %v1050 = vunpack.c.h.b16 %v883
        %v1051 = vunpack.c.l.b16 %v884
        %v1052 = vunpack.c.h.b16 %v884
        %v1053 = vunpack.c.l.b16 %v885
        %v1054 = vunpack.c.l.b16 %v886
        %v1055 = vunpack.c.h.b16 %v886
        %v1056 = vunpack.c.l.b16 %v887
        %v1057 = vunpack.c.h.b16 %v887
        %v1058 = vunpack.c.l.b16 %v888
        %v1059 = vunpack.c.h.b16 %v888
        %v1060 = vunpack.c.l.b16 %v889
        %v1061 = vunpack.c.h.b16 %v889
        %v1062 = vunpack.c.l.b16 %v890
        %v1063 = vunpack.c.l.b16 %v891
        %v1064 = vunpack.c.h.b16 %v891
        %v1065 = vunpack.c.l.b16 %v892
        %v1066 = vunpack.c.h.b16 %v892
        %v1067 = vunpack.c.l.b16 %v893
        %v1068 = vunpack.c.h.b16 %v893
        %v1069 = vunpack.c.l.b16 %v894
        %v1070 = vunpack.c.h.b16 %v894
        %v1071 = vunpack.c.l.b16 %v895
        %v1072 = vunpack.c.l.b16 %v896
        %v1073 = vunpack.c.h.b16 %v896
        %v1074 = vunpack.c.l.b16 %v897
        %v1075 = vunpack.c.h.b16 %v897
        %v1076 = vunpack.c.l.b16 %v898
        %v1077 = vunpack.c.h.b16 %v898
        %v1078 = vunpack.c.l.b16 %v899
        %v1079 = vunpack.c.h.b16 %v899
        %v1080 = vunpack.c.l.b16 %v900
        %v1081 = vunpack.c.l.b16 %v901
        %v1082 = vunpack.c.h.b16 %v901
        %v1083 = vunpack.c.l.b16 %v902
        %v1084 = vunpack.c.h.b16 %v902
        %v1085 = vunpack.c.l.b16 %v903
        %v1086 = vunpack.c.h.b16 %v903
        %v1087 = vunpack.c.l.b16 %v904
        %v1088 = vunpack.c.h.b16 %v904
        %v1089 = vunpack.c.l.b16 %v905
        %v1090 = vunpack.c.l.b16 %v906
        %v1091 = vunpack.c.h.b16 %v906
        %v1092 = vunpack.c.l.b16 %v907
        %v1093 = vunpack.c.h.b16 %v907
        %v1094 = vunpack.c.l.b16 %v908
        %v1095 = vunpack.c.h.b16 %v908
        %v1096 = vunpack.c.l.b16 %v909
        %v1097 = vunpack.c.h.b16 %v909
        %v1098 = vunpack.c.l.b16 %v910
        %v1099 = vunpack.c.l.b16 %v911
        %v1100 = vunpack.c.h.b16 %v911
        %v1101 = vunpack.c.l.b16 %v912
        %v1102 = vunpack.c.h.b16 %v912
        %v1103 = vunpack.c.l.b16 %v913
        %v1104 = vunpack.c.h.b16 %v913
        %v1105 = vunpack.c.l.b16 %v914
        %v1106 = vunpack.c.h.b16 %v914
        %v1107 = vunpack.c.l.b16 %v915
        %v1108 = vunpack.c.l.b16 %v916
        %v1109 = vunpack.c.h.b16 %v916
        %v1110 = vunpack.c.l.b16 %v917
        %v1111 = vunpack.c.h.b16 %v917
        %v1112 = vunpack.c.l.b16 %v918
        %v1113 = vunpack.c.h.b16 %v918
        %v1114 = vunpack.c.l.b16 %v919
        %v1115 = vunpack.c.h.b16 %v919
        %v1116 = vunpack.c.l.b16 %v920
        %v1117 = vunpack.c.l.b16 %v921
        %v1118 = vunpack.c.h.b16 %v921
        %v1119 = vunpack.c.l.b16 %v922
        %v1120 = vunpack.c.h.b16 %v922
        %v1121 = vunpack.c.l.b16 %v923
        %v1122 = vunpack.c.h.b16 %v923
        %v1123 = vunpack.c.l.b16 %v924
        %v1124 = vunpack.c.h.b16 %v924
        %v1125 = vunpack.c.l.b16 %v925
        %v1126 = vunpack.c.l.b16 %v926
        %v1127 = vunpack.c.h.b16 %v926
        %v1128 = vunpack.c.l.b16 %v927
        %v1129 = vunpack.c.h.b16 %v927
        %v1130 = vunpack.c.l.b16 %v928
        %v1131 = vunpack.c.h.b16 %v928
        %v1132 = vunpack.c.l.b16 %v929
        %v1133 = vunpack.c.h.b16 %v929
        %v1134 = vunpack.c.l.b16 %v930
        %v1135 = vunpack.c.l.b16 %v931
        %v1136 = vunpack.c.h.b16 %v931
        %v1137 = vunpack.c.l.b16 %v932
        %v1138 = vunpack.c.h.b16 %v932
        %v1139 = vunpack.c.l.b16 %v933
        %v1140 = vunpack.c.h.b16 %v933
        %v1141 = vunpack.c.l.b16 %v934
        %v1142 = vunpack.c.h.b16 %v934
        %v1143 = vunpack.c.l.b16 %v935
        %v1144 = vunpack.c.l.b16 %v936
        %v1145 = vunpack.c.h.b16 %v936
        %v1146 = vunpack.c.l.b16 %v937
        %v1147 = vunpack.c.h.b16 %v937
        %v1148 = vunpack.c.l.b16 %v938
        %v1149 = vunpack.c.h.b16 %v938
        %v1150 = vunpack.c.l.b16 %v939
        %v1151 = vunpack.c.h.b16 %v939
        %v1152 = vunpack.c.l.b16 %v940
        %v1153 = vunpack.c.l.b16 %v941
        %v1154 = vunpack.c.h.b16 %v941
        %v1155 = vunpack.c.l.b16 %v942
        %v1156 = vunpack.c.h.b16 %v942
        %v1157 = vunpack.c.l.b16 %v943
        %v1158 = vunpack.c.h.b16 %v943
        %v1159 = vunpack.c.l.b16 %v944
        %v1160 = vunpack.c.h.b16 %v944
        %v1161 = vunpack.c.l.b16 %v945
        %v1162 = vunpack.c.l.b16 %v946
        %v1163 = vunpack.c.h.b16 %v946
        %v1164 = vunpack.c.l.b16 %v947
        %v1165 = vunpack.c.h.b16 %v947
        %v1166 = vunpack.c.l.b16 %v948
        %v1167 = vunpack.c.h.b16 %v948
        %v1168 = vunpack.c.l.b16 %v949
        %v1169 = vunpack.c.h.b16 %v949
        %v1170 = vunpack.c.l.b16 %v950
        %v1171 = vunpack.c.l.b16 %v951
        %v1172 = vunpack.c.h.b16 %v951
        %v1173 = vunpack.c.l.b16 %v952
        %v1174 = vunpack.c.h.b16 %v952
        %v1175 = vunpack.c.l.b16 %v953
        %v1176 = vunpack.c.h.b16 %v953
        %v1177 = vunpack.c.l.b16 %v954
        %v1178 = vunpack.c.h.b16 %v954
        %v1179 = vunpack.c.l.b16 %v955
        %v1180 = vpack.c.b16 %v1045, %v1036
        %v1181 = vpack.c.b16 %v1046, %v1037
        %v1182 = vpack.c.b16 %v1047, %v1038
        %v1183 = vpack.c.b16 %v1048, %v1039
        %v1184 = vpack.c.b16 %v1049, %v1040
        %v1185 = vpack.c.b16 %v1050, %v1041
        %v1186 = vpack.c.b16 %v1051, %v1042
        %v1187 = vpack.c.b16 %v1052, %v1043
        %v1188 = vpack.c.b16 %v1053, %v1044
        %v1189 = vpack.c.b16 %v1063, %v1054
        %v1190 = vpack.c.b16 %v1064, %v1055
        %v1191 = vpack.c.b16 %v1065, %v1056
        %v1192 = vpack.c.b16 %v1066, %v1057
        %v1193 = vpack.c.b16 %v1067, %v1058
        %v1194 = vpack.c.b16 %v1068, %v1059
        %v1195 = vpack.c.b16 %v1069, %v1060
        %v1196 = vpack.c.b16 %v1070, %v1061
        %v1197 = vpack.c.b16 %v1071, %v1062
        %v1198 = vpack.c.b16 %v1081, %v1072
        %v1199 = vpack.c.b16 %v1082, %v1073
        %v1200 = vpack.c.b16 %v1083, %v1074
        %v1201 = vpack.c.b16 %v1084, %v1075
        %v1202 = vpack.c.b16 %v1085, %v1076
        %v1203 = vpack.c.b16 %v1086, %v1077
        %v1204 = vpack.c.b16 %v1087, %v1078
        %v1205 = vpack.c.b16 %v1088, %v1079
        %v1206 = vpack.c.b16 %v1089, %v1080
        %v1207 = vpack.c.b16 %v1099, %v1090
        %v1208 = vpack.c.b16 %v1100, %v1091
        %v1209 = vpack.c.b16 %v1101, %v1092
        %v1210 = vpack.c.b16 %v1102, %v1093
        %v1211 = vpack.c.b16 %v1103, %v1094
        %v1212 = vpack.c.b16 %v1104, %v1095
        %v1213 = vpack.c.b16 %v1105, %v1096
        %v1214 = vpack.c.b16 %v1106, %v1097
        %v1215 = vpack.c.b16 %v1107, %v1098
        %v1216 = vpack.c.b16 %v1117, %v1108
        %v1217 = vpack.c.b16 %v1118, %v1109
        %v1218 = vpack.c.b16 %v1119, %v1110
        %v1219 = vpack.c.b16 %v1120, %v1111
        %v1220 = vpack.c.b16 %v1121, %v1112
        %v1221 = vpack.c.b16 %v1122, %v1113
        %v1222 = vpack.c.b16 %v1123, %v1114
        %v1223 = vpack.c.b16 %v1124, %v1115
        %v1224 = vpack.c.b16 %v1125, %v1116
        %v1225 = vpack.c.b16 %v1135, %v1126
        %v1226 = vpack.c.b16 %v1136, %v1127
        %v1227 = vpack.c.b16 %v1137, %v1128
        %v1228 = vpack.c.b16 %v1138, %v1129
        %v1229 = vpack.c.b16 %v1139, %v1130
        %v1230 = vpack.c.b16 %v1140, %v1131
        %v1231 = vpack.c.b16 %v1141, %v1132
        %v1232 = vpack.c.b16 %v1142, %v1133
        %v1233 = vpack.c.b16 %v1143, %v1134
        %v1234 = vpack.c.b16 %v1153, %v1144
        %v1235 = vpack.c.b16 %v1154, %v1145
        %v1236 = vpack.c.b16 %v1155, %v1146
        %v1237 = vpack.c.b16 %v1156, %v1147
        %v1238 = vpack.c.b16 %v1157, %v1148
        %v1239 = vpack.c.b16 %v1158, %v1149
        %v1240 = vpack.c.b16 %v1159, %v1150
        %v1241 = vpack.c.b16 %v1160, %v1151
        %v1242 = vpack.c.b16 %v1161, %v1152
        %v1243 = vpack.c.b16 %v1171, %v1162
        %v1244 = vpack.c.b16 %v1172, %v1163
        %v1245 = vpack.c.b16 %v1173, %v1164
        %v1246 = vpack.c.b16 %v1174, %v1165
        %v1247 = vpack.c.b16 %v1175, %v1166
        %v1248 = vpack.c.b16 %v1176, %v1167
        %v1249 = vpack.c.b16 %v1177, %v1168
        %v1250 = vpack.c.b16 %v1178, %v1169
        %v1251 = vpack.c.b16 %v1179, %v1170
        %1324 = vmatpush.bf16.msra.mxu0 %v1243
        %1325 = vmatpush.bf16.msra.mxu0 %v1234
        %1326 = vmatpush.bf16.msra.mxu0 %v1225
        %1327 = vmatpush.bf16.msra.mxu0 %v1216
        %1328 = vmatpush.bf16.msra.mxu0 %v1207
        %1329 = vmatpush.bf16.msra.mxu0 %v1198
        %1330 = vmatpush.bf16.msra.mxu0 %v1189
        %1331 = vmatpush.bf16.msra.mxu0 %v1180
        %1332 = vmatmul.bf16.gmra.mxu0 %v874
        %v1333 = vpop.f32.mrf.mxu0
        %v1334 = vadd.f32 0.0, %v1333
        %v1335 = vpop.f32.mrf.mxu0
        %v1336 = vadd.f32 0.0, %v1335
        %1337 = vmatmul.bf16.gmra.mxu0 %v875
        %v1338 = vpop.f32.mrf.mxu0
        %v1339 = vadd.f32 0.0, %v1338
        %v1340 = vpop.f32.mrf.mxu0
        %v1341 = vadd.f32 0.0, %v1340
        %1342 = vdwg.mxu0
        %1343 = vmatpush.bf16.msra.mxu0 %v1244
        %1344 = vmatpush.bf16.msra.mxu0 %v1235
        %1345 = vmatpush.bf16.msra.mxu0 %v1226
        %1346 = vmatpush.bf16.msra.mxu0 %v1217
        %1347 = vmatpush.bf16.msra.mxu0 %v1208
        %1348 = vmatpush.bf16.msra.mxu0 %v1199
        %1349 = vmatpush.bf16.msra.mxu0 %v1190
        %1350 = vmatpush.bf16.msra.mxu0 %v1181
        %1351 = vmatmul.bf16.gmra.mxu0 %v874
        %v1352 = vpop.f32.mrf.mxu0
        %v1353 = vadd.f32 0.0, %v1352
        %v1354 = vpop.f32.mrf.mxu0
        %v1355 = vadd.f32 0.0, %v1354
        %1356 = vmatmul.bf16.gmra.mxu0 %v875
        %v1357 = vpop.f32.mrf.mxu0
        %v1358 = vadd.f32 0.0, %v1357
        %v1359 = vpop.f32.mrf.mxu0
        %v1360 = vadd.f32 0.0, %v1359
        %1361 = vdwg.mxu0
        %1362 = vmatpush.bf16.msra.mxu0 %v1245
        %1363 = vmatpush.bf16.msra.mxu0 %v1236
        %1364 = vmatpush.bf16.msra.mxu0 %v1227
        %1365 = vmatpush.bf16.msra.mxu0 %v1218
        %1366 = vmatpush.bf16.msra.mxu0 %v1209
        %1367 = vmatpush.bf16.msra.mxu0 %v1200
        %1368 = vmatpush.bf16.msra.mxu0 %v1191
        %1369 = vmatpush.bf16.msra.mxu0 %v1182
        %1370 = vmatmul.bf16.gmra.mxu0 %v874
        %v1371 = vpop.f32.mrf.mxu0
        %v1372 = vadd.f32 0.0, %v1371
        %v1373 = vpop.f32.mrf.mxu0
        %v1374 = vadd.f32 0.0, %v1373
        %1375 = vmatmul.bf16.gmra.mxu0 %v875
        %v1376 = vpop.f32.mrf.mxu0
        %v1377 = vadd.f32 0.0, %v1376
        %v1378 = vpop.f32.mrf.mxu0
        %v1379 = vadd.f32 0.0, %v1378
        %1380 = vdwg.mxu0
        %1381 = vmatpush.bf16.msra.mxu0 %v1246
        %1382 = vmatpush.bf16.msra.mxu0 %v1237
        %1383 = vmatpush.bf16.msra.mxu0 %v1228
        %1384 = vmatpush.bf16.msra.mxu0 %v1219
        %1385 = vmatpush.bf16.msra.mxu0 %v1210
        %1386 = vmatpush.bf16.msra.mxu0 %v1201
        %1387 = vmatpush.bf16.msra.mxu0 %v1192
        %1388 = vmatpush.bf16.msra.mxu0 %v1183
        %1389 = vmatmul.bf16.gmra.mxu0 %v874
        %v1390 = vpop.f32.mrf.mxu0
        %v1391 = vadd.f32 0.0, %v1390
        %v1392 = vpop.f32.mrf.mxu0
        %v1393 = vadd.f32 0.0, %v1392
        %1394 = vmatmul.bf16.gmra.mxu0 %v875
        %v1395 = vpop.f32.mrf.mxu0
        %v1396 = vadd.f32 0.0, %v1395
        %v1397 = vpop.f32.mrf.mxu0
        %v1398 = vadd.f32 0.0, %v1397
        %1399 = vdwg.mxu0
        %1400 = vmatpush.bf16.msra.mxu0 %v1247
        %1401 = vmatpush.bf16.msra.mxu0 %v1238
        %1402 = vmatpush.bf16.msra.mxu0 %v1229
        %1403 = vmatpush.bf16.msra.mxu0 %v1220
        %1404 = vmatpush.bf16.msra.mxu0 %v1211
        %1405 = vmatpush.bf16.msra.mxu0 %v1202
        %1406 = vmatpush.bf16.msra.mxu0 %v1193
        %1407 = vmatpush.bf16.msra.mxu0 %v1184
        %1408 = vmatmul.bf16.gmra.mxu0 %v874
        %v1409 = vpop.f32.mrf.mxu0
        %v1410 = vadd.f32 0.0, %v1409
        %v1411 = vpop.f32.mrf.mxu0
        %v1412 = vadd.f32 0.0, %v1411
        %1413 = vmatmul.bf16.gmra.mxu0 %v875
        %v1414 = vpop.f32.mrf.mxu0
        %v1415 = vadd.f32 0.0, %v1414
        %v1416 = vpop.f32.mrf.mxu0
        %v1417 = vadd.f32 0.0, %v1416
        %1418 = vdwg.mxu0
        %1419 = vmatpush.bf16.msra.mxu0 %v1248
        %1420 = vmatpush.bf16.msra.mxu0 %v1239
        %1421 = vmatpush.bf16.msra.mxu0 %v1230
        %1422 = vmatpush.bf16.msra.mxu0 %v1221
        %1423 = vmatpush.bf16.msra.mxu0 %v1212
        %1424 = vmatpush.bf16.msra.mxu0 %v1203
        %1425 = vmatpush.bf16.msra.mxu0 %v1194
        %1426 = vmatpush.bf16.msra.mxu0 %v1185
        %1427 = vmatmul.bf16.gmra.mxu0 %v874
        %v1428 = vpop.f32.mrf.mxu0
        %v1429 = vadd.f32 0.0, %v1428
        %v1430 = vpop.f32.mrf.mxu0
        %v1431 = vadd.f32 0.0, %v1430
        %1432 = vmatmul.bf16.gmra.mxu0 %v875
        %v1433 = vpop.f32.mrf.mxu0
        %v1434 = vadd.f32 0.0, %v1433
        %v1435 = vpop.f32.mrf.mxu0
        %v1436 = vadd.f32 0.0, %v1435
        %1437 = vdwg.mxu0
        %1438 = vmatpush.bf16.msra.mxu0 %v1249
        %1439 = vmatpush.bf16.msra.mxu0 %v1240
        %1440 = vmatpush.bf16.msra.mxu0 %v1231
        %1441 = vmatpush.bf16.msra.mxu0 %v1222
        %1442 = vmatpush.bf16.msra.mxu0 %v1213
        %1443 = vmatpush.bf16.msra.mxu0 %v1204
        %1444 = vmatpush.bf16.msra.mxu0 %v1195
        %1445 = vmatpush.bf16.msra.mxu0 %v1186
        %1446 = vmatmul.bf16.gmra.mxu0 %v874
        %v1447 = vpop.f32.mrf.mxu0
        %v1448 = vadd.f32 0.0, %v1447
        %v1449 = vpop.f32.mrf.mxu0
        %v1450 = vadd.f32 0.0, %v1449
        %1451 = vmatmul.bf16.gmra.mxu0 %v875
        %v1452 = vpop.f32.mrf.mxu0
        %v1453 = vadd.f32 0.0, %v1452
        %v1454 = vpop.f32.mrf.mxu0
        %v1455 = vadd.f32 0.0, %v1454
        %1456 = vdwg.mxu0
        %1457 = vmatpush.bf16.msra.mxu0 %v1250
        %1458 = vmatpush.bf16.msra.mxu0 %v1241
        %1459 = vmatpush.bf16.msra.mxu0 %v1232
        %1460 = vmatpush.bf16.msra.mxu0 %v1223
        %1461 = vmatpush.bf16.msra.mxu0 %v1214
        %1462 = vmatpush.bf16.msra.mxu0 %v1205
        %1463 = vmatpush.bf16.msra.mxu0 %v1196
        %1464 = vmatpush.bf16.msra.mxu0 %v1187
        %1465 = vmatmul.bf16.gmra.mxu0 %v874
        %v1466 = vpop.f32.mrf.mxu0
        %v1467 = vadd.f32 0.0, %v1466
        %v1468 = vpop.f32.mrf.mxu0
        %v1469 = vadd.f32 0.0, %v1468
        %1470 = vmatmul.bf16.gmra.mxu0 %v875
        %v1471 = vpop.f32.mrf.mxu0
        %v1472 = vadd.f32 0.0, %v1471
        %v1473 = vpop.f32.mrf.mxu0
        %v1474 = vadd.f32 0.0, %v1473
        %1475 = vdwg.mxu0
        %1476 = vmatpush.bf16.msra.mxu0 %v1251
        %1477 = vmatpush.bf16.msra.mxu0 %v1242
        %1478 = vmatpush.bf16.msra.mxu0 %v1233
        %1479 = vmatpush.bf16.msra.mxu0 %v1224
        %1480 = vmatpush.bf16.msra.mxu0 %v1215
        %1481 = vmatpush.bf16.msra.mxu0 %v1206
        %1482 = vmatpush.bf16.msra.mxu0 %v1197
        %1483 = vmatpush.bf16.msra.mxu0 %v1188
        %1484 = vmatmul.bf16.gmra.mxu0 %v874
        %v1485 = vpop.f32.mrf.mxu0
        %v1486 = vadd.f32 0.0, %v1485
        %v1487 = vpop.f32.mrf.mxu0
        %v1488 = vadd.f32 0.0, %v1487
        %1489 = vmatmul.bf16.gmra.mxu0 %v875
        %v1490 = vpop.f32.mrf.mxu0
        %v1491 = vadd.f32 0.0, %v1490
        %v1492 = vpop.f32.mrf.mxu0
        %v1493 = vadd.f32 0.0, %v1492
        %1494 = vdwg.mxu0
        %v1495 = vpack.c.bf16 %v1353, %v1334
        %v1496 = vpack.c.bf16 %v1391, %v1372
        %v1497 = vpack.c.bf16 %v1429, %v1410
        %v1498 = vpack.c.bf16 %v1467, %v1448
        %v1499 = vpack.c.bf16 %v1486, %v1486
        %v1500 = vpack.c.bf16 %v1355, %v1336
        %v1501 = vpack.c.bf16 %v1393, %v1374
        %v1502 = vpack.c.bf16 %v1431, %v1412
        %v1503 = vpack.c.bf16 %v1469, %v1450
        %v1504 = vpack.c.bf16 %v1488, %v1488
        %v1505 = vpack.c.bf16 %v1358, %v1339
        %v1506 = vpack.c.bf16 %v1396, %v1377
        %v1507 = vpack.c.bf16 %v1434, %v1415
        %v1508 = vpack.c.bf16 %v1472, %v1453
        %v1509 = vpack.c.bf16 %v1491, %v1491
        %v1510 = vpack.c.bf16 %v1360, %v1341
        %v1511 = vpack.c.bf16 %v1398, %v1379
        %v1512 = vpack.c.bf16 %v1436, %v1417
        %v1513 = vpack.c.bf16 %v1474, %v1455
        %v1514 = vpack.c.bf16 %v1493, %v1493
        %v1517 = vunpack.c.l.b16 %v1495
        %v1518 = vunpack.c.l.b16 %v1500
        %v1519 = vpack.c.b16 %v1518, %v1517
        %v1522 = vunpack.c.h.b16 %v1496
        %v1523 = vunpack.c.h.b16 %v1501
        %v1524 = vpack.c.b16 %v1523, %v1522
        %vm1525 = vcmask 523264
        %v1527 = vsel %vm1525, %v1519, 0
        %v1530 = vsel %vm1525, %v1524, 0
        %1532 = vmatpush.bf16.xpose.msra.mxu0 0
        %1533 = vmatpush.bf16.xpose.msra.mxu0 0
        %1534 = vmatpush.bf16.xpose.msra.mxu0 0
        %1535 = vmatpush.bf16.xpose.msra.mxu0 0
        %1536 = vmatpush.bf16.xpose.msra.mxu0 0
        %1537 = vmatpush.bf16.xpose.msra.mxu0 0
        %1538 = vmatpush.bf16.xpose.msra.mxu0 0
        %1539 = vmatpush.bf16.xpose.msra.mxu0 %v1530
        %1540 = vmatmul.bf16.gmra.mxu0 %v1527
        %v1541 = vpop.f32.mrf.mxu0
        %v1542 = vadd.f32 0.0, %v1541
        %v1543 = vpop.f32.mrf.mxu0
        %v1544 = vadd.f32 0.0, %v1543
        %1545 = vdwg.mxu0
        %v1546 = vmul.f32 %v1542, 0.125
        %v1547 = vmul.f32 %v1544, 0.125
        %v1548 = vld [vmem:[%s4] sm:$0xff]
        %v1549 = vld [vmem:[%s4 + $0x8] sm:$0xff]
        %v1550 = vadd.f32 %v1546, %v1548
        %v1551 = vadd.f32 %v1547, %v1549
        %vm1552 = vcmask 130048
        %v1553 = vsel %vm1552, %v1550, -inf
        %1554 = vmax.xlane.f32.xlu0 %v1553
        %v1555 = vpop.xlane.xlu0 %1554
        %v1556 = vsel %vm1552, %v1551, -inf
        %1557 = vmax.xlane.f32.xlu0 %v1556
        %v1558 = vpop.xlane.xlu0 %1557
        %v1559 = vsub.f32 %v1550, %v1555
        %v1560 = vsub.f32 %v1551, %v1558
        %v1561 = vmul.f32 %v1559, 1.442695
        %v1562 = vpow.pop %v1561
        %v1563 = vmul.f32 %v1560, 1.442695
        %v1564 = vpow.pop %v1563
        %v1565 = vsel %vm1552, %v1562, 0.0
        %1566 = vadd.xlane.f32.xlu0 %v1565
        %v1567 = vpop.xlane.xlu0 %1566
        %v1568 = vsel %vm1552, %v1564, 0.0
        %1569 = vadd.xlane.f32.xlu0 %v1568
        %v1570 = vpop.xlane.xlu0 %1569
        %v1571 = vrcp.pop %v1567
        %v1572 = vmul.f32 %v1567, %v1571
        %v1573 = vsub.f32 1.0, %v1572
        %v1574 = vmul.f32 %v1571, %v1573
        %v1575 = vadd.f32 %v1571, %v1574
        %vm1576 = vweird.f32 %v1567
        %vm1577 = vweird.f32 %v1571
        %vm1578 = vmor %vm1576, %vm1577
        %v1579 = vsel %vm1578, %v1571, %v1575
        %v1580 = vand.u32 2147483647, %v1567
        %vm1581 = vcmp.eq.f32.partialorder %v1580, 8.507059e+37
        %v1582 = vand.u32 %v1567, 2147483648
        %v1583 = vor.u32 1.1754944e-38, %v1582
        %v1584 = vsel %vm1581, %v1583, %v1579
        %v1585 = vmul.f32 %v1562, %v1584
        %v1586 = vrcp.pop %v1570
        %v1587 = vmul.f32 %v1570, %v1586
        %v1588 = vsub.f32 1.0, %v1587
        %v1589 = vmul.f32 %v1586, %v1588
        %v1590 = vadd.f32 %v1586, %v1589
        %vm1591 = vweird.f32 %v1570
        %vm1592 = vweird.f32 %v1586
        %vm1593 = vmor %vm1591, %vm1592
        %v1594 = vsel %vm1593, %v1586, %v1590
        %v1595 = vand.u32 2147483647, %v1570
        %vm1596 = vcmp.eq.f32.partialorder %v1595, 8.507059e+37
        %v1597 = vand.u32 %v1570, 2147483648
        %v1598 = vor.u32 1.1754944e-38, %v1597
        %v1599 = vsel %vm1596, %v1598, %v1594
        %v1600 = vmul.f32 %v1564, %v1599
        %v1601 = vpack.c.bf16 %v1600, %v1585
        %v1604 = vunpack.c.l.b16 %v1498
        %v1605 = vunpack.c.l.b16 %v1503
        %v1606 = vpack.c.b16 %v1605, %v1604
        %v1609 = vsel %vm1552, %v1601, 0
        %1611 = vmatpush.bf16.msra.mxu0 0
        %1612 = vmatpush.bf16.msra.mxu0 0
        %1613 = vmatpush.bf16.msra.mxu0 0
        %1614 = vmatpush.bf16.msra.mxu0 0
        %1615 = vmatpush.bf16.msra.mxu0 0
        %1616 = vmatpush.bf16.msra.mxu0 0
        %1617 = vmatpush.bf16.msra.mxu0 0
        %1618 = vmatpush.bf16.msra.mxu0 %v1606
        %1619 = vmatmul.bf16.gmra.mxu0 %v1609
        %v1620 = vpop.f32.mrf.mxu0
        %v1621 = vadd.f32 0.0, %v1620
        %v1622 = vpop.f32.mrf.mxu0
        %v1623 = vadd.f32 0.0, %v1622
        %1624 = vdwg.mxu0
        %v1625 = vpack.c.bf16 %v1623, %v1621
        %v1626 = vld [vmem:[%s497] sm:$0xf]
        %v1627 = vld [vmem:[%s497 + $0x4] sm:$0xf]
        %v1628 = vld [vmem:[%s497 + $0x8] sm:$0xf]
        %v1629 = vld [vmem:[%s497 + $0xc] sm:$0xf]
        %v1630 = vld [vmem:[%s497 + $0x10] sm:$0xf]
        %v1631 = vld [vmem:[%s497 + $0x14] sm:$0xf]
        %v1632 = vld [vmem:[%s497 + $0x18] sm:$0xf]
        %v1633 = vld [vmem:[%s497 + $0x1c] sm:$0xf]
        %1634 = vrot.lane.b32.xlu0 %v1519, 64
        %v1635 = vpop.permute.xlu0 %1634
        %1636 = vrot.lane.b32.xlu0 %v1524, 64
        %v1637 = vpop.permute.xlu0 %1636
        %v1639 = vsel %vm1525, %v1635, 0
        %v1642 = vsel %vm1525, %v1637, 0
        %1644 = vmatpush.bf16.xpose.msra.mxu0 0
        %1645 = vmatpush.bf16.xpose.msra.mxu0 0
        %1646 = vmatpush.bf16.xpose.msra.mxu0 0
        %1647 = vmatpush.bf16.xpose.msra.mxu0 0
        %1648 = vmatpush.bf16.xpose.msra.mxu0 0
        %1649 = vmatpush.bf16.xpose.msra.mxu0 0
        %1650 = vmatpush.bf16.xpose.msra.mxu0 0
        %1651 = vmatpush.bf16.xpose.msra.mxu0 %v1642
        %1652 = vmatmul.bf16.gmra.mxu0 %v1639
        %v1653 = vpop.f32.mrf.mxu0
        %v1654 = vadd.f32 0.0, %v1653
        %v1655 = vpop.f32.mrf.mxu0
        %v1656 = vadd.f32 0.0, %v1655
        %1657 = vdwg.mxu0
        %v1658 = vmul.f32 %v1654, 0.125
        %v1659 = vmul.f32 %v1656, 0.125
        %s1660 = scalar_lea.vmem %s4, 16
        %v1661 = vld [vmem:[%s1660] sm:$0xff]
        %v1662 = vld [vmem:[%s1660 + $0x8] sm:$0xff]
        %v1663 = vadd.f32 %v1658, %v1661
        %v1664 = vadd.f32 %v1659, %v1662
        %v1665 = vsel %vm1552, %v1663, -inf
        %1666 = vmax.xlane.f32.xlu0 %v1665
        %v1667 = vpop.xlane.xlu0 %1666
        %v1668 = vsel %vm1552, %v1664, -inf
        %1669 = vmax.xlane.f32.xlu0 %v1668
        %v1670 = vpop.xlane.xlu0 %1669
        %v1671 = vsub.f32 %v1663, %v1667
        %v1672 = vsub.f32 %v1664, %v1670
        %v1673 = vmul.f32 %v1671, 1.442695
        %v1674 = vpow.pop %v1673
        %v1675 = vmul.f32 %v1672, 1.442695
        %v1676 = vpow.pop %v1675
        %v1677 = vsel %vm1552, %v1674, 0.0
        %1678 = vadd.xlane.f32.xlu0 %v1677
        %v1679 = vpop.xlane.xlu0 %1678
        %v1680 = vsel %vm1552, %v1676, 0.0
        %1681 = vadd.xlane.f32.xlu0 %v1680
        %v1682 = vpop.xlane.xlu0 %1681
        %v1683 = vrcp.pop %v1679
        %v1684 = vmul.f32 %v1679, %v1683
        %v1685 = vsub.f32 1.0, %v1684
        %v1686 = vmul.f32 %v1683, %v1685
        %v1687 = vadd.f32 %v1683, %v1686
        %vm1688 = vweird.f32 %v1679
        %vm1689 = vweird.f32 %v1683
        %vm1690 = vmor %vm1688, %vm1689
        %v1691 = vsel %vm1690, %v1683, %v1687
        %v1692 = vand.u32 2147483647, %v1679
        %vm1693 = vcmp.eq.f32.partialorder %v1692, 8.507059e+37
        %v1694 = vand.u32 %v1679, 2147483648
        %v1695 = vor.u32 1.1754944e-38, %v1694
        %v1696 = vsel %vm1693, %v1695, %v1691
        %v1697 = vmul.f32 %v1674, %v1696
        %v1698 = vrcp.pop %v1682
        %v1699 = vmul.f32 %v1682, %v1698
        %v1700 = vsub.f32 1.0, %v1699
        %v1701 = vmul.f32 %v1698, %v1700
        %v1702 = vadd.f32 %v1698, %v1701
        %vm1703 = vweird.f32 %v1682
        %vm1704 = vweird.f32 %v1698
        %vm1705 = vmor %vm1703, %vm1704
        %v1706 = vsel %vm1705, %v1698, %v1702
        %v1707 = vand.u32 2147483647, %v1682
        %vm1708 = vcmp.eq.f32.partialorder %v1707, 8.507059e+37
        %v1709 = vand.u32 %v1682, 2147483648
        %v1710 = vor.u32 1.1754944e-38, %v1709
        %v1711 = vsel %vm1708, %v1710, %v1706
        %v1712 = vmul.f32 %v1676, %v1711
        %v1713 = vpack.c.bf16 %v1712, %v1697
        %1714 = vrot.lane.b32.xlu0 %v1606, 64
        %v1715 = vpop.permute.xlu0 %1714
        %v1718 = vsel %vm1552, %v1713, 0
        %1720 = vmatpush.bf16.msra.mxu0 0
        %1721 = vmatpush.bf16.msra.mxu0 0
        %1722 = vmatpush.bf16.msra.mxu0 0
        %1723 = vmatpush.bf16.msra.mxu0 0
        %1724 = vmatpush.bf16.msra.mxu0 0
        %1725 = vmatpush.bf16.msra.mxu0 0
        %1726 = vmatpush.bf16.msra.mxu0 0
        %1727 = vmatpush.bf16.msra.mxu0 %v1715
        %1728 = vmatmul.bf16.gmra.mxu0 %v1718
        %v1729 = vpop.f32.mrf.mxu0
        %v1730 = vadd.f32 0.0, %v1729
        %v1731 = vpop.f32.mrf.mxu0
        %v1732 = vadd.f32 0.0, %v1731
        %1733 = vdwg.mxu0
        %v1734 = vpack.c.bf16 %v1732, %v1730
        %v1735 = vld [vmem:[%s497 + $0x20] sm:$0xf]
        %v1736 = vld [vmem:[%s497 + $0x24] sm:$0xf]
        %v1737 = vld [vmem:[%s497 + $0x28] sm:$0xf]
        %v1738 = vld [vmem:[%s497 + $0x2c] sm:$0xf]
        %v1739 = vld [vmem:[%s497 + $0x30] sm:$0xf]
        %v1740 = vld [vmem:[%s497 + $0x34] sm:$0xf]
        %v1741 = vld [vmem:[%s497 + $0x38] sm:$0xf]
        %v1742 = vld [vmem:[%s497 + $0x3c] sm:$0xf]
        %v1751 = vunpack.c.l.b16 %v1735
        %v1752 = vunpack.c.l.b16 %v1736
        %v1753 = vunpack.c.l.b16 %v1737
        %v1754 = vunpack.c.l.b16 %v1738
        %v1755 = vunpack.c.l.b16 %v1739
        %v1756 = vunpack.c.l.b16 %v1740
        %v1757 = vunpack.c.l.b16 %v1741
        %v1758 = vunpack.c.l.b16 %v1742
        %v1759 = vpack.c.b16 %v1752, %v1751
        %v1760 = vpack.c.b16 %v1754, %v1753
        %v1761 = vpack.c.b16 %v1756, %v1755
        %v1762 = vpack.c.b16 %v1758, %v1757
        %v1768 = vsel %vm1525, %v1734, 0
        %1770 = vmatpush.bf16.msra.mxu0 0
        %1771 = vmatpush.bf16.msra.mxu0 0
        %1772 = vmatpush.bf16.msra.mxu0 0
        %1773 = vmatpush.bf16.msra.mxu0 0
        %1774 = vmatpush.bf16.msra.mxu0 %v1762
        %1775 = vmatpush.bf16.msra.mxu0 %v1761
        %1776 = vmatpush.bf16.msra.mxu0 %v1760
        %1777 = vmatpush.bf16.msra.mxu0 %v1759
        %1778 = vmatmul.bf16.gmra.mxu0 %v1768
        %v1779 = vpop.f32.mrf.mxu0
        %v1780 = vadd.f32 0.0, %v1779
        %v1781 = vpop.f32.mrf.mxu0
        %v1782 = vadd.f32 0.0, %v1781
        %1783 = vdwg.mxu0
        %v1792 = vunpack.c.l.b16 %v1626
        %v1793 = vunpack.c.l.b16 %v1627
        %v1794 = vunpack.c.l.b16 %v1628
        %v1795 = vunpack.c.l.b16 %v1629
        %v1796 = vunpack.c.l.b16 %v1630
        %v1797 = vunpack.c.l.b16 %v1631
        %v1798 = vunpack.c.l.b16 %v1632
        %v1799 = vunpack.c.l.b16 %v1633
        %v1800 = vpack.c.b16 %v1793, %v1792
        %v1801 = vpack.c.b16 %v1795, %v1794
        %v1802 = vpack.c.b16 %v1797, %v1796
        %v1803 = vpack.c.b16 %v1799, %v1798
        %v1809 = vsel %vm1525, %v1625, 0
        %1811 = vmatpush.bf16.msra.mxu0 0
        %1812 = vmatpush.bf16.msra.mxu0 0
        %1813 = vmatpush.bf16.msra.mxu0 0
        %1814 = vmatpush.bf16.msra.mxu0 0
        %1815 = vmatpush.bf16.msra.mxu0 %v1803
        %1816 = vmatpush.bf16.msra.mxu0 %v1802
        %1817 = vmatpush.bf16.msra.mxu0 %v1801
        %1818 = vmatpush.bf16.msra.mxu0 %v1800
        %1819 = vmatmul.bf16.gmra.mxu0 %v1809
        %v1820 = vpop.f32.mrf.mxu0
        %v1821 = vadd.f32 %v1780, %v1820
        %v1822 = vpop.f32.mrf.mxu0
        %v1823 = vadd.f32 %v1782, %v1822
        %1824 = vdwg.mxu0
        %v1825 = vunpack.c.h.b16 %v1495
        %v1826 = vunpack.c.h.b16 %v1500
        %v1827 = vpack.c.b16 %v1826, %v1825
        %v1830 = vunpack.c.l.b16 %v1497
        %v1831 = vunpack.c.l.b16 %v1502
        %v1832 = vpack.c.b16 %v1831, %v1830
        %v1834 = vsel %vm1525, %v1827, 0
        %v1837 = vsel %vm1525, %v1832, 0
        %1839 = vmatpush.bf16.xpose.msra.mxu0 0
        %1840 = vmatpush.bf16.xpose.msra.mxu0 0
        %1841 = vmatpush.bf16.xpose.msra.mxu0 0
        %1842 = vmatpush.bf16.xpose.msra.mxu0 0
        %1843 = vmatpush.bf16.xpose.msra.mxu0 0
        %1844 = vmatpush.bf16.xpose.msra.mxu0 0
        %1845 = vmatpush.bf16.xpose.msra.mxu0 0
        %1846 = vmatpush.bf16.xpose.msra.mxu0 %v1837
        %1847 = vmatmul.bf16.gmra.mxu0 %v1834
        %v1848 = vpop.f32.mrf.mxu0
        %v1849 = vadd.f32 0.0, %v1848
        %v1850 = vpop.f32.mrf.mxu0
        %v1851 = vadd.f32 0.0, %v1850
        %1852 = vdwg.mxu0
        %v1853 = vmul.f32 %v1849, 0.125
        %v1854 = vmul.f32 %v1851, 0.125
        %s1855 = scalar_lea.vmem %s4, 32
        %v1856 = vld [vmem:[%s1855] sm:$0xff]
        %v1857 = vld [vmem:[%s1855 + $0x8] sm:$0xff]
        %v1858 = vadd.f32 %v1853, %v1856
        %v1859 = vadd.f32 %v1854, %v1857
        %v1860 = vsel %vm1552, %v1858, -inf
        %1861 = vmax.xlane.f32.xlu0 %v1860
        %v1862 = vpop.xlane.xlu0 %1861
        %v1863 = vsel %vm1552, %v1859, -inf
        %1864 = vmax.xlane.f32.xlu0 %v1863
        %v1865 = vpop.xlane.xlu0 %1864
        %v1866 = vsub.f32 %v1858, %v1862
        %v1867 = vsub.f32 %v1859, %v1865
        %v1868 = vmul.f32 %v1866, 1.442695
        %v1869 = vpow.pop %v1868
        %v1870 = vmul.f32 %v1867, 1.442695
        %v1871 = vpow.pop %v1870
        %v1872 = vsel %vm1552, %v1869, 0.0
        %1873 = vadd.xlane.f32.xlu0 %v1872
        %v1874 = vpop.xlane.xlu0 %1873
        %v1875 = vsel %vm1552, %v1871, 0.0
        %1876 = vadd.xlane.f32.xlu0 %v1875
        %v1877 = vpop.xlane.xlu0 %1876
        %v1878 = vrcp.pop %v1874
        %v1879 = vmul.f32 %v1874, %v1878
        %v1880 = vsub.f32 1.0, %v1879
        %v1881 = vmul.f32 %v1878, %v1880
        %v1882 = vadd.f32 %v1878, %v1881
        %vm1883 = vweird.f32 %v1874
        %vm1884 = vweird.f32 %v1878
        %vm1885 = vmor %vm1883, %vm1884
        %v1886 = vsel %vm1885, %v1878, %v1882
        %v1887 = vand.u32 2147483647, %v1874
        %vm1888 = vcmp.eq.f32.partialorder %v1887, 8.507059e+37
        %v1889 = vand.u32 %v1874, 2147483648
        %v1890 = vor.u32 1.1754944e-38, %v1889
        %v1891 = vsel %vm1888, %v1890, %v1886
        %v1892 = vmul.f32 %v1869, %v1891
        %v1893 = vrcp.pop %v1877
        %v1894 = vmul.f32 %v1877, %v1893
        %v1895 = vsub.f32 1.0, %v1894
        %v1896 = vmul.f32 %v1893, %v1895
        %v1897 = vadd.f32 %v1893, %v1896
        %vm1898 = vweird.f32 %v1877
        %vm1899 = vweird.f32 %v1893
        %vm1900 = vmor %vm1898, %vm1899
        %v1901 = vsel %vm1900, %v1893, %v1897
        %v1902 = vand.u32 2147483647, %v1877
        %vm1903 = vcmp.eq.f32.partialorder %v1902, 8.507059e+37
        %v1904 = vand.u32 %v1877, 2147483648
        %v1905 = vor.u32 1.1754944e-38, %v1904
        %v1906 = vsel %vm1903, %v1905, %v1901
        %v1907 = vmul.f32 %v1871, %v1906
        %v1908 = vpack.c.bf16 %v1907, %v1892
        %v1909 = vunpack.c.h.b16 %v1498
        %v1910 = vunpack.c.h.b16 %v1503
        %v1911 = vpack.c.b16 %v1910, %v1909
        %v1914 = vsel %vm1552, %v1908, 0
        %1916 = vmatpush.bf16.msra.mxu0 0
        %1917 = vmatpush.bf16.msra.mxu0 0
        %1918 = vmatpush.bf16.msra.mxu0 0
        %1919 = vmatpush.bf16.msra.mxu0 0
        %1920 = vmatpush.bf16.msra.mxu0 0
        %1921 = vmatpush.bf16.msra.mxu0 0
        %1922 = vmatpush.bf16.msra.mxu0 0
        %1923 = vmatpush.bf16.msra.mxu0 %v1911
        %1924 = vmatmul.bf16.gmra.mxu0 %v1914
        %v1925 = vpop.f32.mrf.mxu0
        %v1926 = vadd.f32 0.0, %v1925
        %v1927 = vpop.f32.mrf.mxu0
        %v1928 = vadd.f32 0.0, %v1927
        %1929 = vdwg.mxu0
        %v1930 = vpack.c.bf16 %v1928, %v1926
        %v1931 = vld [vmem:[%s497 + $0x40] sm:$0xf]
        %v1932 = vld [vmem:[%s497 + $0x44] sm:$0xf]
        %v1933 = vld [vmem:[%s497 + $0x48] sm:$0xf]
        %v1934 = vld [vmem:[%s497 + $0x4c] sm:$0xf]
        %v1935 = vld [vmem:[%s497 + $0x50] sm:$0xf]
        %v1936 = vld [vmem:[%s497 + $0x54] sm:$0xf]
        %v1937 = vld [vmem:[%s497 + $0x58] sm:$0xf]
        %v1938 = vld [vmem:[%s497 + $0x5c] sm:$0xf]
        %v1947 = vunpack.c.l.b16 %v1931
        %v1948 = vunpack.c.l.b16 %v1932
        %v1949 = vunpack.c.l.b16 %v1933
        %v1950 = vunpack.c.l.b16 %v1934
        %v1951 = vunpack.c.l.b16 %v1935
        %v1952 = vunpack.c.l.b16 %v1936
        %v1953 = vunpack.c.l.b16 %v1937
        %v1954 = vunpack.c.l.b16 %v1938
        %v1955 = vpack.c.b16 %v1948, %v1947
        %v1956 = vpack.c.b16 %v1950, %v1949
        %v1957 = vpack.c.b16 %v1952, %v1951
        %v1958 = vpack.c.b16 %v1954, %v1953
        %v1964 = vsel %vm1525, %v1930, 0
        %1966 = vmatpush.bf16.msra.mxu0 0
        %1967 = vmatpush.bf16.msra.mxu0 0
        %1968 = vmatpush.bf16.msra.mxu0 0
        %1969 = vmatpush.bf16.msra.mxu0 0
        %1970 = vmatpush.bf16.msra.mxu0 %v1958
        %1971 = vmatpush.bf16.msra.mxu0 %v1957
        %1972 = vmatpush.bf16.msra.mxu0 %v1956
        %1973 = vmatpush.bf16.msra.mxu0 %v1955
        %1974 = vmatmul.bf16.gmra.mxu0 %v1964
        %v1975 = vpop.f32.mrf.mxu0
        %v1976 = vadd.f32 0.0, %v1975
        %v1977 = vpop.f32.mrf.mxu0
        %v1978 = vadd.f32 0.0, %v1977
        %1979 = vdwg.mxu0
        %v1980 = vadd.f32 %v1821, %v1976
        %v1981 = vadd.f32 %v1823, %v1978
        %1982 = vrot.lane.b32.xlu0 %v1827, 64
        %v1983 = vpop.permute.xlu0 %1982
        %1984 = vrot.lane.b32.xlu0 %v1832, 64
        %v1985 = vpop.permute.xlu0 %1984
        %v1987 = vsel %vm1525, %v1983, 0
        %v1990 = vsel %vm1525, %v1985, 0
        %1992 = vmatpush.bf16.xpose.msra.mxu0 0
        %1993 = vmatpush.bf16.xpose.msra.mxu0 0
        %1994 = vmatpush.bf16.xpose.msra.mxu0 0
        %1995 = vmatpush.bf16.xpose.msra.mxu0 0
        %1996 = vmatpush.bf16.xpose.msra.mxu0 0
        %1997 = vmatpush.bf16.xpose.msra.mxu0 0
        %1998 = vmatpush.bf16.xpose.msra.mxu0 0
        %1999 = vmatpush.bf16.xpose.msra.mxu0 %v1990
        %2000 = vmatmul.bf16.gmra.mxu0 %v1987
        %v2001 = vpop.f32.mrf.mxu0
        %v2002 = vadd.f32 0.0, %v2001
        %v2003 = vpop.f32.mrf.mxu0
        %v2004 = vadd.f32 0.0, %v2003
        %2005 = vdwg.mxu0
        %v2006 = vmul.f32 %v2002, 0.125
        %v2007 = vmul.f32 %v2004, 0.125
        %s2008 = scalar_lea.vmem %s4, 48
        %v2009 = vld [vmem:[%s2008] sm:$0xff]
        %v2010 = vld [vmem:[%s2008 + $0x8] sm:$0xff]
        %v2011 = vadd.f32 %v2006, %v2009
        %v2012 = vadd.f32 %v2007, %v2010
        %v2013 = vsel %vm1552, %v2011, -inf
        %2014 = vmax.xlane.f32.xlu0 %v2013
        %v2015 = vpop.xlane.xlu0 %2014
        %v2016 = vsel %vm1552, %v2012, -inf
        %2017 = vmax.xlane.f32.xlu0 %v2016
        %v2018 = vpop.xlane.xlu0 %2017
        %v2019 = vsub.f32 %v2011, %v2015
        %v2020 = vsub.f32 %v2012, %v2018
        %v2021 = vmul.f32 %v2019, 1.442695
        %v2022 = vpow.pop %v2021
        %v2023 = vmul.f32 %v2020, 1.442695
        %v2024 = vpow.pop %v2023
        %v2025 = vsel %vm1552, %v2022, 0.0
        %2026 = vadd.xlane.f32.xlu0 %v2025
        %v2027 = vpop.xlane.xlu0 %2026
        %v2028 = vsel %vm1552, %v2024, 0.0
        %2029 = vadd.xlane.f32.xlu0 %v2028
        %v2030 = vpop.xlane.xlu0 %2029
        %v2031 = vrcp.pop %v2027
        %v2032 = vmul.f32 %v2027, %v2031
        %v2033 = vsub.f32 1.0, %v2032
        %v2034 = vmul.f32 %v2031, %v2033
        %v2035 = vadd.f32 %v2031, %v2034
        %vm2036 = vweird.f32 %v2027
        %vm2037 = vweird.f32 %v2031
        %vm2038 = vmor %vm2036, %vm2037
        %v2039 = vsel %vm2038, %v2031, %v2035
        %v2040 = vand.u32 2147483647, %v2027
        %vm2041 = vcmp.eq.f32.partialorder %v2040, 8.507059e+37
        %v2042 = vand.u32 %v2027, 2147483648
        %v2043 = vor.u32 1.1754944e-38, %v2042
        %v2044 = vsel %vm2041, %v2043, %v2039
        %v2045 = vmul.f32 %v2022, %v2044
        %v2046 = vrcp.pop %v2030
        %v2047 = vmul.f32 %v2030, %v2046
        %v2048 = vsub.f32 1.0, %v2047
        %v2049 = vmul.f32 %v2046, %v2048
        %v2050 = vadd.f32 %v2046, %v2049
        %vm2051 = vweird.f32 %v2030
        %vm2052 = vweird.f32 %v2046
        %vm2053 = vmor %vm2051, %vm2052
        %v2054 = vsel %vm2053, %v2046, %v2050
        %v2055 = vand.u32 2147483647, %v2030
        %vm2056 = vcmp.eq.f32.partialorder %v2055, 8.507059e+37
        %v2057 = vand.u32 %v2030, 2147483648
        %v2058 = vor.u32 1.1754944e-38, %v2057
        %v2059 = vsel %vm2056, %v2058, %v2054
        %v2060 = vmul.f32 %v2024, %v2059
        %v2061 = vpack.c.bf16 %v2060, %v2045
        %2062 = vrot.lane.b32.xlu0 %v1911, 64
        %v2063 = vpop.permute.xlu0 %2062
        %v2066 = vsel %vm1552, %v2061, 0
        %2068 = vmatpush.bf16.msra.mxu0 0
        %2069 = vmatpush.bf16.msra.mxu0 0
        %2070 = vmatpush.bf16.msra.mxu0 0
        %2071 = vmatpush.bf16.msra.mxu0 0
        %2072 = vmatpush.bf16.msra.mxu0 0
        %2073 = vmatpush.bf16.msra.mxu0 0
        %2074 = vmatpush.bf16.msra.mxu0 0
        %2075 = vmatpush.bf16.msra.mxu0 %v2063
        %2076 = vmatmul.bf16.gmra.mxu0 %v2066
        %v2077 = vpop.f32.mrf.mxu0
        %v2078 = vadd.f32 0.0, %v2077
        %v2079 = vpop.f32.mrf.mxu0
        %v2080 = vadd.f32 0.0, %v2079
        %2081 = vdwg.mxu0
        %v2082 = vpack.c.bf16 %v2080, %v2078
        %v2083 = vld [vmem:[%s497 + $0x60] sm:$0xf]
        %v2084 = vld [vmem:[%s497 + $0x64] sm:$0xf]
        %v2085 = vld [vmem:[%s497 + $0x68] sm:$0xf]
        %v2086 = vld [vmem:[%s497 + $0x6c] sm:$0xf]
        %v2087 = vld [vmem:[%s497 + $0x70] sm:$0xf]
        %v2088 = vld [vmem:[%s497 + $0x74] sm:$0xf]
        %v2089 = vld [vmem:[%s497 + $0x78] sm:$0xf]
        %v2090 = vld [vmem:[%s497 + $0x7c] sm:$0xf]
        %v2099 = vunpack.c.l.b16 %v2083
        %v2100 = vunpack.c.l.b16 %v2084
        %v2101 = vunpack.c.l.b16 %v2085
        %v2102 = vunpack.c.l.b16 %v2086
        %v2103 = vunpack.c.l.b16 %v2087
        %v2104 = vunpack.c.l.b16 %v2088
        %v2105 = vunpack.c.l.b16 %v2089
        %v2106 = vunpack.c.l.b16 %v2090
        %v2107 = vpack.c.b16 %v2100, %v2099
        %v2108 = vpack.c.b16 %v2102, %v2101
        %v2109 = vpack.c.b16 %v2104, %v2103
        %v2110 = vpack.c.b16 %v2106, %v2105
        %v2116 = vsel %vm1525, %v2082, 0
        %2118 = vmatpush.bf16.msra.mxu0 0
        %2119 = vmatpush.bf16.msra.mxu0 0
        %2120 = vmatpush.bf16.msra.mxu0 0
        %2121 = vmatpush.bf16.msra.mxu0 0
        %2122 = vmatpush.bf16.msra.mxu0 %v2110
        %2123 = vmatpush.bf16.msra.mxu0 %v2109
        %2124 = vmatpush.bf16.msra.mxu0 %v2108
        %2125 = vmatpush.bf16.msra.mxu0 %v2107
        %2126 = vmatmul.bf16.gmra.mxu0 %v2116
        %v2127 = vpop.f32.mrf.mxu0
        %v2128 = vadd.f32 0.0, %v2127
        %v2129 = vpop.f32.mrf.mxu0
        %v2130 = vadd.f32 0.0, %v2129
        %2131 = vdwg.mxu0
        %v2132 = vadd.f32 %v1980, %v2128
        %v2133 = vadd.f32 %v1981, %v2130
        %v2134 = vunpack.c.l.b16 %v1496
        %v2135 = vunpack.c.l.b16 %v1501
        %v2136 = vpack.c.b16 %v2135, %v2134
        %v2137 = vunpack.c.h.b16 %v1497
        %v2138 = vunpack.c.h.b16 %v1502
        %v2139 = vpack.c.b16 %v2138, %v2137
        %v2141 = vsel %vm1525, %v2136, 0
        %v2144 = vsel %vm1525, %v2139, 0
        %2146 = vmatpush.bf16.xpose.msra.mxu0 0
        %2147 = vmatpush.bf16.xpose.msra.mxu0 0
        %2148 = vmatpush.bf16.xpose.msra.mxu0 0
        %2149 = vmatpush.bf16.xpose.msra.mxu0 0
        %2150 = vmatpush.bf16.xpose.msra.mxu0 0
        %2151 = vmatpush.bf16.xpose.msra.mxu0 0
        %2152 = vmatpush.bf16.xpose.msra.mxu0 0
        %2153 = vmatpush.bf16.xpose.msra.mxu0 %v2144
        %2154 = vmatmul.bf16.gmra.mxu0 %v2141
        %v2155 = vpop.f32.mrf.mxu0
        %v2156 = vadd.f32 0.0, %v2155
        %v2157 = vpop.f32.mrf.mxu0
        %v2158 = vadd.f32 0.0, %v2157
        %2159 = vdwg.mxu0
        %v2160 = vmul.f32 %v2156, 0.125
        %v2161 = vmul.f32 %v2158, 0.125
        %s2162 = scalar_lea.vmem %s4, 64
        %v2163 = vld [vmem:[%s2162] sm:$0xff]
        %v2164 = vld [vmem:[%s2162 + $0x8] sm:$0xff]
        %v2165 = vadd.f32 %v2160, %v2163
        %v2166 = vadd.f32 %v2161, %v2164
        %v2167 = vsel %vm1552, %v2165, -inf
        %2168 = vmax.xlane.f32.xlu0 %v2167
        %v2169 = vpop.xlane.xlu0 %2168
        %v2170 = vsel %vm1552, %v2166, -inf
        %2171 = vmax.xlane.f32.xlu0 %v2170
        %v2172 = vpop.xlane.xlu0 %2171
        %v2173 = vsub.f32 %v2165, %v2169
        %v2174 = vsub.f32 %v2166, %v2172
        %v2175 = vmul.f32 %v2173, 1.442695
        %v2176 = vpow.pop %v2175
        %v2177 = vmul.f32 %v2174, 1.442695
        %v2178 = vpow.pop %v2177
        %v2179 = vsel %vm1552, %v2176, 0.0
        %2180 = vadd.xlane.f32.xlu0 %v2179
        %v2181 = vpop.xlane.xlu0 %2180
        %v2182 = vsel %vm1552, %v2178, 0.0
        %2183 = vadd.xlane.f32.xlu0 %v2182
        %v2184 = vpop.xlane.xlu0 %2183
        %v2185 = vrcp.pop %v2181
        %v2186 = vmul.f32 %v2181, %v2185
        %v2187 = vsub.f32 1.0, %v2186
        %v2188 = vmul.f32 %v2185, %v2187
        %v2189 = vadd.f32 %v2185, %v2188
        %vm2190 = vweird.f32 %v2181
        %vm2191 = vweird.f32 %v2185
        %vm2192 = vmor %vm2190, %vm2191
        %v2193 = vsel %vm2192, %v2185, %v2189
        %v2194 = vand.u32 2147483647, %v2181
        %vm2195 = vcmp.eq.f32.partialorder %v2194, 8.507059e+37
        %v2196 = vand.u32 %v2181, 2147483648
        %v2197 = vor.u32 1.1754944e-38, %v2196
        %v2198 = vsel %vm2195, %v2197, %v2193
        %v2199 = vmul.f32 %v2176, %v2198
        %v2200 = vrcp.pop %v2184
        %v2201 = vmul.f32 %v2184, %v2200
        %v2202 = vsub.f32 1.0, %v2201
        %v2203 = vmul.f32 %v2200, %v2202
        %v2204 = vadd.f32 %v2200, %v2203
        %vm2205 = vweird.f32 %v2184
        %vm2206 = vweird.f32 %v2200
        %vm2207 = vmor %vm2205, %vm2206
        %v2208 = vsel %vm2207, %v2200, %v2204
        %v2209 = vand.u32 2147483647, %v2184
        %vm2210 = vcmp.eq.f32.partialorder %v2209, 8.507059e+37
        %v2211 = vand.u32 %v2184, 2147483648
        %v2212 = vor.u32 1.1754944e-38, %v2211
        %v2213 = vsel %vm2210, %v2212, %v2208
        %v2214 = vmul.f32 %v2178, %v2213
        %v2215 = vpack.c.bf16 %v2214, %v2199
        %v2218 = vunpack.c.l.b16 %v1499
        %v2219 = vunpack.c.l.b16 %v1504
        %v2220 = vpack.c.b16 %v2219, %v2218
        %v2223 = vsel %vm1552, %v2215, 0
        %2225 = vmatpush.bf16.msra.mxu0 0
        %2226 = vmatpush.bf16.msra.mxu0 0
        %2227 = vmatpush.bf16.msra.mxu0 0
        %2228 = vmatpush.bf16.msra.mxu0 0
        %2229 = vmatpush.bf16.msra.mxu0 0
        %2230 = vmatpush.bf16.msra.mxu0 0
        %2231 = vmatpush.bf16.msra.mxu0 0
        %2232 = vmatpush.bf16.msra.mxu0 %v2220
        %2233 = vmatmul.bf16.gmra.mxu0 %v2223
        %v2234 = vpop.f32.mrf.mxu0
        %v2235 = vadd.f32 0.0, %v2234
        %v2236 = vpop.f32.mrf.mxu0
        %v2237 = vadd.f32 0.0, %v2236
        %2238 = vdwg.mxu0
        %v2239 = vpack.c.bf16 %v2237, %v2235
        %v2240 = vld [vmem:[%s497 + $0x80] sm:$0xf]
        %v2241 = vld [vmem:[%s497 + $0x84] sm:$0xf]
        %v2242 = vld [vmem:[%s497 + $0x88] sm:$0xf]
        %v2243 = vld [vmem:[%s497 + $0x8c] sm:$0xf]
        %v2244 = vld [vmem:[%s497 + $0x90] sm:$0xf]
        %v2245 = vld [vmem:[%s497 + $0x94] sm:$0xf]
        %v2246 = vld [vmem:[%s497 + $0x98] sm:$0xf]
        %v2247 = vld [vmem:[%s497 + $0x9c] sm:$0xf]
        %v2256 = vunpack.c.l.b16 %v2240
        %v2257 = vunpack.c.l.b16 %v2241
        %v2258 = vunpack.c.l.b16 %v2242
        %v2259 = vunpack.c.l.b16 %v2243
        %v2260 = vunpack.c.l.b16 %v2244
        %v2261 = vunpack.c.l.b16 %v2245
        %v2262 = vunpack.c.l.b16 %v2246
        %v2263 = vunpack.c.l.b16 %v2247
        %v2264 = vpack.c.b16 %v2257, %v2256
        %v2265 = vpack.c.b16 %v2259, %v2258
        %v2266 = vpack.c.b16 %v2261, %v2260
        %v2267 = vpack.c.b16 %v2263, %v2262
        %v2273 = vsel %vm1525, %v2239, 0
        %2275 = vmatpush.bf16.msra.mxu0 0
        %2276 = vmatpush.bf16.msra.mxu0 0
        %2277 = vmatpush.bf16.msra.mxu0 0
        %2278 = vmatpush.bf16.msra.mxu0 0
        %2279 = vmatpush.bf16.msra.mxu0 %v2267
        %2280 = vmatpush.bf16.msra.mxu0 %v2266
        %2281 = vmatpush.bf16.msra.mxu0 %v2265
        %2282 = vmatpush.bf16.msra.mxu0 %v2264
        %2283 = vmatmul.bf16.gmra.mxu0 %v2273
        %v2284 = vpop.f32.mrf.mxu0
        %v2285 = vadd.f32 0.0, %v2284
        %v2286 = vpop.f32.mrf.mxu0
        %v2287 = vadd.f32 0.0, %v2286
        %2288 = vdwg.mxu0
        %v2289 = vadd.f32 %v2132, %v2285
        %v2290 = vadd.f32 %v2133, %v2287
        %2291 = vrot.lane.b32.xlu0 %v2136, 64
        %v2292 = vpop.permute.xlu0 %2291
        %2293 = vrot.lane.b32.xlu0 %v2139, 64
        %v2294 = vpop.permute.xlu0 %2293
        %v2296 = vsel %vm1525, %v2292, 0
        %v2299 = vsel %vm1525, %v2294, 0
        %2301 = vmatpush.bf16.xpose.msra.mxu0 0
        %2302 = vmatpush.bf16.xpose.msra.mxu0 0
        %2303 = vmatpush.bf16.xpose.msra.mxu0 0
        %2304 = vmatpush.bf16.xpose.msra.mxu0 0
        %2305 = vmatpush.bf16.xpose.msra.mxu0 0
        %2306 = vmatpush.bf16.xpose.msra.mxu0 0
        %2307 = vmatpush.bf16.xpose.msra.mxu0 0
        %2308 = vmatpush.bf16.xpose.msra.mxu0 %v2299
        %2309 = vmatmul.bf16.gmra.mxu0 %v2296
        %v2310 = vpop.f32.mrf.mxu0
        %v2311 = vadd.f32 0.0, %v2310
        %v2312 = vpop.f32.mrf.mxu0
        %v2313 = vadd.f32 0.0, %v2312
        %2314 = vdwg.mxu0
        %v2315 = vmul.f32 %v2311, 0.125
        %v2316 = vmul.f32 %v2313, 0.125
        %s2317 = scalar_lea.vmem %s4, 80
        %v2318 = vld [vmem:[%s2317] sm:$0xff]
        %v2319 = vld [vmem:[%s2317 + $0x8] sm:$0xff]
        %v2320 = vadd.f32 %v2315, %v2318
        %v2321 = vadd.f32 %v2316, %v2319
        %v2322 = vsel %vm1552, %v2320, -inf
        %2323 = vmax.xlane.f32.xlu0 %v2322
        %v2324 = vpop.xlane.xlu0 %2323
        %v2325 = vsel %vm1552, %v2321, -inf
        %2326 = vmax.xlane.f32.xlu0 %v2325
        %v2327 = vpop.xlane.xlu0 %2326
        %v2328 = vsub.f32 %v2320, %v2324
        %v2329 = vsub.f32 %v2321, %v2327
        %v2330 = vmul.f32 %v2328, 1.442695
        %v2331 = vpow.pop %v2330
        %v2332 = vmul.f32 %v2329, 1.442695
        %v2333 = vpow.pop %v2332
        %v2334 = vsel %vm1552, %v2331, 0.0
        %2335 = vadd.xlane.f32.xlu0 %v2334
        %v2336 = vpop.xlane.xlu0 %2335
        %v2337 = vsel %vm1552, %v2333, 0.0
        %2338 = vadd.xlane.f32.xlu0 %v2337
        %v2339 = vpop.xlane.xlu0 %2338
        %v2340 = vrcp.pop %v2336
        %v2341 = vmul.f32 %v2336, %v2340
        %v2342 = vsub.f32 1.0, %v2341
        %v2343 = vmul.f32 %v2340, %v2342
        %v2344 = vadd.f32 %v2340, %v2343
        %vm2345 = vweird.f32 %v2336
        %vm2346 = vweird.f32 %v2340
        %vm2347 = vmor %vm2345, %vm2346
        %v2348 = vsel %vm2347, %v2340, %v2344
        %v2349 = vand.u32 2147483647, %v2336
        %vm2350 = vcmp.eq.f32.partialorder %v2349, 8.507059e+37
        %v2351 = vand.u32 %v2336, 2147483648
        %v2352 = vor.u32 1.1754944e-38, %v2351
        %v2353 = vsel %vm2350, %v2352, %v2348
        %v2354 = vmul.f32 %v2331, %v2353
        %v2355 = vrcp.pop %v2339
        %v2356 = vmul.f32 %v2339, %v2355
        %v2357 = vsub.f32 1.0, %v2356
        %v2358 = vmul.f32 %v2355, %v2357
        %v2359 = vadd.f32 %v2355, %v2358
        %vm2360 = vweird.f32 %v2339
        %vm2361 = vweird.f32 %v2355
        %vm2362 = vmor %vm2360, %vm2361
        %v2363 = vsel %vm2362, %v2355, %v2359
        %v2364 = vand.u32 2147483647, %v2339
        %vm2365 = vcmp.eq.f32.partialorder %v2364, 8.507059e+37
        %v2366 = vand.u32 %v2339, 2147483648
        %v2367 = vor.u32 1.1754944e-38, %v2366
        %v2368 = vsel %vm2365, %v2367, %v2363
        %v2369 = vmul.f32 %v2333, %v2368
        %v2370 = vpack.c.bf16 %v2369, %v2354
        %2371 = vrot.lane.b32.xlu0 %v2220, 64
        %v2372 = vpop.permute.xlu0 %2371
        %v2375 = vsel %vm1552, %v2370, 0
        %2377 = vmatpush.bf16.msra.mxu0 0
        %2378 = vmatpush.bf16.msra.mxu0 0
        %2379 = vmatpush.bf16.msra.mxu0 0
        %2380 = vmatpush.bf16.msra.mxu0 0
        %2381 = vmatpush.bf16.msra.mxu0 0
        %2382 = vmatpush.bf16.msra.mxu0 0
        %2383 = vmatpush.bf16.msra.mxu0 0
        %2384 = vmatpush.bf16.msra.mxu0 %v2372
        %2385 = vmatmul.bf16.gmra.mxu0 %v2375
        %v2386 = vpop.f32.mrf.mxu0
        %v2387 = vadd.f32 0.0, %v2386
        %v2388 = vpop.f32.mrf.mxu0
        %v2389 = vadd.f32 0.0, %v2388
        %2390 = vdwg.mxu0
        %v2391 = vpack.c.bf16 %v2389, %v2387
        %v2392 = vld [vmem:[%s497 + $0xa0] sm:$0xf]
        %v2393 = vld [vmem:[%s497 + $0xa4] sm:$0xf]
        %v2394 = vld [vmem:[%s497 + $0xa8] sm:$0xf]
        %v2395 = vld [vmem:[%s497 + $0xac] sm:$0xf]
        %v2396 = vld [vmem:[%s497 + $0xb0] sm:$0xf]
        %v2397 = vld [vmem:[%s497 + $0xb4] sm:$0xf]
        %v2398 = vld [vmem:[%s497 + $0xb8] sm:$0xf]
        %v2399 = vld [vmem:[%s497 + $0xbc] sm:$0xf]
        %v2408 = vunpack.c.l.b16 %v2392
        %v2409 = vunpack.c.l.b16 %v2393
        %v2410 = vunpack.c.l.b16 %v2394
        %v2411 = vunpack.c.l.b16 %v2395
        %v2412 = vunpack.c.l.b16 %v2396
        %v2413 = vunpack.c.l.b16 %v2397
        %v2414 = vunpack.c.l.b16 %v2398
        %v2415 = vunpack.c.l.b16 %v2399
        %v2416 = vpack.c.b16 %v2409, %v2408
        %v2417 = vpack.c.b16 %v2411, %v2410
        %v2418 = vpack.c.b16 %v2413, %v2412
        %v2419 = vpack.c.b16 %v2415, %v2414
        %v2425 = vsel %vm1525, %v2391, 0
        %2427 = vmatpush.bf16.msra.mxu0 0
        %2428 = vmatpush.bf16.msra.mxu0 0
        %2429 = vmatpush.bf16.msra.mxu0 0
        %2430 = vmatpush.bf16.msra.mxu0 0
        %2431 = vmatpush.bf16.msra.mxu0 %v2419
        %2432 = vmatpush.bf16.msra.mxu0 %v2418
        %2433 = vmatpush.bf16.msra.mxu0 %v2417
        %2434 = vmatpush.bf16.msra.mxu0 %v2416
        %2435 = vmatmul.bf16.gmra.mxu0 %v2425
        %v2436 = vpop.f32.mrf.mxu0
        %v2437 = vadd.f32 0.0, %v2436
        %v2438 = vpop.f32.mrf.mxu0
        %v2439 = vadd.f32 0.0, %v2438
        %2440 = vdwg.mxu0
        %v2441 = vadd.f32 %v2289, %v2437
        %v2442 = vadd.f32 %v2290, %v2439
        %v2443 = vadd.f32 %v734, %v2441
        %v2444 = vadd.f32 %v735, %v2442
        %2445 = vst [vmem:[#allocation2] sm:$0xff] %v2443
        %2446 = vst [vmem:[#allocation2 + $0x8] sm:$0xff] %v2444
        %v2449 = vunpack.c.l.b16 %v1505
        %v2450 = vunpack.c.l.b16 %v1510
        %v2451 = vpack.c.b16 %v2450, %v2449
        %v2454 = vunpack.c.h.b16 %v1506
        %v2455 = vunpack.c.h.b16 %v1511
        %v2456 = vpack.c.b16 %v2455, %v2454
        %v2458 = vsel %vm1525, %v2451, 0
        %v2461 = vsel %vm1525, %v2456, 0
        %2463 = vmatpush.bf16.xpose.msra.mxu0 0
        %2464 = vmatpush.bf16.xpose.msra.mxu0 0
        %2465 = vmatpush.bf16.xpose.msra.mxu0 0
        %2466 = vmatpush.bf16.xpose.msra.mxu0 0
        %2467 = vmatpush.bf16.xpose.msra.mxu0 0
        %2468 = vmatpush.bf16.xpose.msra.mxu0 0
        %2469 = vmatpush.bf16.xpose.msra.mxu0 0
        %2470 = vmatpush.bf16.xpose.msra.mxu0 %v2461
        %2471 = vmatmul.bf16.gmra.mxu0 %v2458
        %v2472 = vpop.f32.mrf.mxu0
        %v2473 = vadd.f32 0.0, %v2472
        %v2474 = vpop.f32.mrf.mxu0
        %v2475 = vadd.f32 0.0, %v2474
        %2476 = vdwg.mxu0
        %v2477 = vmul.f32 %v2473, 0.125
        %v2478 = vmul.f32 %v2475, 0.125
        %v2479 = vld [vmem:[%s4] sm:$0xff]
        %v2480 = vld [vmem:[%s4 + $0x8] sm:$0xff]
        %v2481 = vadd.f32 %v2477, %v2479
        %v2482 = vadd.f32 %v2478, %v2480
        %v2483 = vsel %vm1552, %v2481, -inf
        %2484 = vmax.xlane.f32.xlu0 %v2483
        %v2485 = vpop.xlane.xlu0 %2484
        %v2486 = vsel %vm1552, %v2482, -inf
        %2487 = vmax.xlane.f32.xlu0 %v2486
        %v2488 = vpop.xlane.xlu0 %2487
        %v2489 = vsub.f32 %v2481, %v2485
        %v2490 = vsub.f32 %v2482, %v2488
        %v2491 = vmul.f32 %v2489, 1.442695
        %v2492 = vpow.pop %v2491
        %v2493 = vmul.f32 %v2490, 1.442695
        %v2494 = vpow.pop %v2493
        %v2495 = vsel %vm1552, %v2492, 0.0
        %2496 = vadd.xlane.f32.xlu0 %v2495
        %v2497 = vpop.xlane.xlu0 %2496
        %v2498 = vsel %vm1552, %v2494, 0.0
        %2499 = vadd.xlane.f32.xlu0 %v2498
        %v2500 = vpop.xlane.xlu0 %2499
        %v2501 = vrcp.pop %v2497
        %v2502 = vmul.f32 %v2497, %v2501
        %v2503 = vsub.f32 1.0, %v2502
        %v2504 = vmul.f32 %v2501, %v2503
        %v2505 = vadd.f32 %v2501, %v2504
        %vm2506 = vweird.f32 %v2497
        %vm2507 = vweird.f32 %v2501
        %vm2508 = vmor %vm2506, %vm2507
        %v2509 = vsel %vm2508, %v2501, %v2505
        %v2510 = vand.u32 2147483647, %v2497
        %vm2511 = vcmp.eq.f32.partialorder %v2510, 8.507059e+37
        %v2512 = vand.u32 %v2497, 2147483648
        %v2513 = vor.u32 1.1754944e-38, %v2512
        %v2514 = vsel %vm2511, %v2513, %v2509
        %v2515 = vmul.f32 %v2492, %v2514
        %v2516 = vrcp.pop %v2500
        %v2517 = vmul.f32 %v2500, %v2516
        %v2518 = vsub.f32 1.0, %v2517
        %v2519 = vmul.f32 %v2516, %v2518
        %v2520 = vadd.f32 %v2516, %v2519
        %vm2521 = vweird.f32 %v2500
        %vm2522 = vweird.f32 %v2516
        %vm2523 = vmor %vm2521, %vm2522
        %v2524 = vsel %vm2523, %v2516, %v2520
        %v2525 = vand.u32 2147483647, %v2500
        %vm2526 = vcmp.eq.f32.partialorder %v2525, 8.507059e+37
        %v2527 = vand.u32 %v2500, 2147483648
        %v2528 = vor.u32 1.1754944e-38, %v2527
        %v2529 = vsel %vm2526, %v2528, %v2524
        %v2530 = vmul.f32 %v2494, %v2529
        %v2531 = vpack.c.bf16 %v2530, %v2515
        %v2534 = vunpack.c.l.b16 %v1508
        %v2535 = vunpack.c.l.b16 %v1513
        %v2536 = vpack.c.b16 %v2535, %v2534
        %v2539 = vsel %vm1552, %v2531, 0
        %2541 = vmatpush.bf16.msra.mxu0 0
        %2542 = vmatpush.bf16.msra.mxu0 0
        %2543 = vmatpush.bf16.msra.mxu0 0
        %2544 = vmatpush.bf16.msra.mxu0 0
        %2545 = vmatpush.bf16.msra.mxu0 0
        %2546 = vmatpush.bf16.msra.mxu0 0
        %2547 = vmatpush.bf16.msra.mxu0 0
        %2548 = vmatpush.bf16.msra.mxu0 %v2536
        %2549 = vmatmul.bf16.gmra.mxu0 %v2539
        %v2550 = vpop.f32.mrf.mxu0
        %v2551 = vadd.f32 0.0, %v2550
        %v2552 = vpop.f32.mrf.mxu0
        %v2553 = vadd.f32 0.0, %v2552
        %2554 = vdwg.mxu0
        %v2555 = vpack.c.bf16 %v2553, %v2551
        %v2556 = vld [vmem:[%s497] sm:$0xf]
        %v2557 = vld [vmem:[%s497 + $0x4] sm:$0xf]
        %v2558 = vld [vmem:[%s497 + $0x8] sm:$0xf]
        %v2559 = vld [vmem:[%s497 + $0xc] sm:$0xf]
        %v2560 = vld [vmem:[%s497 + $0x10] sm:$0xf]
        %v2561 = vld [vmem:[%s497 + $0x14] sm:$0xf]
        %v2562 = vld [vmem:[%s497 + $0x18] sm:$0xf]
        %v2563 = vld [vmem:[%s497 + $0x1c] sm:$0xf]
        %2564 = vrot.lane.b32.xlu0 %v2451, 64
        %v2565 = vpop.permute.xlu0 %2564
        %2566 = vrot.lane.b32.xlu0 %v2456, 64
        %v2567 = vpop.permute.xlu0 %2566
        %v2569 = vsel %vm1525, %v2565, 0
        %v2572 = vsel %vm1525, %v2567, 0
        %2574 = vmatpush.bf16.xpose.msra.mxu0 0
        %2575 = vmatpush.bf16.xpose.msra.mxu0 0
        %2576 = vmatpush.bf16.xpose.msra.mxu0 0
        %2577 = vmatpush.bf16.xpose.msra.mxu0 0
        %2578 = vmatpush.bf16.xpose.msra.mxu0 0
        %2579 = vmatpush.bf16.xpose.msra.mxu0 0
        %2580 = vmatpush.bf16.xpose.msra.mxu0 0
        %2581 = vmatpush.bf16.xpose.msra.mxu0 %v2572
        %2582 = vmatmul.bf16.gmra.mxu0 %v2569
        %v2583 = vpop.f32.mrf.mxu0
        %v2584 = vadd.f32 0.0, %v2583
        %v2585 = vpop.f32.mrf.mxu0
        %v2586 = vadd.f32 0.0, %v2585
        %2587 = vdwg.mxu0
        %v2588 = vmul.f32 %v2584, 0.125
        %v2589 = vmul.f32 %v2586, 0.125
        %v2590 = vld [vmem:[%s1660] sm:$0xff]
        %v2591 = vld [vmem:[%s1660 + $0x8] sm:$0xff]
        %v2592 = vadd.f32 %v2588, %v2590
        %v2593 = vadd.f32 %v2589, %v2591
        %v2594 = vsel %vm1552, %v2592, -inf
        %2595 = vmax.xlane.f32.xlu0 %v2594
        %v2596 = vpop.xlane.xlu0 %2595
        %v2597 = vsel %vm1552, %v2593, -inf
        %2598 = vmax.xlane.f32.xlu0 %v2597
        %v2599 = vpop.xlane.xlu0 %2598
        %v2600 = vsub.f32 %v2592, %v2596
        %v2601 = vsub.f32 %v2593, %v2599
        %v2602 = vmul.f32 %v2600, 1.442695
        %v2603 = vpow.pop %v2602
        %v2604 = vmul.f32 %v2601, 1.442695
        %v2605 = vpow.pop %v2604
        %v2606 = vsel %vm1552, %v2603, 0.0
        %2607 = vadd.xlane.f32.xlu0 %v2606
        %v2608 = vpop.xlane.xlu0 %2607
        %v2609 = vsel %vm1552, %v2605, 0.0
        %2610 = vadd.xlane.f32.xlu0 %v2609
        %v2611 = vpop.xlane.xlu0 %2610
        %v2612 = vrcp.pop %v2608
        %v2613 = vmul.f32 %v2608, %v2612
        %v2614 = vsub.f32 1.0, %v2613
        %v2615 = vmul.f32 %v2612, %v2614
        %v2616 = vadd.f32 %v2612, %v2615
        %vm2617 = vweird.f32 %v2608
        %vm2618 = vweird.f32 %v2612
        %vm2619 = vmor %vm2617, %vm2618
        %v2620 = vsel %vm2619, %v2612, %v2616
        %v2621 = vand.u32 2147483647, %v2608
        %vm2622 = vcmp.eq.f32.partialorder %v2621, 8.507059e+37
        %v2623 = vand.u32 %v2608, 2147483648
        %v2624 = vor.u32 1.1754944e-38, %v2623
        %v2625 = vsel %vm2622, %v2624, %v2620
        %v2626 = vmul.f32 %v2603, %v2625
        %v2627 = vrcp.pop %v2611
        %v2628 = vmul.f32 %v2611, %v2627
        %v2629 = vsub.f32 1.0, %v2628
        %v2630 = vmul.f32 %v2627, %v2629
        %v2631 = vadd.f32 %v2627, %v2630
        %vm2632 = vweird.f32 %v2611
        %vm2633 = vweird.f32 %v2627
        %vm2634 = vmor %vm2632, %vm2633
        %v2635 = vsel %vm2634, %v2627, %v2631
        %v2636 = vand.u32 2147483647, %v2611
        %vm2637 = vcmp.eq.f32.partialorder %v2636, 8.507059e+37
        %v2638 = vand.u32 %v2611, 2147483648
        %v2639 = vor.u32 1.1754944e-38, %v2638
        %v2640 = vsel %vm2637, %v2639, %v2635
        %v2641 = vmul.f32 %v2605, %v2640
        %v2642 = vpack.c.bf16 %v2641, %v2626
        %2643 = vrot.lane.b32.xlu0 %v2536, 64
        %v2644 = vpop.permute.xlu0 %2643
        %v2647 = vsel %vm1552, %v2642, 0
        %2649 = vmatpush.bf16.msra.mxu0 0
        %2650 = vmatpush.bf16.msra.mxu0 0
        %2651 = vmatpush.bf16.msra.mxu0 0
        %2652 = vmatpush.bf16.msra.mxu0 0
        %2653 = vmatpush.bf16.msra.mxu0 0
        %2654 = vmatpush.bf16.msra.mxu0 0
        %2655 = vmatpush.bf16.msra.mxu0 0
        %2656 = vmatpush.bf16.msra.mxu0 %v2644
        %2657 = vmatmul.bf16.gmra.mxu0 %v2647
        %v2658 = vpop.f32.mrf.mxu0
        %v2659 = vadd.f32 0.0, %v2658
        %v2660 = vpop.f32.mrf.mxu0
        %v2661 = vadd.f32 0.0, %v2660
        %2662 = vdwg.mxu0
        %v2663 = vpack.c.bf16 %v2661, %v2659
        %v2664 = vld [vmem:[%s497 + $0x20] sm:$0xf]
        %v2665 = vld [vmem:[%s497 + $0x24] sm:$0xf]
        %v2666 = vld [vmem:[%s497 + $0x28] sm:$0xf]
        %v2667 = vld [vmem:[%s497 + $0x2c] sm:$0xf]
        %v2668 = vld [vmem:[%s497 + $0x30] sm:$0xf]
        %v2669 = vld [vmem:[%s497 + $0x34] sm:$0xf]
        %v2670 = vld [vmem:[%s497 + $0x38] sm:$0xf]
        %v2671 = vld [vmem:[%s497 + $0x3c] sm:$0xf]
        %v2680 = vunpack.c.l.b16 %v2664
        %v2681 = vunpack.c.l.b16 %v2665
        %v2682 = vunpack.c.l.b16 %v2666
        %v2683 = vunpack.c.l.b16 %v2667
        %v2684 = vunpack.c.l.b16 %v2668
        %v2685 = vunpack.c.l.b16 %v2669
        %v2686 = vunpack.c.l.b16 %v2670
        %v2687 = vunpack.c.l.b16 %v2671
        %v2688 = vpack.c.b16 %v2681, %v2680
        %v2689 = vpack.c.b16 %v2683, %v2682
        %v2690 = vpack.c.b16 %v2685, %v2684
        %v2691 = vpack.c.b16 %v2687, %v2686
        %v2697 = vsel %vm1525, %v2663, 0
        %2699 = vmatpush.bf16.msra.mxu0 0
        %2700 = vmatpush.bf16.msra.mxu0 0
        %2701 = vmatpush.bf16.msra.mxu0 0
        %2702 = vmatpush.bf16.msra.mxu0 0
        %2703 = vmatpush.bf16.msra.mxu0 %v2691
        %2704 = vmatpush.bf16.msra.mxu0 %v2690
        %2705 = vmatpush.bf16.msra.mxu0 %v2689
        %2706 = vmatpush.bf16.msra.mxu0 %v2688
        %2707 = vmatmul.bf16.gmra.mxu0 %v2697
        %v2708 = vpop.f32.mrf.mxu0
        %v2709 = vadd.f32 0.0, %v2708
        %v2710 = vpop.f32.mrf.mxu0
        %v2711 = vadd.f32 0.0, %v2710
        %2712 = vdwg.mxu0
        %v2721 = vunpack.c.l.b16 %v2556
        %v2722 = vunpack.c.l.b16 %v2557
        %v2723 = vunpack.c.l.b16 %v2558
        %v2724 = vunpack.c.l.b16 %v2559
        %v2725 = vunpack.c.l.b16 %v2560
        %v2726 = vunpack.c.l.b16 %v2561
        %v2727 = vunpack.c.l.b16 %v2562
        %v2728 = vunpack.c.l.b16 %v2563
        %v2729 = vpack.c.b16 %v2722, %v2721
        %v2730 = vpack.c.b16 %v2724, %v2723
        %v2731 = vpack.c.b16 %v2726, %v2725
        %v2732 = vpack.c.b16 %v2728, %v2727
        %v2738 = vsel %vm1525, %v2555, 0
        %2740 = vmatpush.bf16.msra.mxu0 0
        %2741 = vmatpush.bf16.msra.mxu0 0
        %2742 = vmatpush.bf16.msra.mxu0 0
        %2743 = vmatpush.bf16.msra.mxu0 0
        %2744 = vmatpush.bf16.msra.mxu0 %v2732
        %2745 = vmatpush.bf16.msra.mxu0 %v2731
        %2746 = vmatpush.bf16.msra.mxu0 %v2730
        %2747 = vmatpush.bf16.msra.mxu0 %v2729
        %2748 = vmatmul.bf16.gmra.mxu0 %v2738
        %v2749 = vpop.f32.mrf.mxu0
        %v2750 = vadd.f32 %v2709, %v2749
        %v2751 = vpop.f32.mrf.mxu0
        %v2752 = vadd.f32 %v2711, %v2751
        %2753 = vdwg.mxu0
        %v2754 = vunpack.c.h.b16 %v1505
        %v2755 = vunpack.c.h.b16 %v1510
        %v2756 = vpack.c.b16 %v2755, %v2754
        %v2759 = vunpack.c.l.b16 %v1507
        %v2760 = vunpack.c.l.b16 %v1512
        %v2761 = vpack.c.b16 %v2760, %v2759
        %v2763 = vsel %vm1525, %v2756, 0
        %v2766 = vsel %vm1525, %v2761, 0
        %2768 = vmatpush.bf16.xpose.msra.mxu0 0
        %2769 = vmatpush.bf16.xpose.msra.mxu0 0
        %2770 = vmatpush.bf16.xpose.msra.mxu0 0
        %2771 = vmatpush.bf16.xpose.msra.mxu0 0
        %2772 = vmatpush.bf16.xpose.msra.mxu0 0
        %2773 = vmatpush.bf16.xpose.msra.mxu0 0
        %2774 = vmatpush.bf16.xpose.msra.mxu0 0
        %2775 = vmatpush.bf16.xpose.msra.mxu0 %v2766
        %2776 = vmatmul.bf16.gmra.mxu0 %v2763
        %v2777 = vpop.f32.mrf.mxu0
        %v2778 = vadd.f32 0.0, %v2777
        %v2779 = vpop.f32.mrf.mxu0
        %v2780 = vadd.f32 0.0, %v2779
        %2781 = vdwg.mxu0
        %v2782 = vmul.f32 %v2778, 0.125
        %v2783 = vmul.f32 %v2780, 0.125
        %v2784 = vld [vmem:[%s1855] sm:$0xff]
        %v2785 = vld [vmem:[%s1855 + $0x8] sm:$0xff]
        %v2786 = vadd.f32 %v2782, %v2784
        %v2787 = vadd.f32 %v2783, %v2785
        %v2788 = vsel %vm1552, %v2786, -inf
        %2789 = vmax.xlane.f32.xlu0 %v2788
        %v2790 = vpop.xlane.xlu0 %2789
        %v2791 = vsel %vm1552, %v2787, -inf
        %2792 = vmax.xlane.f32.xlu0 %v2791
        %v2793 = vpop.xlane.xlu0 %2792
        %v2794 = vsub.f32 %v2786, %v2790
        %v2795 = vsub.f32 %v2787, %v2793
        %v2796 = vmul.f32 %v2794, 1.442695
        %v2797 = vpow.pop %v2796
        %v2798 = vmul.f32 %v2795, 1.442695
        %v2799 = vpow.pop %v2798
        %v2800 = vsel %vm1552, %v2797, 0.0
        %2801 = vadd.xlane.f32.xlu0 %v2800
        %v2802 = vpop.xlane.xlu0 %2801
        %v2803 = vsel %vm1552, %v2799, 0.0
        %2804 = vadd.xlane.f32.xlu0 %v2803
        %v2805 = vpop.xlane.xlu0 %2804
        %v2806 = vrcp.pop %v2802
        %v2807 = vmul.f32 %v2802, %v2806
        %v2808 = vsub.f32 1.0, %v2807
        %v2809 = vmul.f32 %v2806, %v2808
        %v2810 = vadd.f32 %v2806, %v2809
        %vm2811 = vweird.f32 %v2802
        %vm2812 = vweird.f32 %v2806
        %vm2813 = vmor %vm2811, %vm2812
        %v2814 = vsel %vm2813, %v2806, %v2810
        %v2815 = vand.u32 2147483647, %v2802
        %vm2816 = vcmp.eq.f32.partialorder %v2815, 8.507059e+37
        %v2817 = vand.u32 %v2802, 2147483648
        %v2818 = vor.u32 1.1754944e-38, %v2817
        %v2819 = vsel %vm2816, %v2818, %v2814
        %v2820 = vmul.f32 %v2797, %v2819
        %v2821 = vrcp.pop %v2805
        %v2822 = vmul.f32 %v2805, %v2821
        %v2823 = vsub.f32 1.0, %v2822
        %v2824 = vmul.f32 %v2821, %v2823
        %v2825 = vadd.f32 %v2821, %v2824
        %vm2826 = vweird.f32 %v2805
        %vm2827 = vweird.f32 %v2821
        %vm2828 = vmor %vm2826, %vm2827
        %v2829 = vsel %vm2828, %v2821, %v2825
        %v2830 = vand.u32 2147483647, %v2805
        %vm2831 = vcmp.eq.f32.partialorder %v2830, 8.507059e+37
        %v2832 = vand.u32 %v2805, 2147483648
        %v2833 = vor.u32 1.1754944e-38, %v2832
        %v2834 = vsel %vm2831, %v2833, %v2829
        %v2835 = vmul.f32 %v2799, %v2834
        %v2836 = vpack.c.bf16 %v2835, %v2820
        %v2837 = vunpack.c.h.b16 %v1508
        %v2838 = vunpack.c.h.b16 %v1513
        %v2839 = vpack.c.b16 %v2838, %v2837
        %v2842 = vsel %vm1552, %v2836, 0
        %2844 = vmatpush.bf16.msra.mxu0 0
        %2845 = vmatpush.bf16.msra.mxu0 0
        %2846 = vmatpush.bf16.msra.mxu0 0
        %2847 = vmatpush.bf16.msra.mxu0 0
        %2848 = vmatpush.bf16.msra.mxu0 0
        %2849 = vmatpush.bf16.msra.mxu0 0
        %2850 = vmatpush.bf16.msra.mxu0 0
        %2851 = vmatpush.bf16.msra.mxu0 %v2839
        %2852 = vmatmul.bf16.gmra.mxu0 %v2842
        %v2853 = vpop.f32.mrf.mxu0
        %v2854 = vadd.f32 0.0, %v2853
        %v2855 = vpop.f32.mrf.mxu0
        %v2856 = vadd.f32 0.0, %v2855
        %2857 = vdwg.mxu0
        %v2858 = vpack.c.bf16 %v2856, %v2854
        %v2859 = vld [vmem:[%s497 + $0x40] sm:$0xf]
        %v2860 = vld [vmem:[%s497 + $0x44] sm:$0xf]
        %v2861 = vld [vmem:[%s497 + $0x48] sm:$0xf]
        %v2862 = vld [vmem:[%s497 + $0x4c] sm:$0xf]
        %v2863 = vld [vmem:[%s497 + $0x50] sm:$0xf]
        %v2864 = vld [vmem:[%s497 + $0x54] sm:$0xf]
        %v2865 = vld [vmem:[%s497 + $0x58] sm:$0xf]
        %v2866 = vld [vmem:[%s497 + $0x5c] sm:$0xf]
        %v2875 = vunpack.c.l.b16 %v2859
        %v2876 = vunpack.c.l.b16 %v2860
        %v2877 = vunpack.c.l.b16 %v2861
        %v2878 = vunpack.c.l.b16 %v2862
        %v2879 = vunpack.c.l.b16 %v2863
        %v2880 = vunpack.c.l.b16 %v2864
        %v2881 = vunpack.c.l.b16 %v2865
        %v2882 = vunpack.c.l.b16 %v2866
        %v2883 = vpack.c.b16 %v2876, %v2875
        %v2884 = vpack.c.b16 %v2878, %v2877
        %v2885 = vpack.c.b16 %v2880, %v2879
        %v2886 = vpack.c.b16 %v2882, %v2881
        %v2892 = vsel %vm1525, %v2858, 0
        %2894 = vmatpush.bf16.msra.mxu0 0
        %2895 = vmatpush.bf16.msra.mxu0 0
        %2896 = vmatpush.bf16.msra.mxu0 0
        %2897 = vmatpush.bf16.msra.mxu0 0
        %2898 = vmatpush.bf16.msra.mxu0 %v2886
        %2899 = vmatpush.bf16.msra.mxu0 %v2885
        %2900 = vmatpush.bf16.msra.mxu0 %v2884
        %2901 = vmatpush.bf16.msra.mxu0 %v2883
        %2902 = vmatmul.bf16.gmra.mxu0 %v2892
        %v2903 = vpop.f32.mrf.mxu0
        %v2904 = vadd.f32 0.0, %v2903
        %v2905 = vpop.f32.mrf.mxu0
        %v2906 = vadd.f32 0.0, %v2905
        %2907 = vdwg.mxu0
        %v2908 = vadd.f32 %v2750, %v2904
        %v2909 = vadd.f32 %v2752, %v2906
        %2910 = vrot.lane.b32.xlu0 %v2756, 64
        %v2911 = vpop.permute.xlu0 %2910
        %2912 = vrot.lane.b32.xlu0 %v2761, 64
        %v2913 = vpop.permute.xlu0 %2912
        %v2915 = vsel %vm1525, %v2911, 0
        %v2918 = vsel %vm1525, %v2913, 0
        %2920 = vmatpush.bf16.xpose.msra.mxu0 0
        %2921 = vmatpush.bf16.xpose.msra.mxu0 0
        %2922 = vmatpush.bf16.xpose.msra.mxu0 0
        %2923 = vmatpush.bf16.xpose.msra.mxu0 0
        %2924 = vmatpush.bf16.xpose.msra.mxu0 0
        %2925 = vmatpush.bf16.xpose.msra.mxu0 0
        %2926 = vmatpush.bf16.xpose.msra.mxu0 0
        %2927 = vmatpush.bf16.xpose.msra.mxu0 %v2918
        %2928 = vmatmul.bf16.gmra.mxu0 %v2915
        %v2929 = vpop.f32.mrf.mxu0
        %v2930 = vadd.f32 0.0, %v2929
        %v2931 = vpop.f32.mrf.mxu0
        %v2932 = vadd.f32 0.0, %v2931
        %2933 = vdwg.mxu0
        %v2934 = vmul.f32 %v2930, 0.125
        %v2935 = vmul.f32 %v2932, 0.125
        %v2936 = vld [vmem:[%s2008] sm:$0xff]
        %v2937 = vld [vmem:[%s2008 + $0x8] sm:$0xff]
        %v2938 = vadd.f32 %v2934, %v2936
        %v2939 = vadd.f32 %v2935, %v2937
        %v2940 = vsel %vm1552, %v2938, -inf
        %2941 = vmax.xlane.f32.xlu0 %v2940
        %v2942 = vpop.xlane.xlu0 %2941
        %v2943 = vsel %vm1552, %v2939, -inf
        %2944 = vmax.xlane.f32.xlu0 %v2943
        %v2945 = vpop.xlane.xlu0 %2944
        %v2946 = vsub.f32 %v2938, %v2942
        %v2947 = vsub.f32 %v2939, %v2945
        %v2948 = vmul.f32 %v2946, 1.442695
        %v2949 = vpow.pop %v2948
        %v2950 = vmul.f32 %v2947, 1.442695
        %v2951 = vpow.pop %v2950
        %v2952 = vsel %vm1552, %v2949, 0.0
        %2953 = vadd.xlane.f32.xlu0 %v2952
        %v2954 = vpop.xlane.xlu0 %2953
        %v2955 = vsel %vm1552, %v2951, 0.0
        %2956 = vadd.xlane.f32.xlu0 %v2955
        %v2957 = vpop.xlane.xlu0 %2956
        %v2958 = vrcp.pop %v2954
        %v2959 = vmul.f32 %v2954, %v2958
        %v2960 = vsub.f32 1.0, %v2959
        %v2961 = vmul.f32 %v2958, %v2960
        %v2962 = vadd.f32 %v2958, %v2961
        %vm2963 = vweird.f32 %v2954
        %vm2964 = vweird.f32 %v2958
        %vm2965 = vmor %vm2963, %vm2964
        %v2966 = vsel %vm2965, %v2958, %v2962
        %v2967 = vand.u32 2147483647, %v2954
        %vm2968 = vcmp.eq.f32.partialorder %v2967, 8.507059e+37
        %v2969 = vand.u32 %v2954, 2147483648
        %v2970 = vor.u32 1.1754944e-38, %v2969
        %v2971 = vsel %vm2968, %v2970, %v2966
        %v2972 = vmul.f32 %v2949, %v2971
        %v2973 = vrcp.pop %v2957
        %v2974 = vmul.f32 %v2957, %v2973
        %v2975 = vsub.f32 1.0, %v2974
        %v2976 = vmul.f32 %v2973, %v2975
        %v2977 = vadd.f32 %v2973, %v2976
        %vm2978 = vweird.f32 %v2957
        %vm2979 = vweird.f32 %v2973
        %vm2980 = vmor %vm2978, %vm2979
        %v2981 = vsel %vm2980, %v2973, %v2977
        %v2982 = vand.u32 2147483647, %v2957
        %vm2983 = vcmp.eq.f32.partialorder %v2982, 8.507059e+37
        %v2984 = vand.u32 %v2957, 2147483648
        %v2985 = vor.u32 1.1754944e-38, %v2984
        %v2986 = vsel %vm2983, %v2985, %v2981
        %v2987 = vmul.f32 %v2951, %v2986
        %v2988 = vpack.c.bf16 %v2987, %v2972
        %2989 = vrot.lane.b32.xlu0 %v2839, 64
        %v2990 = vpop.permute.xlu0 %2989
        %v2993 = vsel %vm1552, %v2988, 0
        %2995 = vmatpush.bf16.msra.mxu0 0
        %2996 = vmatpush.bf16.msra.mxu0 0
        %2997 = vmatpush.bf16.msra.mxu0 0
        %2998 = vmatpush.bf16.msra.mxu0 0
        %2999 = vmatpush.bf16.msra.mxu0 0
        %3000 = vmatpush.bf16.msra.mxu0 0
        %3001 = vmatpush.bf16.msra.mxu0 0
        %3002 = vmatpush.bf16.msra.mxu0 %v2990
        %3003 = vmatmul.bf16.gmra.mxu0 %v2993
        %v3004 = vpop.f32.mrf.mxu0
        %v3005 = vadd.f32 0.0, %v3004
        %v3006 = vpop.f32.mrf.mxu0
        %v3007 = vadd.f32 0.0, %v3006
        %3008 = vdwg.mxu0
        %v3009 = vpack.c.bf16 %v3007, %v3005
        %v3010 = vld [vmem:[%s497 + $0x60] sm:$0xf]
        %v3011 = vld [vmem:[%s497 + $0x64] sm:$0xf]
        %v3012 = vld [vmem:[%s497 + $0x68] sm:$0xf]
        %v3013 = vld [vmem:[%s497 + $0x6c] sm:$0xf]
        %v3014 = vld [vmem:[%s497 + $0x70] sm:$0xf]
        %v3015 = vld [vmem:[%s497 + $0x74] sm:$0xf]
        %v3016 = vld [vmem:[%s497 + $0x78] sm:$0xf]
        %v3017 = vld [vmem:[%s497 + $0x7c] sm:$0xf]
        %v3026 = vunpack.c.l.b16 %v3010
        %v3027 = vunpack.c.l.b16 %v3011
        %v3028 = vunpack.c.l.b16 %v3012
        %v3029 = vunpack.c.l.b16 %v3013
        %v3030 = vunpack.c.l.b16 %v3014
        %v3031 = vunpack.c.l.b16 %v3015
        %v3032 = vunpack.c.l.b16 %v3016
        %v3033 = vunpack.c.l.b16 %v3017
        %v3034 = vpack.c.b16 %v3027, %v3026
        %v3035 = vpack.c.b16 %v3029, %v3028
        %v3036 = vpack.c.b16 %v3031, %v3030
        %v3037 = vpack.c.b16 %v3033, %v3032
        %v3043 = vsel %vm1525, %v3009, 0
        %3045 = vmatpush.bf16.msra.mxu0 0
        %3046 = vmatpush.bf16.msra.mxu0 0
        %3047 = vmatpush.bf16.msra.mxu0 0
        %3048 = vmatpush.bf16.msra.mxu0 0
        %3049 = vmatpush.bf16.msra.mxu0 %v3037
        %3050 = vmatpush.bf16.msra.mxu0 %v3036
        %3051 = vmatpush.bf16.msra.mxu0 %v3035
        %3052 = vmatpush.bf16.msra.mxu0 %v3034
        %3053 = vmatmul.bf16.gmra.mxu0 %v3043
        %v3054 = vpop.f32.mrf.mxu0
        %v3055 = vadd.f32 0.0, %v3054
        %v3056 = vpop.f32.mrf.mxu0
        %v3057 = vadd.f32 0.0, %v3056
        %3058 = vdwg.mxu0
        %v3059 = vadd.f32 %v2908, %v3055
        %v3060 = vadd.f32 %v2909, %v3057
        %v3061 = vunpack.c.l.b16 %v1506
        %v3062 = vunpack.c.l.b16 %v1511
        %v3063 = vpack.c.b16 %v3062, %v3061
        %v3064 = vunpack.c.h.b16 %v1507
        %v3065 = vunpack.c.h.b16 %v1512
        %v3066 = vpack.c.b16 %v3065, %v3064
        %v3068 = vsel %vm1525, %v3063, 0
        %v3071 = vsel %vm1525, %v3066, 0
        %3073 = vmatpush.bf16.xpose.msra.mxu0 0
        %3074 = vmatpush.bf16.xpose.msra.mxu0 0
        %3075 = vmatpush.bf16.xpose.msra.mxu0 0
        %3076 = vmatpush.bf16.xpose.msra.mxu0 0
        %3077 = vmatpush.bf16.xpose.msra.mxu0 0
        %3078 = vmatpush.bf16.xpose.msra.mxu0 0
        %3079 = vmatpush.bf16.xpose.msra.mxu0 0
        %3080 = vmatpush.bf16.xpose.msra.mxu0 %v3071
        %3081 = vmatmul.bf16.gmra.mxu0 %v3068
        %v3082 = vpop.f32.mrf.mxu0
        %v3083 = vadd.f32 0.0, %v3082
        %v3084 = vpop.f32.mrf.mxu0
        %v3085 = vadd.f32 0.0, %v3084
        %3086 = vdwg.mxu0
        %v3087 = vmul.f32 %v3083, 0.125
        %v3088 = vmul.f32 %v3085, 0.125
        %v3089 = vld [vmem:[%s2162] sm:$0xff]
        %v3090 = vld [vmem:[%s2162 + $0x8] sm:$0xff]
        %v3091 = vadd.f32 %v3087, %v3089
        %v3092 = vadd.f32 %v3088, %v3090
        %v3093 = vsel %vm1552, %v3091, -inf
        %3094 = vmax.xlane.f32.xlu0 %v3093
        %v3095 = vpop.xlane.xlu0 %3094
        %v3096 = vsel %vm1552, %v3092, -inf
        %3097 = vmax.xlane.f32.xlu0 %v3096
        %v3098 = vpop.xlane.xlu0 %3097
        %v3099 = vsub.f32 %v3091, %v3095
        %v3100 = vsub.f32 %v3092, %v3098
        %v3101 = vmul.f32 %v3099, 1.442695
        %v3102 = vpow.pop %v3101
        %v3103 = vmul.f32 %v3100, 1.442695
        %v3104 = vpow.pop %v3103
        %v3105 = vsel %vm1552, %v3102, 0.0
        %3106 = vadd.xlane.f32.xlu0 %v3105
        %v3107 = vpop.xlane.xlu0 %3106
        %v3108 = vsel %vm1552, %v3104, 0.0
        %3109 = vadd.xlane.f32.xlu0 %v3108
        %v3110 = vpop.xlane.xlu0 %3109
        %v3111 = vrcp.pop %v3107
        %v3112 = vmul.f32 %v3107, %v3111
        %v3113 = vsub.f32 1.0, %v3112
        %v3114 = vmul.f32 %v3111, %v3113
        %v3115 = vadd.f32 %v3111, %v3114
        %vm3116 = vweird.f32 %v3107
        %vm3117 = vweird.f32 %v3111
        %vm3118 = vmor %vm3116, %vm3117
        %v3119 = vsel %vm3118, %v3111, %v3115
        %v3120 = vand.u32 2147483647, %v3107
        %vm3121 = vcmp.eq.f32.partialorder %v3120, 8.507059e+37
        %v3122 = vand.u32 %v3107, 2147483648
        %v3123 = vor.u32 1.1754944e-38, %v3122
        %v3124 = vsel %vm3121, %v3123, %v3119
        %v3125 = vmul.f32 %v3102, %v3124
        %v3126 = vrcp.pop %v3110
        %v3127 = vmul.f32 %v3110, %v3126
        %v3128 = vsub.f32 1.0, %v3127
        %v3129 = vmul.f32 %v3126, %v3128
        %v3130 = vadd.f32 %v3126, %v3129
        %vm3131 = vweird.f32 %v3110
        %vm3132 = vweird.f32 %v3126
        %vm3133 = vmor %vm3131, %vm3132
        %v3134 = vsel %vm3133, %v3126, %v3130
        %v3135 = vand.u32 2147483647, %v3110
        %vm3136 = vcmp.eq.f32.partialorder %v3135, 8.507059e+37
        %v3137 = vand.u32 %v3110, 2147483648
        %v3138 = vor.u32 1.1754944e-38, %v3137
        %v3139 = vsel %vm3136, %v3138, %v3134
        %v3140 = vmul.f32 %v3104, %v3139
        %v3141 = vpack.c.bf16 %v3140, %v3125
        %v3144 = vunpack.c.l.b16 %v1509
        %v3145 = vunpack.c.l.b16 %v1514
        %v3146 = vpack.c.b16 %v3145, %v3144
        %v3149 = vsel %vm1552, %v3141, 0
        %3151 = vmatpush.bf16.msra.mxu0 0
        %3152 = vmatpush.bf16.msra.mxu0 0
        %3153 = vmatpush.bf16.msra.mxu0 0
        %3154 = vmatpush.bf16.msra.mxu0 0
        %3155 = vmatpush.bf16.msra.mxu0 0
        %3156 = vmatpush.bf16.msra.mxu0 0
        %3157 = vmatpush.bf16.msra.mxu0 0
        %3158 = vmatpush.bf16.msra.mxu0 %v3146
        %3159 = vmatmul.bf16.gmra.mxu0 %v3149
        %v3160 = vpop.f32.mrf.mxu0
        %v3161 = vadd.f32 0.0, %v3160
        %v3162 = vpop.f32.mrf.mxu0
        %v3163 = vadd.f32 0.0, %v3162
        %3164 = vdwg.mxu0
        %v3165 = vpack.c.bf16 %v3163, %v3161
        %v3166 = vld [vmem:[%s497 + $0x80] sm:$0xf]
        %v3167 = vld [vmem:[%s497 + $0x84] sm:$0xf]
        %v3168 = vld [vmem:[%s497 + $0x88] sm:$0xf]
        %v3169 = vld [vmem:[%s497 + $0x8c] sm:$0xf]
        %v3170 = vld [vmem:[%s497 + $0x90] sm:$0xf]
        %v3171 = vld [vmem:[%s497 + $0x94] sm:$0xf]
        %v3172 = vld [vmem:[%s497 + $0x98] sm:$0xf]
        %v3173 = vld [vmem:[%s497 + $0x9c] sm:$0xf]
        %v3182 = vunpack.c.l.b16 %v3166
        %v3183 = vunpack.c.l.b16 %v3167
        %v3184 = vunpack.c.l.b16 %v3168
        %v3185 = vunpack.c.l.b16 %v3169
        %v3186 = vunpack.c.l.b16 %v3170
        %v3187 = vunpack.c.l.b16 %v3171
        %v3188 = vunpack.c.l.b16 %v3172
        %v3189 = vunpack.c.l.b16 %v3173
        %v3190 = vpack.c.b16 %v3183, %v3182
        %v3191 = vpack.c.b16 %v3185, %v3184
        %v3192 = vpack.c.b16 %v3187, %v3186
        %v3193 = vpack.c.b16 %v3189, %v3188
        %v3199 = vsel %vm1525, %v3165, 0
        %3201 = vmatpush.bf16.msra.mxu0 0
        %3202 = vmatpush.bf16.msra.mxu0 0
        %3203 = vmatpush.bf16.msra.mxu0 0
        %3204 = vmatpush.bf16.msra.mxu0 0
        %3205 = vmatpush.bf16.msra.mxu0 %v3193
        %3206 = vmatpush.bf16.msra.mxu0 %v3192
        %3207 = vmatpush.bf16.msra.mxu0 %v3191
        %3208 = vmatpush.bf16.msra.mxu0 %v3190
        %3209 = vmatmul.bf16.gmra.mxu0 %v3199
        %v3210 = vpop.f32.mrf.mxu0
        %v3211 = vadd.f32 0.0, %v3210
        %v3212 = vpop.f32.mrf.mxu0
        %v3213 = vadd.f32 0.0, %v3212
        %3214 = vdwg.mxu0
        %v3215 = vadd.f32 %v3059, %v3211
        %v3216 = vadd.f32 %v3060, %v3213
        %3217 = vrot.lane.b32.xlu0 %v3063, 64
        %v3218 = vpop.permute.xlu0 %3217
        %3219 = vrot.lane.b32.xlu0 %v3066, 64
        %v3220 = vpop.permute.xlu0 %3219
        %v3222 = vsel %vm1525, %v3218, 0
        %v3225 = vsel %vm1525, %v3220, 0
        %3227 = vmatpush.bf16.xpose.msra.mxu0 0
        %3228 = vmatpush.bf16.xpose.msra.mxu0 0
        %3229 = vmatpush.bf16.xpose.msra.mxu0 0
        %3230 = vmatpush.bf16.xpose.msra.mxu0 0
        %3231 = vmatpush.bf16.xpose.msra.mxu0 0
        %3232 = vmatpush.bf16.xpose.msra.mxu0 0
        %3233 = vmatpush.bf16.xpose.msra.mxu0 0
        %3234 = vmatpush.bf16.xpose.msra.mxu0 %v3225
        %3235 = vmatmul.bf16.gmra.mxu0 %v3222
        %v3236 = vpop.f32.mrf.mxu0
        %v3237 = vadd.f32 0.0, %v3236
        %v3238 = vpop.f32.mrf.mxu0
        %v3239 = vadd.f32 0.0, %v3238
        %3240 = vdwg.mxu0
        %v3241 = vmul.f32 %v3237, 0.125
        %v3242 = vmul.f32 %v3239, 0.125
        %v3243 = vld [vmem:[%s2317] sm:$0xff]
        %v3244 = vld [vmem:[%s2317 + $0x8] sm:$0xff]
        %v3245 = vadd.f32 %v3241, %v3243
        %v3246 = vadd.f32 %v3242, %v3244
        %v3247 = vsel %vm1552, %v3245, -inf
        %3248 = vmax.xlane.f32.xlu0 %v3247
        %v3249 = vpop.xlane.xlu0 %3248
        %v3250 = vsel %vm1552, %v3246, -inf
        %3251 = vmax.xlane.f32.xlu0 %v3250
        %v3252 = vpop.xlane.xlu0 %3251
        %v3253 = vsub.f32 %v3245, %v3249
        %v3254 = vsub.f32 %v3246, %v3252
        %v3255 = vmul.f32 %v3253, 1.442695
        %v3256 = vpow.pop %v3255
        %v3257 = vmul.f32 %v3254, 1.442695
        %v3258 = vpow.pop %v3257
        %v3259 = vsel %vm1552, %v3256, 0.0
        %3260 = vadd.xlane.f32.xlu0 %v3259
        %v3261 = vpop.xlane.xlu0 %3260
        %v3262 = vsel %vm1552, %v3258, 0.0
        %3263 = vadd.xlane.f32.xlu0 %v3262
        %v3264 = vpop.xlane.xlu0 %3263
        %v3265 = vrcp.pop %v3261
        %v3266 = vmul.f32 %v3261, %v3265
        %v3267 = vsub.f32 1.0, %v3266
        %v3268 = vmul.f32 %v3265, %v3267
        %v3269 = vadd.f32 %v3265, %v3268
        %vm3270 = vweird.f32 %v3261
        %vm3271 = vweird.f32 %v3265
        %vm3272 = vmor %vm3270, %vm3271
        %v3273 = vsel %vm3272, %v3265, %v3269
        %v3274 = vand.u32 2147483647, %v3261
        %vm3275 = vcmp.eq.f32.partialorder %v3274, 8.507059e+37
        %v3276 = vand.u32 %v3261, 2147483648
        %v3277 = vor.u32 1.1754944e-38, %v3276
        %v3278 = vsel %vm3275, %v3277, %v3273
        %v3279 = vmul.f32 %v3256, %v3278
        %v3280 = vrcp.pop %v3264
        %v3281 = vmul.f32 %v3264, %v3280
        %v3282 = vsub.f32 1.0, %v3281
        %v3283 = vmul.f32 %v3280, %v3282
        %v3284 = vadd.f32 %v3280, %v3283
        %vm3285 = vweird.f32 %v3264
        %vm3286 = vweird.f32 %v3280
        %vm3287 = vmor %vm3285, %vm3286
        %v3288 = vsel %vm3287, %v3280, %v3284
        %v3289 = vand.u32 2147483647, %v3264
        %vm3290 = vcmp.eq.f32.partialorder %v3289, 8.507059e+37
        %v3291 = vand.u32 %v3264, 2147483648
        %v3292 = vor.u32 1.1754944e-38, %v3291
        %v3293 = vsel %vm3290, %v3292, %v3288
        %v3294 = vmul.f32 %v3258, %v3293
        %v3295 = vpack.c.bf16 %v3294, %v3279
        %3296 = vrot.lane.b32.xlu0 %v3146, 64
        %v3297 = vpop.permute.xlu0 %3296
        %v3300 = vsel %vm1552, %v3295, 0
        %3302 = vmatpush.bf16.msra.mxu0 0
        %3303 = vmatpush.bf16.msra.mxu0 0
        %3304 = vmatpush.bf16.msra.mxu0 0
        %3305 = vmatpush.bf16.msra.mxu0 0
        %3306 = vmatpush.bf16.msra.mxu0 0
        %3307 = vmatpush.bf16.msra.mxu0 0
        %3308 = vmatpush.bf16.msra.mxu0 0
        %3309 = vmatpush.bf16.msra.mxu0 %v3297
        %3310 = vmatmul.bf16.gmra.mxu0 %v3300
        %v3311 = vpop.f32.mrf.mxu0
        %v3312 = vadd.f32 0.0, %v3311
        %v3313 = vpop.f32.mrf.mxu0
        %v3314 = vadd.f32 0.0, %v3313
        %3315 = vdwg.mxu0
        %v3316 = vpack.c.bf16 %v3314, %v3312
        %v3317 = vld [vmem:[%s497 + $0xa0] sm:$0xf]
        %v3318 = vld [vmem:[%s497 + $0xa4] sm:$0xf]
        %v3319 = vld [vmem:[%s497 + $0xa8] sm:$0xf]
        %v3320 = vld [vmem:[%s497 + $0xac] sm:$0xf]
        %v3321 = vld [vmem:[%s497 + $0xb0] sm:$0xf]
        %v3322 = vld [vmem:[%s497 + $0xb4] sm:$0xf]
        %v3323 = vld [vmem:[%s497 + $0xb8] sm:$0xf]
        %v3324 = vld [vmem:[%s497 + $0xbc] sm:$0xf]
        %v3333 = vunpack.c.l.b16 %v3317
        %v3334 = vunpack.c.l.b16 %v3318
        %v3335 = vunpack.c.l.b16 %v3319
        %v3336 = vunpack.c.l.b16 %v3320
        %v3337 = vunpack.c.l.b16 %v3321
        %v3338 = vunpack.c.l.b16 %v3322
        %v3339 = vunpack.c.l.b16 %v3323
        %v3340 = vunpack.c.l.b16 %v3324
        %v3341 = vpack.c.b16 %v3334, %v3333
        %v3342 = vpack.c.b16 %v3336, %v3335
        %v3343 = vpack.c.b16 %v3338, %v3337
        %v3344 = vpack.c.b16 %v3340, %v3339
        %v3350 = vsel %vm1525, %v3316, 0
        %3352 = vmatpush.bf16.msra.mxu0 0
        %3353 = vmatpush.bf16.msra.mxu0 0
        %3354 = vmatpush.bf16.msra.mxu0 0
        %3355 = vmatpush.bf16.msra.mxu0 0
        %3356 = vmatpush.bf16.msra.mxu0 %v3344
        %3357 = vmatpush.bf16.msra.mxu0 %v3343
        %3358 = vmatpush.bf16.msra.mxu0 %v3342
        %3359 = vmatpush.bf16.msra.mxu0 %v3341
        %3360 = vmatmul.bf16.gmra.mxu0 %v3350
        %v3361 = vpop.f32.mrf.mxu0
        %v3362 = vadd.f32 0.0, %v3361
        %v3363 = vpop.f32.mrf.mxu0
        %v3364 = vadd.f32 0.0, %v3363
        %3365 = vdwg.mxu0
        %v3366 = vadd.f32 %v3215, %v3362
        %v3367 = vadd.f32 %v3216, %v3364
        %v3368 = vadd.f32 %v736, %v3366
        %v3369 = vadd.f32 %v737, %v3367
        %3370 = vst [vmem:[#allocation2 + $0x10] sm:$0xff] %v3368
        %3371 = vst [vmem:[#allocation2 + $0x18] sm:$0xff] %v3369
        %v3372 = vld [vmem:[#allocation2] sm:$0xff]
        %v3373 = vld [vmem:[#allocation2 + $0x8] sm:$0xff]
        %v3374 = vld [vmem:[#allocation2 + $0x10] sm:$0xff]
        %v3375 = vld [vmem:[#allocation2 + $0x18] sm:$0xff]
        %v3376 = vld [vmem:[%s576] sm:$0x1]
        %v3377 = vmul.f32 %v3372, %v3372
        %v3378 = vmul.f32 %v3373, %v3373
        %v3379 = vmul.f32 %v3374, %v3374
        %v3380 = vmul.f32 %v3375, %v3375
        %3381 = vadd.xlane.f32.xlu0 %v3377
        %v3382 = vpop.xlane.xlu0 %3381
        %3383 = vadd.xlane.f32.xlu0 %v3378
        %v3384 = vpop.xlane.xlu0 %3383
        %3385 = vadd.xlane.f32.xlu0 %v3379
        %v3386 = vpop.xlane.xlu0 %3385
        %3387 = vadd.xlane.f32.xlu0 %v3380
        %v3388 = vpop.xlane.xlu0 %3387
        %v3389 = vrsqrt.pop %v3382
        %v3390 = vmul.f32 %v3389, %v3382
        %v3391 = vmul.f32 %v3390, %v3389
        %v3392 = vmul.f32 0.5, %v3391
        %v3393 = vsub.f32 1.5, %v3392
        %v3394 = vmul.f32 %v3389, %v3393
        %v3395 = vmul.f32 %v3382, %v3394
        %vm3396 = vcmp.eq.f32.partialorder %v3382, inf
        %v3397 = vsel %vm3396, %v3382, %v3395
        %vm3398 = vcmp.eq.f32.partialorder %v3382, 0.0
        %v3399 = vand.u32 %v3382, 2147483648
        %v3400 = vsel %vm3398, %v3399, %v3397
        %v3401 = vrsqrt.pop %v3384
        %v3402 = vmul.f32 %v3401, %v3384
        %v3403 = vmul.f32 %v3402, %v3401
        %v3404 = vmul.f32 0.5, %v3403
        %v3405 = vsub.f32 1.5, %v3404
        %v3406 = vmul.f32 %v3401, %v3405
        %v3407 = vmul.f32 %v3384, %v3406
        %vm3408 = vcmp.eq.f32.partialorder %v3384, inf
        %v3409 = vsel %vm3408, %v3384, %v3407
        %vm3410 = vcmp.eq.f32.partialorder %v3384, 0.0
        %v3411 = vand.u32 %v3384, 2147483648
        %v3412 = vsel %vm3410, %v3411, %v3409
        %v3413 = vrsqrt.pop %v3386
        %v3414 = vmul.f32 %v3413, %v3386
        %v3415 = vmul.f32 %v3414, %v3413
        %v3416 = vmul.f32 0.5, %v3415
        %v3417 = vsub.f32 1.5, %v3416
        %v3418 = vmul.f32 %v3413, %v3417
        %v3419 = vmul.f32 %v3386, %v3418
        %vm3420 = vcmp.eq.f32.partialorder %v3386, inf
        %v3421 = vsel %vm3420, %v3386, %v3419
        %vm3422 = vcmp.eq.f32.partialorder %v3386, 0.0
        %v3423 = vand.u32 %v3386, 2147483648
        %v3424 = vsel %vm3422, %v3423, %v3421
        %v3425 = vrsqrt.pop %v3388
        %v3426 = vmul.f32 %v3425, %v3388
        %v3427 = vmul.f32 %v3426, %v3425
        %v3428 = vmul.f32 0.5, %v3427
        %v3429 = vsub.f32 1.5, %v3428
        %v3430 = vmul.f32 %v3425, %v3429
        %v3431 = vmul.f32 %v3388, %v3430
        %vm3432 = vcmp.eq.f32.partialorder %v3388, inf
        %v3433 = vsel %vm3432, %v3388, %v3431
        %vm3434 = vcmp.eq.f32.partialorder %v3388, 0.0
        %v3435 = vand.u32 %v3388, 2147483648
        %v3436 = vsel %vm3434, %v3435, %v3433
        %v3437 = vmax.f32 %v3400, 1e-12
        %v3438 = vmax.f32 %v3412, 1e-12
        %v3439 = vmax.f32 %v3424, 1e-12
        %v3440 = vmax.f32 %v3436, 1e-12
        %v3441 = vrcp.pop %v3437
        %v3442 = vmul.f32 %v3437, %v3441
        %v3443 = vsub.f32 1.0, %v3442
        %v3444 = vmul.f32 %v3441, %v3443
        %v3445 = vadd.f32 %v3441, %v3444
        %vm3446 = vweird.f32 %v3437
        %vm3447 = vweird.f32 %v3441
        %vm3448 = vmor %vm3446, %vm3447
        %v3449 = vsel %vm3448, %v3441, %v3445
        %v3450 = vand.u32 2147483647, %v3437
        %vm3451 = vcmp.eq.f32.partialorder %v3450, 8.507059e+37
        %v3452 = vand.u32 %v3437, 2147483648
        %v3453 = vor.u32 1.1754944e-38, %v3452
        %v3454 = vsel %vm3451, %v3453, %v3449
        %v3455 = vmul.f32 %v3372, %v3454
        %v3456 = vrcp.pop %v3438
        %v3457 = vmul.f32 %v3438, %v3456
        %v3458 = vsub.f32 1.0, %v3457
        %v3459 = vmul.f32 %v3456, %v3458
        %v3460 = vadd.f32 %v3456, %v3459
        %vm3461 = vweird.f32 %v3438
        %vm3462 = vweird.f32 %v3456
        %vm3463 = vmor %vm3461, %vm3462
        %v3464 = vsel %vm3463, %v3456, %v3460
        %v3465 = vand.u32 2147483647, %v3438
        %vm3466 = vcmp.eq.f32.partialorder %v3465, 8.507059e+37
        %v3467 = vand.u32 %v3438, 2147483648
        %v3468 = vor.u32 1.1754944e-38, %v3467
        %v3469 = vsel %vm3466, %v3468, %v3464
        %v3470 = vmul.f32 %v3373, %v3469
        %v3471 = vrcp.pop %v3439
        %v3472 = vmul.f32 %v3439, %v3471
        %v3473 = vsub.f32 1.0, %v3472
        %v3474 = vmul.f32 %v3471, %v3473
        %v3475 = vadd.f32 %v3471, %v3474
        %vm3476 = vweird.f32 %v3439
        %vm3477 = vweird.f32 %v3471
        %vm3478 = vmor %vm3476, %vm3477
        %v3479 = vsel %vm3478, %v3471, %v3475
        %v3480 = vand.u32 2147483647, %v3439
        %vm3481 = vcmp.eq.f32.partialorder %v3480, 8.507059e+37
        %v3482 = vand.u32 %v3439, 2147483648
        %v3483 = vor.u32 1.1754944e-38, %v3482
        %v3484 = vsel %vm3481, %v3483, %v3479
        %v3485 = vmul.f32 %v3374, %v3484
        %v3486 = vrcp.pop %v3440
        %v3487 = vmul.f32 %v3440, %v3486
        %v3488 = vsub.f32 1.0, %v3487
        %v3489 = vmul.f32 %v3486, %v3488
        %v3490 = vadd.f32 %v3486, %v3489
        %vm3491 = vweird.f32 %v3440
        %vm3492 = vweird.f32 %v3486
        %vm3493 = vmor %vm3491, %vm3492
        %v3494 = vsel %vm3493, %v3486, %v3490
        %v3495 = vand.u32 2147483647, %v3440
        %vm3496 = vcmp.eq.f32.partialorder %v3495, 8.507059e+37
        %v3497 = vand.u32 %v3440, 2147483648
        %v3498 = vor.u32 1.1754944e-38, %v3497
        %v3499 = vsel %vm3496, %v3498, %v3494
        %v3500 = vmul.f32 %v3375, %v3499
        %v3501 = vmul.f32 %v3455, 11.313708
        %v3502 = vmul.f32 %v3470, 11.313708
        %v3503 = vmul.f32 %v3485, 11.313708
        %v3504 = vmul.f32 %v3500, 11.313708
        %v3506 = vperm.slane %v3376, 0
        %v3508 = vmul.f32 %v3501, %v3506
        %v3509 = vmul.f32 %v3502, %v3506
        %v3510 = vmul.f32 %v3503, %v3506
        %v3511 = vmul.f32 %v3504, %v3506
        %v3512 = vpack.c.bf16 %v3509, %v3508
        %v3513 = vpack.c.bf16 %v3511, %v3510
        %v3514 = vld [vmem:[%s581] sm:$0xff]
        %v3515 = vld [vmem:[%s581 + $0x8] sm:$0xff]
        %v3516 = vld [vmem:[%s581 + $0x10] sm:$0xff]
        %v3517 = vld [vmem:[%s581 + $0x18] sm:$0xff]
        %v3518 = vld [vmem:[%s581 + $0x20] sm:$0xff]
        %v3519 = vld [vmem:[%s581 + $0x28] sm:$0xff]
        %v3520 = vld [vmem:[%s581 + $0x30] sm:$0xff]
        %v3521 = vld [vmem:[%s581 + $0x38] sm:$0xff]
        %v3522 = vld [vmem:[%s581 + $0x40] sm:$0xff]
        %v3523 = vld [vmem:[%s581 + $0x48] sm:$0xff]
        %v3524 = vld [vmem:[%s581 + $0x50] sm:$0xff]
        %v3525 = vld [vmem:[%s581 + $0x58] sm:$0xff]
        %v3526 = vld [vmem:[%s581 + $0x60] sm:$0xff]
        %v3527 = vld [vmem:[%s581 + $0x68] sm:$0xff]
        %v3528 = vld [vmem:[%s581 + $0x70] sm:$0xff]
        %v3529 = vld [vmem:[%s581 + $0x78] sm:$0xff]
        %v3530 = vld [vmem:[%s581 + $0x80] sm:$0xff]
        %v3531 = vld [vmem:[%s581 + $0x88] sm:$0xff]
        %v3532 = vld [vmem:[%s581 + $0x90] sm:$0xff]
        %v3533 = vld [vmem:[%s581 + $0x98] sm:$0xff]
        %v3534 = vld [vmem:[%s581 + $0xa0] sm:$0xff]
        %v3535 = vld [vmem:[%s581 + $0xa8] sm:$0xff]
        %v3536 = vld [vmem:[%s581 + $0xb0] sm:$0xff]
        %v3537 = vld [vmem:[%s581 + $0xb8] sm:$0xff]
        %v3538 = vld [vmem:[%s581 + $0xc0] sm:$0xff]
        %v3539 = vld [vmem:[%s581 + $0xc8] sm:$0xff]
        %v3540 = vld [vmem:[%s581 + $0xd0] sm:$0xff]
        %v3541 = vld [vmem:[%s581 + $0xd8] sm:$0xff]
        %v3542 = vld [vmem:[%s581 + $0xe0] sm:$0xff]
        %v3543 = vld [vmem:[%s581 + $0xe8] sm:$0xff]
        %v3544 = vld [vmem:[%s581 + $0xf0] sm:$0xff]
        %v3545 = vld [vmem:[%s581 + $0xf8] sm:$0xff]
        %v3546 = vld [vmem:[%s581 + $0x100] sm:$0xff]
        %v3547 = vld [vmem:[%s581 + $0x108] sm:$0xff]
        %v3548 = vld [vmem:[%s581 + $0x110] sm:$0xff]
        %v3549 = vld [vmem:[%s581 + $0x118] sm:$0xff]
        %v3550 = vld [vmem:[%s581 + $0x120] sm:$0xff]
        %v3551 = vld [vmem:[%s581 + $0x128] sm:$0xff]
        %v3552 = vld [vmem:[%s581 + $0x130] sm:$0xff]
        %v3553 = vld [vmem:[%s581 + $0x138] sm:$0xff]
        %v3554 = vld [vmem:[%s581 + $0x140] sm:$0xff]
        %v3555 = vld [vmem:[%s581 + $0x148] sm:$0xff]
        %v3556 = vld [vmem:[%s581 + $0x150] sm:$0xff]
        %v3557 = vld [vmem:[%s581 + $0x158] sm:$0xff]
        %v3558 = vld [vmem:[%s581 + $0x160] sm:$0xff]
        %v3559 = vld [vmem:[%s581 + $0x168] sm:$0xff]
        %v3560 = vld [vmem:[%s581 + $0x170] sm:$0xff]
        %v3561 = vld [vmem:[%s581 + $0x178] sm:$0xff]
        %v3562 = vld [vmem:[%s581 + $0x180] sm:$0xff]
        %v3563 = vld [vmem:[%s581 + $0x188] sm:$0xff]
        %v3564 = vld [vmem:[%s581 + $0x190] sm:$0xff]
        %v3565 = vld [vmem:[%s581 + $0x198] sm:$0xff]
        %v3566 = vld [vmem:[%s581 + $0x1a0] sm:$0xff]
        %v3567 = vld [vmem:[%s581 + $0x1a8] sm:$0xff]
        %v3568 = vld [vmem:[%s581 + $0x1b0] sm:$0xff]
        %v3569 = vld [vmem:[%s581 + $0x1b8] sm:$0xff]
        %v3570 = vld [vmem:[%s581 + $0x1c0] sm:$0xff]
        %v3571 = vld [vmem:[%s581 + $0x1c8] sm:$0xff]
        %v3572 = vld [vmem:[%s581 + $0x1d0] sm:$0xff]
        %v3573 = vld [vmem:[%s581 + $0x1d8] sm:$0xff]
        %v3574 = vld [vmem:[%s581 + $0x1e0] sm:$0xff]
        %v3575 = vld [vmem:[%s581 + $0x1e8] sm:$0xff]
        %v3576 = vld [vmem:[%s581 + $0x1f0] sm:$0xff]
        %v3577 = vld [vmem:[%s581 + $0x1f8] sm:$0xff]
        %v3578 = vld [vmem:[%s585] sm:$0xff]
        %v3580 = vperm.slane %v3578, 0
        %v3581 = vperm.slane %v3578, 1
        %v3582 = vperm.slane %v3578, 2
        %v3583 = vperm.slane %v3578, 3
        %v3584 = vperm.slane %v3578, 4
        %v3585 = vperm.slane %v3578, 5
        %v3586 = vperm.slane %v3578, 6
        %v3587 = vperm.slane %v3578, 7
        %v3660 = vunpack.c.l.b16 %v3514
        %v3661 = vunpack.c.h.b16 %v3514
        %v3662 = vunpack.c.l.b16 %v3515
        %v3663 = vunpack.c.h.b16 %v3515
        %v3664 = vunpack.c.l.b16 %v3516
        %v3665 = vunpack.c.h.b16 %v3516
        %v3666 = vunpack.c.l.b16 %v3517
        %v3667 = vunpack.c.h.b16 %v3517
        %v3668 = vunpack.c.l.b16 %v3518
        %v3669 = vunpack.c.h.b16 %v3518
        %v3670 = vunpack.c.l.b16 %v3519
        %v3671 = vunpack.c.h.b16 %v3519
        %v3672 = vunpack.c.l.b16 %v3520
        %v3673 = vunpack.c.h.b16 %v3520
        %v3674 = vunpack.c.l.b16 %v3521
        %v3675 = vunpack.c.h.b16 %v3521
        %v3676 = vunpack.c.l.b16 %v3522
        %v3677 = vunpack.c.h.b16 %v3522
        %v3678 = vunpack.c.l.b16 %v3523
        %v3679 = vunpack.c.h.b16 %v3523
        %v3680 = vunpack.c.l.b16 %v3524
        %v3681 = vunpack.c.h.b16 %v3524
        %v3682 = vunpack.c.l.b16 %v3525
        %v3683 = vunpack.c.h.b16 %v3525
        %v3684 = vunpack.c.l.b16 %v3526
        %v3685 = vunpack.c.h.b16 %v3526
        %v3686 = vunpack.c.l.b16 %v3527
        %v3687 = vunpack.c.h.b16 %v3527
        %v3688 = vunpack.c.l.b16 %v3528
        %v3689 = vunpack.c.h.b16 %v3528
        %v3690 = vunpack.c.l.b16 %v3529
        %v3691 = vunpack.c.h.b16 %v3529
        %v3692 = vunpack.c.l.b16 %v3530
        %v3693 = vunpack.c.h.b16 %v3530
        %v3694 = vunpack.c.l.b16 %v3531
        %v3695 = vunpack.c.h.b16 %v3531
        %v3696 = vunpack.c.l.b16 %v3532
        %v3697 = vunpack.c.h.b16 %v3532
        %v3698 = vunpack.c.l.b16 %v3533
        %v3699 = vunpack.c.h.b16 %v3533
        %v3700 = vunpack.c.l.b16 %v3534
        %v3701 = vunpack.c.h.b16 %v3534
        %v3702 = vunpack.c.l.b16 %v3535
        %v3703 = vunpack.c.h.b16 %v3535
        %v3704 = vunpack.c.l.b16 %v3536
        %v3705 = vunpack.c.h.b16 %v3536
        %v3706 = vunpack.c.l.b16 %v3537
        %v3707 = vunpack.c.h.b16 %v3537
        %v3708 = vunpack.c.l.b16 %v3538
        %v3709 = vunpack.c.h.b16 %v3538
        %v3710 = vunpack.c.l.b16 %v3539
        %v3711 = vunpack.c.h.b16 %v3539
        %v3712 = vunpack.c.l.b16 %v3540
        %v3713 = vunpack.c.h.b16 %v3540
        %v3714 = vunpack.c.l.b16 %v3541
        %v3715 = vunpack.c.h.b16 %v3541
        %v3716 = vunpack.c.l.b16 %v3542
        %v3717 = vunpack.c.h.b16 %v3542
        %v3718 = vunpack.c.l.b16 %v3543
        %v3719 = vunpack.c.h.b16 %v3543
        %v3720 = vunpack.c.l.b16 %v3544
        %v3721 = vunpack.c.h.b16 %v3544
        %v3722 = vunpack.c.l.b16 %v3545
        %v3723 = vunpack.c.h.b16 %v3545
        %v3724 = vunpack.c.l.b16 %v3546
        %v3725 = vunpack.c.h.b16 %v3546
        %v3726 = vunpack.c.l.b16 %v3547
        %v3727 = vunpack.c.h.b16 %v3547
        %v3728 = vunpack.c.l.b16 %v3548
        %v3729 = vunpack.c.h.b16 %v3548
        %v3730 = vunpack.c.l.b16 %v3549
        %v3731 = vunpack.c.h.b16 %v3549
        %v3732 = vunpack.c.l.b16 %v3550
        %v3733 = vunpack.c.h.b16 %v3550
        %v3734 = vunpack.c.l.b16 %v3551
        %v3735 = vunpack.c.h.b16 %v3551
        %v3736 = vunpack.c.l.b16 %v3552
        %v3737 = vunpack.c.h.b16 %v3552
        %v3738 = vunpack.c.l.b16 %v3553
        %v3739 = vunpack.c.h.b16 %v3553
        %v3740 = vunpack.c.l.b16 %v3554
        %v3741 = vunpack.c.h.b16 %v3554
        %v3742 = vunpack.c.l.b16 %v3555
        %v3743 = vunpack.c.h.b16 %v3555
        %v3744 = vunpack.c.l.b16 %v3556
        %v3745 = vunpack.c.h.b16 %v3556
        %v3746 = vunpack.c.l.b16 %v3557
        %v3747 = vunpack.c.h.b16 %v3557
        %v3748 = vunpack.c.l.b16 %v3558
        %v3749 = vunpack.c.h.b16 %v3558
        %v3750 = vunpack.c.l.b16 %v3559
        %v3751 = vunpack.c.h.b16 %v3559
        %v3752 = vunpack.c.l.b16 %v3560
        %v3753 = vunpack.c.h.b16 %v3560
        %v3754 = vunpack.c.l.b16 %v3561
        %v3755 = vunpack.c.h.b16 %v3561
        %v3756 = vunpack.c.l.b16 %v3562
        %v3757 = vunpack.c.h.b16 %v3562
        %v3758 = vunpack.c.l.b16 %v3563
        %v3759 = vunpack.c.h.b16 %v3563
        %v3760 = vunpack.c.l.b16 %v3564
        %v3761 = vunpack.c.h.b16 %v3564
        %v3762 = vunpack.c.l.b16 %v3565
        %v3763 = vunpack.c.h.b16 %v3565
        %v3764 = vunpack.c.l.b16 %v3566
        %v3765 = vunpack.c.h.b16 %v3566
        %v3766 = vunpack.c.l.b16 %v3567
        %v3767 = vunpack.c.h.b16 %v3567
        %v3768 = vunpack.c.l.b16 %v3568
        %v3769 = vunpack.c.h.b16 %v3568
        %v3770 = vunpack.c.l.b16 %v3569
        %v3771 = vunpack.c.h.b16 %v3569
        %v3772 = vunpack.c.l.b16 %v3570
        %v3773 = vunpack.c.h.b16 %v3570
        %v3774 = vunpack.c.l.b16 %v3571
        %v3775 = vunpack.c.h.b16 %v3571
        %v3776 = vunpack.c.l.b16 %v3572
        %v3777 = vunpack.c.h.b16 %v3572
        %v3778 = vunpack.c.l.b16 %v3573
        %v3779 = vunpack.c.h.b16 %v3573
        %v3780 = vunpack.c.l.b16 %v3574
        %v3781 = vunpack.c.h.b16 %v3574
        %v3782 = vunpack.c.l.b16 %v3575
        %v3783 = vunpack.c.h.b16 %v3575
        %v3784 = vunpack.c.l.b16 %v3576
        %v3785 = vunpack.c.h.b16 %v3576
        %v3786 = vunpack.c.l.b16 %v3577
        %v3787 = vunpack.c.h.b16 %v3577
        %v3788 = vpack.c.b16 %v3668, %v3660
        %v3789 = vpack.c.b16 %v3669, %v3661
        %v3790 = vpack.c.b16 %v3670, %v3662
        %v3791 = vpack.c.b16 %v3671, %v3663
        %v3792 = vpack.c.b16 %v3672, %v3664
        %v3793 = vpack.c.b16 %v3673, %v3665
        %v3794 = vpack.c.b16 %v3674, %v3666
        %v3795 = vpack.c.b16 %v3675, %v3667
        %v3796 = vpack.c.b16 %v3684, %v3676
        %v3797 = vpack.c.b16 %v3685, %v3677
        %v3798 = vpack.c.b16 %v3686, %v3678
        %v3799 = vpack.c.b16 %v3687, %v3679
        %v3800 = vpack.c.b16 %v3688, %v3680
        %v3801 = vpack.c.b16 %v3689, %v3681
        %v3802 = vpack.c.b16 %v3690, %v3682
        %v3803 = vpack.c.b16 %v3691, %v3683
        %v3804 = vpack.c.b16 %v3700, %v3692
        %v3805 = vpack.c.b16 %v3701, %v3693
        %v3806 = vpack.c.b16 %v3702, %v3694
        %v3807 = vpack.c.b16 %v3703, %v3695
        %v3808 = vpack.c.b16 %v3704, %v3696
        %v3809 = vpack.c.b16 %v3705, %v3697
        %v3810 = vpack.c.b16 %v3706, %v3698
        %v3811 = vpack.c.b16 %v3707, %v3699
        %v3812 = vpack.c.b16 %v3716, %v3708
        %v3813 = vpack.c.b16 %v3717, %v3709
        %v3814 = vpack.c.b16 %v3718, %v3710
        %v3815 = vpack.c.b16 %v3719, %v3711
        %v3816 = vpack.c.b16 %v3720, %v3712
        %v3817 = vpack.c.b16 %v3721, %v3713
        %v3818 = vpack.c.b16 %v3722, %v3714
        %v3819 = vpack.c.b16 %v3723, %v3715
        %v3820 = vpack.c.b16 %v3732, %v3724
        %v3821 = vpack.c.b16 %v3733, %v3725
        %v3822 = vpack.c.b16 %v3734, %v3726
        %v3823 = vpack.c.b16 %v3735, %v3727
        %v3824 = vpack.c.b16 %v3736, %v3728
        %v3825 = vpack.c.b16 %v3737, %v3729
        %v3826 = vpack.c.b16 %v3738, %v3730
        %v3827 = vpack.c.b16 %v3739, %v3731
        %v3828 = vpack.c.b16 %v3748, %v3740
        %v3829 = vpack.c.b16 %v3749, %v3741
        %v3830 = vpack.c.b16 %v3750, %v3742
        %v3831 = vpack.c.b16 %v3751, %v3743
        %v3832 = vpack.c.b16 %v3752, %v3744
        %v3833 = vpack.c.b16 %v3753, %v3745
        %v3834 = vpack.c.b16 %v3754, %v3746
        %v3835 = vpack.c.b16 %v3755, %v3747
        %v3836 = vpack.c.b16 %v3764, %v3756
        %v3837 = vpack.c.b16 %v3765, %v3757
        %v3838 = vpack.c.b16 %v3766, %v3758
        %v3839 = vpack.c.b16 %v3767, %v3759
        %v3840 = vpack.c.b16 %v3768, %v3760
        %v3841 = vpack.c.b16 %v3769, %v3761
        %v3842 = vpack.c.b16 %v3770, %v3762
        %v3843 = vpack.c.b16 %v3771, %v3763
        %v3844 = vpack.c.b16 %v3780, %v3772
        %v3845 = vpack.c.b16 %v3781, %v3773
        %v3846 = vpack.c.b16 %v3782, %v3774
        %v3847 = vpack.c.b16 %v3783, %v3775
        %v3848 = vpack.c.b16 %v3784, %v3776
        %v3849 = vpack.c.b16 %v3785, %v3777
        %v3850 = vpack.c.b16 %v3786, %v3778
        %v3851 = vpack.c.b16 %v3787, %v3779
        %3916 = vmatpush.bf16.msra.mxu0 %v3844
        %3917 = vmatpush.bf16.msra.mxu0 %v3836
        %3918 = vmatpush.bf16.msra.mxu0 %v3828
        %3919 = vmatpush.bf16.msra.mxu0 %v3820
        %3920 = vmatpush.bf16.msra.mxu0 %v3812
        %3921 = vmatpush.bf16.msra.mxu0 %v3804
        %3922 = vmatpush.bf16.msra.mxu0 %v3796
        %3923 = vmatpush.bf16.msra.mxu0 %v3788
        %3924 = vmatmul.bf16.gmra.mxu0 %v3512
        %v3925 = vpop.f32.mrf.mxu0
        %v3926 = vadd.f32 %v3580, %v3925
        %v3927 = vpop.f32.mrf.mxu0
        %v3928 = vadd.f32 %v3580, %v3927
        %3929 = vmatmul.bf16.gmra.mxu0 %v3513
        %v3930 = vpop.f32.mrf.mxu0
        %v3931 = vadd.f32 %v3580, %v3930
        %v3932 = vpop.f32.mrf.mxu0
        %v3933 = vadd.f32 %v3580, %v3932
        %3934 = vdwg.mxu0
        %3935 = vmatpush.bf16.msra.mxu0 %v3845
        %3936 = vmatpush.bf16.msra.mxu0 %v3837
        %3937 = vmatpush.bf16.msra.mxu0 %v3829
        %3938 = vmatpush.bf16.msra.mxu0 %v3821
        %3939 = vmatpush.bf16.msra.mxu0 %v3813
        %3940 = vmatpush.bf16.msra.mxu0 %v3805
        %3941 = vmatpush.bf16.msra.mxu0 %v3797
        %3942 = vmatpush.bf16.msra.mxu0 %v3789
        %3943 = vmatmul.bf16.gmra.mxu0 %v3512
        %v3944 = vpop.f32.mrf.mxu0
        %v3945 = vadd.f32 %v3581, %v3944
        %v3946 = vpop.f32.mrf.mxu0
        %v3947 = vadd.f32 %v3581, %v3946
        %3948 = vmatmul.bf16.gmra.mxu0 %v3513
        %v3949 = vpop.f32.mrf.mxu0
        %v3950 = vadd.f32 %v3581, %v3949
        %v3951 = vpop.f32.mrf.mxu0
        %v3952 = vadd.f32 %v3581, %v3951
        %3953 = vdwg.mxu0
        %3954 = vmatpush.bf16.msra.mxu0 %v3846
        %3955 = vmatpush.bf16.msra.mxu0 %v3838
        %3956 = vmatpush.bf16.msra.mxu0 %v3830
        %3957 = vmatpush.bf16.msra.mxu0 %v3822
        %3958 = vmatpush.bf16.msra.mxu0 %v3814
        %3959 = vmatpush.bf16.msra.mxu0 %v3806
        %3960 = vmatpush.bf16.msra.mxu0 %v3798
        %3961 = vmatpush.bf16.msra.mxu0 %v3790
        %3962 = vmatmul.bf16.gmra.mxu0 %v3512
        %v3963 = vpop.f32.mrf.mxu0
        %v3964 = vadd.f32 %v3582, %v3963
        %v3965 = vpop.f32.mrf.mxu0
        %v3966 = vadd.f32 %v3582, %v3965
        %3967 = vmatmul.bf16.gmra.mxu0 %v3513
        %v3968 = vpop.f32.mrf.mxu0
        %v3969 = vadd.f32 %v3582, %v3968
        %v3970 = vpop.f32.mrf.mxu0
        %v3971 = vadd.f32 %v3582, %v3970
        %3972 = vdwg.mxu0
        %3973 = vmatpush.bf16.msra.mxu0 %v3847
        %3974 = vmatpush.bf16.msra.mxu0 %v3839
        %3975 = vmatpush.bf16.msra.mxu0 %v3831
        %3976 = vmatpush.bf16.msra.mxu0 %v3823
        %3977 = vmatpush.bf16.msra.mxu0 %v3815
        %3978 = vmatpush.bf16.msra.mxu0 %v3807
        %3979 = vmatpush.bf16.msra.mxu0 %v3799
        %3980 = vmatpush.bf16.msra.mxu0 %v3791
        %3981 = vmatmul.bf16.gmra.mxu0 %v3512
        %v3982 = vpop.f32.mrf.mxu0
        %v3983 = vadd.f32 %v3583, %v3982
        %v3984 = vpop.f32.mrf.mxu0
        %v3985 = vadd.f32 %v3583, %v3984
        %3986 = vmatmul.bf16.gmra.mxu0 %v3513
        %v3987 = vpop.f32.mrf.mxu0
        %v3988 = vadd.f32 %v3583, %v3987
        %v3989 = vpop.f32.mrf.mxu0
        %v3990 = vadd.f32 %v3583, %v3989
        %3991 = vdwg.mxu0
        %3992 = vmatpush.bf16.msra.mxu0 %v3848
        %3993 = vmatpush.bf16.msra.mxu0 %v3840
        %3994 = vmatpush.bf16.msra.mxu0 %v3832
        %3995 = vmatpush.bf16.msra.mxu0 %v3824
        %3996 = vmatpush.bf16.msra.mxu0 %v3816
        %3997 = vmatpush.bf16.msra.mxu0 %v3808
        %3998 = vmatpush.bf16.msra.mxu0 %v3800
        %3999 = vmatpush.bf16.msra.mxu0 %v3792
        %4000 = vmatmul.bf16.gmra.mxu0 %v3512
        %v4001 = vpop.f32.mrf.mxu0
        %v4002 = vadd.f32 %v3584, %v4001
        %v4003 = vpop.f32.mrf.mxu0
        %v4004 = vadd.f32 %v3584, %v4003
        %4005 = vmatmul.bf16.gmra.mxu0 %v3513
        %v4006 = vpop.f32.mrf.mxu0
        %v4007 = vadd.f32 %v3584, %v4006
        %v4008 = vpop.f32.mrf.mxu0
        %v4009 = vadd.f32 %v3584, %v4008
        %4010 = vdwg.mxu0
        %4011 = vmatpush.bf16.msra.mxu0 %v3849
        %4012 = vmatpush.bf16.msra.mxu0 %v3841
        %4013 = vmatpush.bf16.msra.mxu0 %v3833
        %4014 = vmatpush.bf16.msra.mxu0 %v3825
        %4015 = vmatpush.bf16.msra.mxu0 %v3817
        %4016 = vmatpush.bf16.msra.mxu0 %v3809
        %4017 = vmatpush.bf16.msra.mxu0 %v3801
        %4018 = vmatpush.bf16.msra.mxu0 %v3793
        %4019 = vmatmul.bf16.gmra.mxu0 %v3512
        %v4020 = vpop.f32.mrf.mxu0
        %v4021 = vadd.f32 %v3585, %v4020
        %v4022 = vpop.f32.mrf.mxu0
        %v4023 = vadd.f32 %v3585, %v4022
        %4024 = vmatmul.bf16.gmra.mxu0 %v3513
        %v4025 = vpop.f32.mrf.mxu0
        %v4026 = vadd.f32 %v3585, %v4025
        %v4027 = vpop.f32.mrf.mxu0
        %v4028 = vadd.f32 %v3585, %v4027
        %4029 = vdwg.mxu0
        %4030 = vmatpush.bf16.msra.mxu0 %v3850
        %4031 = vmatpush.bf16.msra.mxu0 %v3842
        %4032 = vmatpush.bf16.msra.mxu0 %v3834
        %4033 = vmatpush.bf16.msra.mxu0 %v3826
        %4034 = vmatpush.bf16.msra.mxu0 %v3818
        %4035 = vmatpush.bf16.msra.mxu0 %v3810
        %4036 = vmatpush.bf16.msra.mxu0 %v3802
        %4037 = vmatpush.bf16.msra.mxu0 %v3794
        %4038 = vmatmul.bf16.gmra.mxu0 %v3512
        %v4039 = vpop.f32.mrf.mxu0
        %v4040 = vadd.f32 %v3586, %v4039
        %v4041 = vpop.f32.mrf.mxu0
        %v4042 = vadd.f32 %v3586, %v4041
        %4043 = vmatmul.bf16.gmra.mxu0 %v3513
        %v4044 = vpop.f32.mrf.mxu0
        %v4045 = vadd.f32 %v3586, %v4044
        %v4046 = vpop.f32.mrf.mxu0
        %v4047 = vadd.f32 %v3586, %v4046
        %4048 = vdwg.mxu0
        %4049 = vmatpush.bf16.msra.mxu0 %v3851
        %4050 = vmatpush.bf16.msra.mxu0 %v3843
        %4051 = vmatpush.bf16.msra.mxu0 %v3835
        %4052 = vmatpush.bf16.msra.mxu0 %v3827
        %4053 = vmatpush.bf16.msra.mxu0 %v3819
        %4054 = vmatpush.bf16.msra.mxu0 %v3811
        %4055 = vmatpush.bf16.msra.mxu0 %v3803
        %4056 = vmatpush.bf16.msra.mxu0 %v3795
        %4057 = vmatmul.bf16.gmra.mxu0 %v3512
        %v4058 = vpop.f32.mrf.mxu0
        %v4059 = vadd.f32 %v3587, %v4058
        %v4060 = vpop.f32.mrf.mxu0
        %v4061 = vadd.f32 %v3587, %v4060
        %4062 = vmatmul.bf16.gmra.mxu0 %v3513
        %v4063 = vpop.f32.mrf.mxu0
        %v4064 = vadd.f32 %v3587, %v4063
        %v4065 = vpop.f32.mrf.mxu0
        %v4066 = vadd.f32 %v3587, %v4065
        %4067 = vdwg.mxu0
        %v4068 = vmul.f32 %v4002, %v4002
        %v4069 = vmul.f32 %v4021, %v4021
        %v4070 = vmul.f32 %v4040, %v4040
        %v4071 = vmul.f32 %v4059, %v4059
        %v4072 = vmul.f32 %v4004, %v4004
        %v4073 = vmul.f32 %v4023, %v4023
        %v4074 = vmul.f32 %v4042, %v4042
        %v4075 = vmul.f32 %v4061, %v4061
        %v4076 = vmul.f32 %v4007, %v4007
        %v4077 = vmul.f32 %v4026, %v4026
        %v4078 = vmul.f32 %v4045, %v4045
        %v4079 = vmul.f32 %v4064, %v4064
        %v4080 = vmul.f32 %v4009, %v4009
        %v4081 = vmul.f32 %v4028, %v4028
        %v4082 = vmul.f32 %v4047, %v4047
        %v4083 = vmul.f32 %v4066, %v4066
        %v4084 = vmul.f32 %v4002, %v4068
        %v4085 = vmul.f32 %v4021, %v4069
        %v4086 = vmul.f32 %v4040, %v4070
        %v4087 = vmul.f32 %v4059, %v4071
        %v4088 = vmul.f32 %v4004, %v4072
        %v4089 = vmul.f32 %v4023, %v4073
        %v4090 = vmul.f32 %v4042, %v4074
        %v4091 = vmul.f32 %v4061, %v4075
        %v4092 = vmul.f32 %v4007, %v4076
        %v4093 = vmul.f32 %v4026, %v4077
        %v4094 = vmul.f32 %v4045, %v4078
        %v4095 = vmul.f32 %v4064, %v4079
        %v4096 = vmul.f32 %v4009, %v4080
        %v4097 = vmul.f32 %v4028, %v4081
        %v4098 = vmul.f32 %v4047, %v4082
        %v4099 = vmul.f32 %v4066, %v4083
        %v4100 = vmul.f32 %v4084, 0.044715
        %v4101 = vmul.f32 %v4085, 0.044715
        %v4102 = vmul.f32 %v4086, 0.044715
        %v4103 = vmul.f32 %v4087, 0.044715
        %v4104 = vmul.f32 %v4088, 0.044715
        %v4105 = vmul.f32 %v4089, 0.044715
        %v4106 = vmul.f32 %v4090, 0.044715
        %v4107 = vmul.f32 %v4091, 0.044715
        %v4108 = vmul.f32 %v4092, 0.044715
        %v4109 = vmul.f32 %v4093, 0.044715
        %v4110 = vmul.f32 %v4094, 0.044715
        %v4111 = vmul.f32 %v4095, 0.044715
        %v4112 = vmul.f32 %v4096, 0.044715
        %v4113 = vmul.f32 %v4097, 0.044715
        %v4114 = vmul.f32 %v4098, 0.044715
        %v4115 = vmul.f32 %v4099, 0.044715
        %v4116 = vadd.f32 %v4002, %v4100
        %v4117 = vadd.f32 %v4021, %v4101
        %v4118 = vadd.f32 %v4040, %v4102
        %v4119 = vadd.f32 %v4059, %v4103
        %v4120 = vadd.f32 %v4004, %v4104
        %v4121 = vadd.f32 %v4023, %v4105
        %v4122 = vadd.f32 %v4042, %v4106
        %v4123 = vadd.f32 %v4061, %v4107
        %v4124 = vadd.f32 %v4007, %v4108
        %v4125 = vadd.f32 %v4026, %v4109
        %v4126 = vadd.f32 %v4045, %v4110
        %v4127 = vadd.f32 %v4064, %v4111
        %v4128 = vadd.f32 %v4009, %v4112
        %v4129 = vadd.f32 %v4028, %v4113
        %v4130 = vadd.f32 %v4047, %v4114
        %v4131 = vadd.f32 %v4066, %v4115
        %v4132 = vmul.f32 %v4116, 0.7978846
        %v4133 = vmul.f32 %v4117, 0.7978846
        %v4134 = vmul.f32 %v4118, 0.7978846
        %v4135 = vmul.f32 %v4119, 0.7978846
        %v4136 = vmul.f32 %v4120, 0.7978846
        %v4137 = vmul.f32 %v4121, 0.7978846
        %v4138 = vmul.f32 %v4122, 0.7978846
        %v4139 = vmul.f32 %v4123, 0.7978846
        %v4140 = vmul.f32 %v4124, 0.7978846
        %v4141 = vmul.f32 %v4125, 0.7978846
        %v4142 = vmul.f32 %v4126, 0.7978846
        %v4143 = vmul.f32 %v4127, 0.7978846
        %v4144 = vmul.f32 %v4128, 0.7978846
        %v4145 = vmul.f32 %v4129, 0.7978846
        %v4146 = vmul.f32 %v4130, 0.7978846
        %v4147 = vmul.f32 %v4131, 0.7978846
        %v4148 = vtanh.pop %v4132
        %v4149 = vtanh.pop %v4133
        %v4150 = vtanh.pop %v4134
        %v4151 = vtanh.pop %v4135
        %v4152 = vtanh.pop %v4136
        %v4153 = vtanh.pop %v4137
        %v4154 = vtanh.pop %v4138
        %v4155 = vtanh.pop %v4139
        %v4156 = vtanh.pop %v4140
        %v4157 = vtanh.pop %v4141
        %v4158 = vtanh.pop %v4142
        %v4159 = vtanh.pop %v4143
        %v4160 = vtanh.pop %v4144
        %v4161 = vtanh.pop %v4145
        %v4162 = vtanh.pop %v4146
        %v4163 = vtanh.pop %v4147
        %v4164 = vadd.f32 %v4148, 1.0
        %v4165 = vadd.f32 %v4149, 1.0
        %v4166 = vadd.f32 %v4150, 1.0
        %v4167 = vadd.f32 %v4151, 1.0
        %v4168 = vadd.f32 %v4152, 1.0
        %v4169 = vadd.f32 %v4153, 1.0
        %v4170 = vadd.f32 %v4154, 1.0
        %v4171 = vadd.f32 %v4155, 1.0
        %v4172 = vadd.f32 %v4156, 1.0
        %v4173 = vadd.f32 %v4157, 1.0
        %v4174 = vadd.f32 %v4158, 1.0
        %v4175 = vadd.f32 %v4159, 1.0
        %v4176 = vadd.f32 %v4160, 1.0
        %v4177 = vadd.f32 %v4161, 1.0
        %v4178 = vadd.f32 %v4162, 1.0
        %v4179 = vadd.f32 %v4163, 1.0
        %v4180 = vmul.f32 %v4164, 0.5
        %v4181 = vmul.f32 %v4165, 0.5
        %v4182 = vmul.f32 %v4166, 0.5
        %v4183 = vmul.f32 %v4167, 0.5
        %v4184 = vmul.f32 %v4168, 0.5
        %v4185 = vmul.f32 %v4169, 0.5
        %v4186 = vmul.f32 %v4170, 0.5
        %v4187 = vmul.f32 %v4171, 0.5
        %v4188 = vmul.f32 %v4172, 0.5
        %v4189 = vmul.f32 %v4173, 0.5
        %v4190 = vmul.f32 %v4174, 0.5
        %v4191 = vmul.f32 %v4175, 0.5
        %v4192 = vmul.f32 %v4176, 0.5
        %v4193 = vmul.f32 %v4177, 0.5
        %v4194 = vmul.f32 %v4178, 0.5
        %v4195 = vmul.f32 %v4179, 0.5
        %v4196 = vmul.f32 %v4002, %v4180
        %v4197 = vmul.f32 %v4021, %v4181
        %v4198 = vmul.f32 %v4040, %v4182
        %v4199 = vmul.f32 %v4059, %v4183
        %v4200 = vmul.f32 %v4004, %v4184
        %v4201 = vmul.f32 %v4023, %v4185
        %v4202 = vmul.f32 %v4042, %v4186
        %v4203 = vmul.f32 %v4061, %v4187
        %v4204 = vmul.f32 %v4007, %v4188
        %v4205 = vmul.f32 %v4026, %v4189
        %v4206 = vmul.f32 %v4045, %v4190
        %v4207 = vmul.f32 %v4064, %v4191
        %v4208 = vmul.f32 %v4009, %v4192
        %v4209 = vmul.f32 %v4028, %v4193
        %v4210 = vmul.f32 %v4047, %v4194
        %v4211 = vmul.f32 %v4066, %v4195
        %v4212 = vmul.f32 %v3926, %v4196
        %v4213 = vmul.f32 %v3945, %v4197
        %v4214 = vmul.f32 %v3964, %v4198
        %v4215 = vmul.f32 %v3983, %v4199
        %v4216 = vmul.f32 %v3928, %v4200
        %v4217 = vmul.f32 %v3947, %v4201
        %v4218 = vmul.f32 %v3966, %v4202
        %v4219 = vmul.f32 %v3985, %v4203
        %v4220 = vmul.f32 %v3931, %v4204
        %v4221 = vmul.f32 %v3950, %v4205
        %v4222 = vmul.f32 %v3969, %v4206
        %v4223 = vmul.f32 %v3988, %v4207
        %v4224 = vmul.f32 %v3933, %v4208
        %v4225 = vmul.f32 %v3952, %v4209
        %v4226 = vmul.f32 %v3971, %v4210
        %v4227 = vmul.f32 %v3990, %v4211
        %v4228 = vpack.c.bf16 %v4216, %v4212
        %v4229 = vpack.c.bf16 %v4217, %v4213
        %v4230 = vpack.c.bf16 %v4218, %v4214
        %v4231 = vpack.c.bf16 %v4219, %v4215
        %v4232 = vpack.c.bf16 %v4224, %v4220
        %v4233 = vpack.c.bf16 %v4225, %v4221
        %v4234 = vpack.c.bf16 %v4226, %v4222
        %v4235 = vpack.c.bf16 %v4227, %v4223
        %v4236 = vld [vmem:[%s590] sm:$0xf]
        %v4237 = vld [vmem:[%s590 + $0x4] sm:$0xf]
        %v4238 = vld [vmem:[%s590 + $0x8] sm:$0xf]
        %v4239 = vld [vmem:[%s590 + $0xc] sm:$0xf]
        %v4240 = vld [vmem:[%s590 + $0x10] sm:$0xf]
        %v4241 = vld [vmem:[%s590 + $0x14] sm:$0xf]
        %v4242 = vld [vmem:[%s590 + $0x18] sm:$0xf]
        %v4243 = vld [vmem:[%s590 + $0x1c] sm:$0xf]
        %v4244 = vld [vmem:[%s590 + $0x20] sm:$0xf]
        %v4245 = vld [vmem:[%s590 + $0x24] sm:$0xf]
        %v4246 = vld [vmem:[%s590 + $0x28] sm:$0xf]
        %v4247 = vld [vmem:[%s590 + $0x2c] sm:$0xf]
        %v4248 = vld [vmem:[%s590 + $0x30] sm:$0xf]
        %v4249 = vld [vmem:[%s590 + $0x34] sm:$0xf]
        %v4250 = vld [vmem:[%s590 + $0x38] sm:$0xf]
        %v4251 = vld [vmem:[%s590 + $0x3c] sm:$0xf]
        %v4252 = vld [vmem:[%s590 + $0x40] sm:$0xf]
        %v4253 = vld [vmem:[%s590 + $0x44] sm:$0xf]
        %v4254 = vld [vmem:[%s590 + $0x48] sm:$0xf]
        %v4255 = vld [vmem:[%s590 + $0x4c] sm:$0xf]
        %v4256 = vld [vmem:[%s590 + $0x50] sm:$0xf]
        %v4257 = vld [vmem:[%s590 + $0x54] sm:$0xf]
        %v4258 = vld [vmem:[%s590 + $0x58] sm:$0xf]
        %v4259 = vld [vmem:[%s590 + $0x5c] sm:$0xf]
        %v4260 = vld [vmem:[%s590 + $0x60] sm:$0xf]
        %v4261 = vld [vmem:[%s590 + $0x64] sm:$0xf]
        %v4262 = vld [vmem:[%s590 + $0x68] sm:$0xf]
        %v4263 = vld [vmem:[%s590 + $0x6c] sm:$0xf]
        %v4264 = vld [vmem:[%s590 + $0x70] sm:$0xf]
        %v4265 = vld [vmem:[%s590 + $0x74] sm:$0xf]
        %v4266 = vld [vmem:[%s590 + $0x78] sm:$0xf]
        %v4267 = vld [vmem:[%s590 + $0x7c] sm:$0xf]
        %v4268 = vld [vmem:[%s590 + $0x80] sm:$0xf]
        %v4269 = vld [vmem:[%s590 + $0x84] sm:$0xf]
        %v4270 = vld [vmem:[%s590 + $0x88] sm:$0xf]
        %v4271 = vld [vmem:[%s590 + $0x8c] sm:$0xf]
        %v4272 = vld [vmem:[%s590 + $0x90] sm:$0xf]
        %v4273 = vld [vmem:[%s590 + $0x94] sm:$0xf]
        %v4274 = vld [vmem:[%s590 + $0x98] sm:$0xf]
        %v4275 = vld [vmem:[%s590 + $0x9c] sm:$0xf]
        %v4276 = vld [vmem:[%s590 + $0xa0] sm:$0xf]
        %v4277 = vld [vmem:[%s590 + $0xa4] sm:$0xf]
        %v4278 = vld [vmem:[%s590 + $0xa8] sm:$0xf]
        %v4279 = vld [vmem:[%s590 + $0xac] sm:$0xf]
        %v4280 = vld [vmem:[%s590 + $0xb0] sm:$0xf]
        %v4281 = vld [vmem:[%s590 + $0xb4] sm:$0xf]
        %v4282 = vld [vmem:[%s590 + $0xb8] sm:$0xf]
        %v4283 = vld [vmem:[%s590 + $0xbc] sm:$0xf]
        %v4284 = vld [vmem:[%s590 + $0xc0] sm:$0xf]
        %v4285 = vld [vmem:[%s590 + $0xc4] sm:$0xf]
        %v4286 = vld [vmem:[%s590 + $0xc8] sm:$0xf]
        %v4287 = vld [vmem:[%s590 + $0xcc] sm:$0xf]
        %v4288 = vld [vmem:[%s590 + $0xd0] sm:$0xf]
        %v4289 = vld [vmem:[%s590 + $0xd4] sm:$0xf]
        %v4290 = vld [vmem:[%s590 + $0xd8] sm:$0xf]
        %v4291 = vld [vmem:[%s590 + $0xdc] sm:$0xf]
        %v4292 = vld [vmem:[%s590 + $0xe0] sm:$0xf]
        %v4293 = vld [vmem:[%s590 + $0xe4] sm:$0xf]
        %v4294 = vld [vmem:[%s590 + $0xe8] sm:$0xf]
        %v4295 = vld [vmem:[%s590 + $0xec] sm:$0xf]
        %v4296 = vld [vmem:[%s590 + $0xf0] sm:$0xf]
        %v4297 = vld [vmem:[%s590 + $0xf4] sm:$0xf]
        %v4298 = vld [vmem:[%s590 + $0xf8] sm:$0xf]
        %v4299 = vld [vmem:[%s590 + $0xfc] sm:$0xf]
        %v4300 = vld [vmem:[%s593] sm:$0x1]
        %v4302 = vperm.slane %v4300, 0
        %v4368 = vunpack.c.l.b16 %v4236
        %v4369 = vunpack.c.l.b16 %v4237
        %v4370 = vunpack.c.l.b16 %v4238
        %v4371 = vunpack.c.l.b16 %v4239
        %v4372 = vunpack.c.l.b16 %v4240
        %v4373 = vunpack.c.l.b16 %v4241
        %v4374 = vunpack.c.l.b16 %v4242
        %v4375 = vunpack.c.l.b16 %v4243
        %v4376 = vunpack.c.l.b16 %v4244
        %v4377 = vunpack.c.l.b16 %v4245
        %v4378 = vunpack.c.l.b16 %v4246
        %v4379 = vunpack.c.l.b16 %v4247
        %v4380 = vunpack.c.l.b16 %v4248
        %v4381 = vunpack.c.l.b16 %v4249
        %v4382 = vunpack.c.l.b16 %v4250
        %v4383 = vunpack.c.l.b16 %v4251
        %v4384 = vunpack.c.l.b16 %v4252
        %v4385 = vunpack.c.l.b16 %v4253
        %v4386 = vunpack.c.l.b16 %v4254
        %v4387 = vunpack.c.l.b16 %v4255
        %v4388 = vunpack.c.l.b16 %v4256
        %v4389 = vunpack.c.l.b16 %v4257
        %v4390 = vunpack.c.l.b16 %v4258
        %v4391 = vunpack.c.l.b16 %v4259
        %v4392 = vunpack.c.l.b16 %v4260
        %v4393 = vunpack.c.l.b16 %v4261
        %v4394 = vunpack.c.l.b16 %v4262
        %v4395 = vunpack.c.l.b16 %v4263
        %v4396 = vunpack.c.l.b16 %v4264
        %v4397 = vunpack.c.l.b16 %v4265
        %v4398 = vunpack.c.l.b16 %v4266
        %v4399 = vunpack.c.l.b16 %v4267
        %v4400 = vunpack.c.l.b16 %v4268
        %v4401 = vunpack.c.l.b16 %v4269
        %v4402 = vunpack.c.l.b16 %v4270
        %v4403 = vunpack.c.l.b16 %v4271
        %v4404 = vunpack.c.l.b16 %v4272
        %v4405 = vunpack.c.l.b16 %v4273
        %v4406 = vunpack.c.l.b16 %v4274
        %v4407 = vunpack.c.l.b16 %v4275
        %v4408 = vunpack.c.l.b16 %v4276
        %v4409 = vunpack.c.l.b16 %v4277
        %v4410 = vunpack.c.l.b16 %v4278
        %v4411 = vunpack.c.l.b16 %v4279
        %v4412 = vunpack.c.l.b16 %v4280
        %v4413 = vunpack.c.l.b16 %v4281
        %v4414 = vunpack.c.l.b16 %v4282
        %v4415 = vunpack.c.l.b16 %v4283
        %v4416 = vunpack.c.l.b16 %v4284
        %v4417 = vunpack.c.l.b16 %v4285
        %v4418 = vunpack.c.l.b16 %v4286
        %v4419 = vunpack.c.l.b16 %v4287
        %v4420 = vunpack.c.l.b16 %v4288
        %v4421 = vunpack.c.l.b16 %v4289
        %v4422 = vunpack.c.l.b16 %v4290
        %v4423 = vunpack.c.l.b16 %v4291
        %v4424 = vunpack.c.l.b16 %v4292
        %v4425 = vunpack.c.l.b16 %v4293
        %v4426 = vunpack.c.l.b16 %v4294
        %v4427 = vunpack.c.l.b16 %v4295
        %v4428 = vunpack.c.l.b16 %v4296
        %v4429 = vunpack.c.l.b16 %v4297
        %v4430 = vunpack.c.l.b16 %v4298
        %v4431 = vunpack.c.l.b16 %v4299
        %v4432 = vpack.c.b16 %v4369, %v4368
        %v4433 = vpack.c.b16 %v4371, %v4370
        %v4434 = vpack.c.b16 %v4373, %v4372
        %v4435 = vpack.c.b16 %v4375, %v4374
        %v4436 = vpack.c.b16 %v4377, %v4376
        %v4437 = vpack.c.b16 %v4379, %v4378
        %v4438 = vpack.c.b16 %v4381, %v4380
        %v4439 = vpack.c.b16 %v4383, %v4382
        %v4440 = vpack.c.b16 %v4385, %v4384
        %v4441 = vpack.c.b16 %v4387, %v4386
        %v4442 = vpack.c.b16 %v4389, %v4388
        %v4443 = vpack.c.b16 %v4391, %v4390
        %v4444 = vpack.c.b16 %v4393, %v4392
        %v4445 = vpack.c.b16 %v4395, %v4394
        %v4446 = vpack.c.b16 %v4397, %v4396
        %v4447 = vpack.c.b16 %v4399, %v4398
        %v4448 = vpack.c.b16 %v4401, %v4400
        %v4449 = vpack.c.b16 %v4403, %v4402
        %v4450 = vpack.c.b16 %v4405, %v4404
        %v4451 = vpack.c.b16 %v4407, %v4406
        %v4452 = vpack.c.b16 %v4409, %v4408
        %v4453 = vpack.c.b16 %v4411, %v4410
        %v4454 = vpack.c.b16 %v4413, %v4412
        %v4455 = vpack.c.b16 %v4415, %v4414
        %v4456 = vpack.c.b16 %v4417, %v4416
        %v4457 = vpack.c.b16 %v4419, %v4418
        %v4458 = vpack.c.b16 %v4421, %v4420
        %v4459 = vpack.c.b16 %v4423, %v4422
        %v4460 = vpack.c.b16 %v4425, %v4424
        %v4461 = vpack.c.b16 %v4427, %v4426
        %v4462 = vpack.c.b16 %v4429, %v4428
        %v4463 = vpack.c.b16 %v4431, %v4430
        %4496 = vmatpush.bf16.msra.mxu0 %v4439
        %4497 = vmatpush.bf16.msra.mxu0 %v4438
        %4498 = vmatpush.bf16.msra.mxu0 %v4437
        %4499 = vmatpush.bf16.msra.mxu0 %v4436
        %4500 = vmatpush.bf16.msra.mxu0 %v4435
        %4501 = vmatpush.bf16.msra.mxu0 %v4434
        %4502 = vmatpush.bf16.msra.mxu0 %v4433
        %4503 = vmatpush.bf16.msra.mxu0 %v4432
        %4504 = vmatmul.bf16.gmra.mxu0 %v4228
        %v4505 = vpop.f32.mrf.mxu0
        %v4506 = vadd.f32 %v4302, %v4505
        %v4507 = vpop.f32.mrf.mxu0
        %v4508 = vadd.f32 %v4302, %v4507
        %4509 = vmatmul.bf16.gmra.mxu0 %v4232
        %v4510 = vpop.f32.mrf.mxu0
        %v4511 = vadd.f32 %v4302, %v4510
        %v4512 = vpop.f32.mrf.mxu0
        %v4513 = vadd.f32 %v4302, %v4512
        %4514 = vdwg.mxu0
        %4515 = vmatpush.bf16.msra.mxu0 %v4447
        %4516 = vmatpush.bf16.msra.mxu0 %v4446
        %4517 = vmatpush.bf16.msra.mxu0 %v4445
        %4518 = vmatpush.bf16.msra.mxu0 %v4444
        %4519 = vmatpush.bf16.msra.mxu0 %v4443
        %4520 = vmatpush.bf16.msra.mxu0 %v4442
        %4521 = vmatpush.bf16.msra.mxu0 %v4441
        %4522 = vmatpush.bf16.msra.mxu0 %v4440
        %4523 = vmatmul.bf16.gmra.mxu0 %v4229
        %v4524 = vpop.f32.mrf.mxu0
        %v4525 = vadd.f32 %v4506, %v4524
        %v4526 = vpop.f32.mrf.mxu0
        %v4527 = vadd.f32 %v4508, %v4526
        %4528 = vmatmul.bf16.gmra.mxu0 %v4233
        %v4529 = vpop.f32.mrf.mxu0
        %v4530 = vadd.f32 %v4511, %v4529
        %v4531 = vpop.f32.mrf.mxu0
        %v4532 = vadd.f32 %v4513, %v4531
        %4533 = vdwg.mxu0
        %4534 = vmatpush.bf16.msra.mxu0 %v4455
        %4535 = vmatpush.bf16.msra.mxu0 %v4454
        %4536 = vmatpush.bf16.msra.mxu0 %v4453
        %4537 = vmatpush.bf16.msra.mxu0 %v4452
        %4538 = vmatpush.bf16.msra.mxu0 %v4451
        %4539 = vmatpush.bf16.msra.mxu0 %v4450
        %4540 = vmatpush.bf16.msra.mxu0 %v4449
        %4541 = vmatpush.bf16.msra.mxu0 %v4448
        %4542 = vmatmul.bf16.gmra.mxu0 %v4230
        %v4543 = vpop.f32.mrf.mxu0
        %v4544 = vadd.f32 %v4525, %v4543
        %v4545 = vpop.f32.mrf.mxu0
        %v4546 = vadd.f32 %v4527, %v4545
        %4547 = vmatmul.bf16.gmra.mxu0 %v4234
        %v4548 = vpop.f32.mrf.mxu0
        %v4549 = vadd.f32 %v4530, %v4548
        %v4550 = vpop.f32.mrf.mxu0
        %v4551 = vadd.f32 %v4532, %v4550
        %4552 = vdwg.mxu0
        %4553 = vmatpush.bf16.msra.mxu0 %v4463
        %4554 = vmatpush.bf16.msra.mxu0 %v4462
        %4555 = vmatpush.bf16.msra.mxu0 %v4461
        %4556 = vmatpush.bf16.msra.mxu0 %v4460
        %4557 = vmatpush.bf16.msra.mxu0 %v4459
        %4558 = vmatpush.bf16.msra.mxu0 %v4458
        %4559 = vmatpush.bf16.msra.mxu0 %v4457
        %4560 = vmatpush.bf16.msra.mxu0 %v4456
        %4561 = vmatmul.bf16.gmra.mxu0 %v4231
        %v4562 = vpop.f32.mrf.mxu0
        %v4563 = vadd.f32 %v4544, %v4562
        %v4564 = vpop.f32.mrf.mxu0
        %v4565 = vadd.f32 %v4546, %v4564
        %4566 = vmatmul.bf16.gmra.mxu0 %v4235
        %v4567 = vpop.f32.mrf.mxu0
        %v4568 = vadd.f32 %v4549, %v4567
        %v4569 = vpop.f32.mrf.mxu0
        %v4570 = vadd.f32 %v4551, %v4569
        %4571 = vdwg.mxu0
        %v4572 = vadd.f32 %v3372, %v4563
        %v4573 = vadd.f32 %v3373, %v4565
        %v4574 = vadd.f32 %v3374, %v4568
        %v4575 = vadd.f32 %v3375, %v4570
        %4576 = vst [vmem:[#allocation2] sm:$0xff] %v4572
        %4577 = vst [vmem:[#allocation2 + $0x8] sm:$0xff] %v4573
        %4578 = vst [vmem:[#allocation2 + $0x10] sm:$0xff] %v4574
        %4579 = vst [vmem:[#allocation2 + $0x18] sm:$0xff] %v4575
        %p4580 = scmp.eq.s32.totalorder %s28, 1
        // Predicated region
        $region85: #{forward.2} parent=75 // pred_check
          %p4581 = pneg %p4580
        $region86: #{forward.2} parent=75 // pred_check_branch
          %4583 = sbr.rel (%p4581) target = $region88
        $region87: #{forward.2} parent=75 // pred_region
          %v4584 = vld [vmem:[#allocation2] sm:$0xff]
          %v4585 = vld [vmem:[#allocation2 + $0x8] sm:$0xff]
          %v4586 = vld [vmem:[#allocation2 + $0x10] sm:$0xff]
          %v4587 = vld [vmem:[#allocation2 + $0x18] sm:$0xff]
          %v4588 = vld [vmem:[%s13] sm:$0x1]
          %v4589 = vmul.f32 %v4584, %v4584
          %v4590 = vmul.f32 %v4585, %v4585
          %v4591 = vmul.f32 %v4586, %v4586
          %v4592 = vmul.f32 %v4587, %v4587
          %4593 = vadd.xlane.f32.xlu0 %v4589
          %v4594 = vpop.xlane.xlu0 %4593
          %4595 = vadd.xlane.f32.xlu0 %v4590
          %v4596 = vpop.xlane.xlu0 %4595
          %4597 = vadd.xlane.f32.xlu0 %v4591
          %v4598 = vpop.xlane.xlu0 %4597
          %4599 = vadd.xlane.f32.xlu0 %v4592
          %v4600 = vpop.xlane.xlu0 %4599
          %v4601 = vrsqrt.pop %v4594
          %v4602 = vmul.f32 %v4601, %v4594
          %v4603 = vmul.f32 %v4602, %v4601
          %v4604 = vmul.f32 0.5, %v4603
          %v4605 = vsub.f32 1.5, %v4604
          %v4606 = vmul.f32 %v4601, %v4605
          %v4607 = vmul.f32 %v4594, %v4606
          %vm4608 = vcmp.eq.f32.partialorder %v4594, inf
          %v4609 = vsel %vm4608, %v4594, %v4607
          %vm4610 = vcmp.eq.f32.partialorder %v4594, 0.0
          %v4611 = vand.u32 %v4594, 2147483648
          %v4612 = vsel %vm4610, %v4611, %v4609
          %v4613 = vrsqrt.pop %v4596
          %v4614 = vmul.f32 %v4613, %v4596
          %v4615 = vmul.f32 %v4614, %v4613
          %v4616 = vmul.f32 0.5, %v4615
          %v4617 = vsub.f32 1.5, %v4616
          %v4618 = vmul.f32 %v4613, %v4617
          %v4619 = vmul.f32 %v4596, %v4618
          %vm4620 = vcmp.eq.f32.partialorder %v4596, inf
          %v4621 = vsel %vm4620, %v4596, %v4619
          %vm4622 = vcmp.eq.f32.partialorder %v4596, 0.0
          %v4623 = vand.u32 %v4596, 2147483648
          %v4624 = vsel %vm4622, %v4623, %v4621
          %v4625 = vrsqrt.pop %v4598
          %v4626 = vmul.f32 %v4625, %v4598
          %v4627 = vmul.f32 %v4626, %v4625
          %v4628 = vmul.f32 0.5, %v4627
          %v4629 = vsub.f32 1.5, %v4628
          %v4630 = vmul.f32 %v4625, %v4629
          %v4631 = vmul.f32 %v4598, %v4630
          %vm4632 = vcmp.eq.f32.partialorder %v4598, inf
          %v4633 = vsel %vm4632, %v4598, %v4631
          %vm4634 = vcmp.eq.f32.partialorder %v4598, 0.0
          %v4635 = vand.u32 %v4598, 2147483648
          %v4636 = vsel %vm4634, %v4635, %v4633
          %v4637 = vrsqrt.pop %v4600
          %v4638 = vmul.f32 %v4637, %v4600
          %v4639 = vmul.f32 %v4638, %v4637
          %v4640 = vmul.f32 0.5, %v4639
          %v4641 = vsub.f32 1.5, %v4640
          %v4642 = vmul.f32 %v4637, %v4641
          %v4643 = vmul.f32 %v4600, %v4642
          %vm4644 = vcmp.eq.f32.partialorder %v4600, inf
          %v4645 = vsel %vm4644, %v4600, %v4643
          %vm4646 = vcmp.eq.f32.partialorder %v4600, 0.0
          %v4647 = vand.u32 %v4600, 2147483648
          %v4648 = vsel %vm4646, %v4647, %v4645
          %v4649 = vmax.f32 %v4612, 1e-12
          %v4650 = vmax.f32 %v4624, 1e-12
          %v4651 = vmax.f32 %v4636, 1e-12
          %v4652 = vmax.f32 %v4648, 1e-12
          %v4653 = vrcp.pop %v4649
          %v4654 = vmul.f32 %v4649, %v4653
          %v4655 = vsub.f32 1.0, %v4654
          %v4656 = vmul.f32 %v4653, %v4655
          %v4657 = vadd.f32 %v4653, %v4656
          %vm4658 = vweird.f32 %v4649
          %vm4659 = vweird.f32 %v4653
          %vm4660 = vmor %vm4658, %vm4659
          %v4661 = vsel %vm4660, %v4653, %v4657
          %v4662 = vand.u32 2147483647, %v4649
          %vm4663 = vcmp.eq.f32.partialorder %v4662, 8.507059e+37
          %v4664 = vand.u32 %v4649, 2147483648
          %v4665 = vor.u32 1.1754944e-38, %v4664
          %v4666 = vsel %vm4663, %v4665, %v4661
          %v4667 = vmul.f32 %v4584, %v4666
          %v4668 = vrcp.pop %v4650
          %v4669 = vmul.f32 %v4650, %v4668
          %v4670 = vsub.f32 1.0, %v4669
          %v4671 = vmul.f32 %v4668, %v4670
          %v4672 = vadd.f32 %v4668, %v4671
          %vm4673 = vweird.f32 %v4650
          %vm4674 = vweird.f32 %v4668
          %vm4675 = vmor %vm4673, %vm4674
          %v4676 = vsel %vm4675, %v4668, %v4672
          %v4677 = vand.u32 2147483647, %v4650
          %vm4678 = vcmp.eq.f32.partialorder %v4677, 8.507059e+37
          %v4679 = vand.u32 %v4650, 2147483648
          %v4680 = vor.u32 1.1754944e-38, %v4679
          %v4681 = vsel %vm4678, %v4680, %v4676
          %v4682 = vmul.f32 %v4585, %v4681
          %v4683 = vrcp.pop %v4651
          %v4684 = vmul.f32 %v4651, %v4683
          %v4685 = vsub.f32 1.0, %v4684
          %v4686 = vmul.f32 %v4683, %v4685
          %v4687 = vadd.f32 %v4683, %v4686
          %vm4688 = vweird.f32 %v4651
          %vm4689 = vweird.f32 %v4683
          %vm4690 = vmor %vm4688, %vm4689
          %v4691 = vsel %vm4690, %v4683, %v4687
          %v4692 = vand.u32 2147483647, %v4651
          %vm4693 = vcmp.eq.f32.partialorder %v4692, 8.507059e+37
          %v4694 = vand.u32 %v4651, 2147483648
          %v4695 = vor.u32 1.1754944e-38, %v4694
          %v4696 = vsel %vm4693, %v4695, %v4691
          %v4697 = vmul.f32 %v4586, %v4696
          %v4698 = vrcp.pop %v4652
          %v4699 = vmul.f32 %v4652, %v4698
          %v4700 = vsub.f32 1.0, %v4699
          %v4701 = vmul.f32 %v4698, %v4700
          %v4702 = vadd.f32 %v4698, %v4701
          %vm4703 = vweird.f32 %v4652
          %vm4704 = vweird.f32 %v4698
          %vm4705 = vmor %vm4703, %vm4704
          %v4706 = vsel %vm4705, %v4698, %v4702
          %v4707 = vand.u32 2147483647, %v4652
          %vm4708 = vcmp.eq.f32.partialorder %v4707, 8.507059e+37
          %v4709 = vand.u32 %v4652, 2147483648
          %v4710 = vor.u32 1.1754944e-38, %v4709
          %v4711 = vsel %vm4708, %v4710, %v4706
          %v4712 = vmul.f32 %v4587, %v4711
          %v4713 = vmul.f32 %v4667, 11.313708
          %v4714 = vmul.f32 %v4682, 11.313708
          %v4715 = vmul.f32 %v4697, 11.313708
          %v4716 = vmul.f32 %v4712, 11.313708
          %v4718 = vperm.slane %v4588, 0
          %v4720 = vmul.f32 %v4713, %v4718
          %v4721 = vmul.f32 %v4714, %v4718
          %v4722 = vmul.f32 %v4715, %v4718
          %v4723 = vmul.f32 %v4716, %v4718
          %4724 = vst [vmem:[%s14] sm:$0xff] %v4720
          %4725 = vst [vmem:[%s14 + $0x8] sm:$0xff] %v4721
          %4726 = vst [vmem:[%s14 + $0x10] sm:$0xff] %v4722
          %4727 = vst [vmem:[%s14 + $0x18] sm:$0xff] %v4723
        $region88: #{forward.2} parent=75 // pred_fallthru
          _
        // Predicated region
        $region89: #{forward.2} parent=75 // pred_check
          %p4728 = pneg %p375
        $region90: #{forward.2} parent=75 // pred_check_branch
          %4730 = sbr.rel (%p4728) target = $region92
        $region91: #{forward.2} parent=75 // pred_region
          _
        $region92: #{forward.2} parent=75 // pred_fallthru
          _
        // Predicated region
        $region93: #{forward.2} parent=75 // pred_check
          %p4731 = pneg %p375
        $region94: #{forward.2} parent=75 // pred_check_branch
          %4733 = sbr.rel (%p4731) target = $region96
        $region95: #{forward.2} parent=75 // pred_region
          _
        $region96: #{forward.2} parent=75 // pred_fallthru
          _
      $region76: #{forward.2} parent=5 // pred_fallthru
        _
      %p4734 = scmp.le.s32.totalorder 2, %s23
      // Predicated region
      $region97: #{forward.2} parent=5 // pred_check
        %p4735 = pneg %p4734
      $region98: #{forward.2} parent=5 // pred_check_branch
        %4737 = sbr.rel (%p4735) target = $region100
      $region99: #{forward.2} parent=5 // pred_region
        %s4738 = ssub.s32 %s23, 2
      $region100: #{forward.2} parent=5 // pred_fallthru
        _
    $region6: #{forward.2} parent=1 // loop_footer
      %s27 = sadd.s32 1, %s23
    $region7: #{forward.2} parent=1 // loop_footer_branch
      %22 = sbr.rel target = $region3
    $region8: #{forward.2} parent=1 // loop_exit
      _
    %4739 = vsyncpa [#allocation4], 1
    %s4740 = scalar_lea.sflag [#allocation4], 1
    %4741 = vsyncpa %s4740, 1

</llo_original>
